<compile_context>
chip_gen: v7x
topology: tpu7x:2x2x1
jax: 0.10.0
libtpu: 0.0.40
codegen_flags: <defaults>
</compile_context>

<pallas_src>
import functools

import jax
import jax.numpy as jnp
from jax.experimental import pallas as pl
from jax.experimental.pallas import tpu as pltpu


_VMEM_LIMIT = 32 * 1024 * 1024   # worst-case kernel uses ~5 MiB; fits all gens
_TM_DEFAULT = 512                # row tile; good on v5e/v6e/v7x (tiny weights)


# ----------------------------------------------------------------------------
# Kernel 1: fused chain of (rows x Ci) @ (Ci x Ci+1) + bias (+ optional ReLU)
# ----------------------------------------------------------------------------
def _chain_kernel(*refs, relus):
    n = len(relus)
    x_ref, o_ref = refs[0], refs[-1]
    h = x_ref[...]
    for i in range(n):
        w_ref = refs[1 + 2 * i]
        b_ref = refs[2 + 2 * i]
        acc = jnp.dot(h, w_ref[...], preferred_element_type=jnp.float32)
        acc = acc + b_ref[...].astype(jnp.float32)
        if relus[i]:
            acc = jnp.maximum(acc, 0.0)
        # keep intermediates in bf16 so the next MXU op runs at bf16 rate;
        # they live in vregs/VMEM only (never written back to HBM).
        h = acc if i == n - 1 else acc.astype(jnp.bfloat16)
    o_ref[...] = h.astype(o_ref.dtype)


def chain_matmul(x2d, layers, *, out_dtype=jnp.bfloat16, tm=_TM_DEFAULT):
    """y = L_n(...L_1(x2d)...) with L_i = matmul + bias [+ ReLU], one kernel.

    x2d: (P, Cin); layers: list of (w (Ci, Ci+1) bf16, b (1, Ci+1) bf16, relu).
    """
    x2d = x2d.astype(jnp.bfloat16)
    P, Cin = x2d.shape
    Cout = layers[-1][0].shape[1]
    tm_eff = min(tm, P)                    # == P (full dim) or a multiple of 8
    grid = (pl.cdiv(P, tm_eff),)           # partial last block handled by Pallas

    in_specs = [pl.BlockSpec((tm_eff, Cin), lambda i: (i, 0))]
    args = [x2d]
    flops = 0
    bytes_accessed = x2d.size * 2 + P * Cout * jnp.dtype(out_dtype).itemsize
    for (w, b, _) in layers:
        ci, co = w.shape
        in_specs.append(pl.BlockSpec((ci, co), lambda i: (0, 0)))  # resident weight
        in_specs.append(pl.BlockSpec((1, co), lambda i: (0, 0)))   # resident bias
        args += [w, b]
        flops += 2 * P * ci * co
        bytes_accessed += (w.size + b.size) * 2

    relus = tuple(bool(r) for (_, _, r) in layers)
    return pl.pallas_call(
        functools.partial(_chain_kernel, relus=relus),
        out_shape=jax.ShapeDtypeStruct((P, Cout), out_dtype),
        grid_spec=pltpu.PrefetchScalarGridSpec(
            num_scalar_prefetch=0,
            grid=grid,
            in_specs=in_specs,
            out_specs=pl.BlockSpec((tm_eff, Cout), lambda i: (i, 0)),
        ),
        compiler_params=pltpu.CompilerParams(
            dimension_semantics=("parallel",),
            vmem_limit_bytes=_VMEM_LIMIT),
        cost_estimate=pl.CostEstimate(
            flops=flops, transcendentals=0, bytes_accessed=bytes_accessed),
    )(*args)


# ----------------------------------------------------------------------------
# Kernel 2: split-K matmul  ==  concat(x1, x2, -1) @ concat(w1, w2, 0) + bias
# (channel concat never materialized in HBM)
# ----------------------------------------------------------------------------
def _splitk_kernel(x1_ref, x2_ref, w1_ref, w2_ref, b_ref, o_ref):
    acc = jnp.dot(x1_ref[...], w1_ref[...], preferred_element_type=jnp.float32)
    acc = acc + jnp.dot(x2_ref[...], w2_ref[...],
                        preferred_element_type=jnp.float32)
    acc = acc + b_ref[...].astype(jnp.float32)
    o_ref[...] = acc.astype(o_ref.dtype)


def splitk_matmul(x1, x2, w1, w2, b, *, out_dtype=jnp.bfloat16, tm=_TM_DEFAULT):
    x1 = x1.astype(jnp.bfloat16)
    x2 = x2.astype(jnp.bfloat16)
    P, C1 = x1.shape
    _, C2 = x2.shape
    Cout = w1.shape[1]
    tm_eff = min(tm, P)
    grid = (pl.cdiv(P, tm_eff),)
    flops = 2 * P * (C1 + C2) * Cout
    bytes_accessed = (2 * (x1.size + x2.size + w1.size + w2.size + b.size)
                      + P * Cout * jnp.dtype(out_dtype).itemsize)
    return pl.pallas_call(
        _splitk_kernel,
        out_shape=jax.ShapeDtypeStruct((P, Cout), out_dtype),
        grid_spec=pltpu.PrefetchScalarGridSpec(
            num_scalar_prefetch=0,
            grid=grid,
            in_specs=[
                pl.BlockSpec((tm_eff, C1), lambda i: (i, 0)),
                pl.BlockSpec((tm_eff, C2), lambda i: (i, 0)),
                pl.BlockSpec((C1, Cout), lambda i: (0, 0)),
                pl.BlockSpec((C2, Cout), lambda i: (0, 0)),
                pl.BlockSpec((1, Cout), lambda i: (0, 0)),
            ],
            out_specs=pl.BlockSpec((tm_eff, Cout), lambda i: (i, 0)),
        ),
        compiler_params=pltpu.CompilerParams(
            dimension_semantics=("parallel",),
            vmem_limit_bytes=_VMEM_LIMIT),
        cost_estimate=pl.CostEstimate(
            flops=flops, transcendentals=0, bytes_accessed=bytes_accessed),
    )(x1, x2, w1, w2, b)


# ----------------------------------------------------------------------------
# Glue helpers (NHWC)
# ----------------------------------------------------------------------------
def conv1x1(x_nhwc, w, b, *, relu=False, out_dtype=jnp.bfloat16):
    N, H, W, Cin = x_nhwc.shape
    y = chain_matmul(x_nhwc.reshape(N * H * W, Cin), [(w, b, relu)],
                     out_dtype=out_dtype)
    return y.reshape(N, H, W, w.shape[1])


def depth_to_space(y2d, N, H, W, Cout, k):
    """(P, Cout*k*k) result of a ConvTranspose(k==stride) -> (N, H*k, W*k, Cout)."""
    # TODO(synk): fold this shuffle into the producing kernel's output index_map
    # to save one HBM pass per upsample at real TableNet resolutions.
    y = y2d.reshape(N, H, W, Cout, k, k)
    y = jnp.transpose(y, (0, 1, 4, 2, 5, 3))          # N, H, k, W, k, Cout
    return y.reshape(N, H * k, W * k, Cout)


def avg_pool(x_nhwc, s):
    N, H, W, C = x_nhwc.shape
    return x_nhwc.reshape(N, H // s, s, W // s, s, C).mean(axis=(2, 4))


# ----------------------------------------------------------------------------
# Parameters: PyTorch-layout init (deterministic, synthetic) + kernel-ready prep
# ----------------------------------------------------------------------------
def _init(key, shape, scale=0.05):
    return scale * jax.random.normal(key, shape, dtype=jnp.float32)


def init_raw_params(key):
    ks = iter(jax.random.split(key, 64))
    p = {}
    # encoder stub projections (3 -> pool channels)
    p["enc3_w"] = _init(next(ks), (3, 256)); p["enc3_b"] = _init(next(ks), (256,))
    p["enc4_w"] = _init(next(ks), (3, 512)); p["enc4_b"] = _init(next(ks), (512,))
    p["enc5_w"] = _init(next(ks), (3, 512)); p["enc5_b"] = _init(next(ks), (512,))
    # conv6: 1x1 (512->256) ReLU Dropout, 1x1 (256->256) ReLU Dropout
    p["c6_1_w"] = _init(next(ks), (512, 256)); p["c6_1_b"] = _init(next(ks), (256,))
    p["c6_2_w"] = _init(next(ks), (256, 256)); p["c6_2_b"] = _init(next(ks), (256,))
    # table decoder
    p["t_c7_w"] = _init(next(ks), (256, 256)); p["t_c7_b"] = _init(next(ks), (256,))
    p["t_u1_w"] = _init(next(ks), (256, 128, 2, 2)); p["t_u1_b"] = _init(next(ks), (128,))
    p["t_u2_w"] = _init(next(ks), (640, 256, 2, 2)); p["t_u2_b"] = _init(next(ks), (256,))
    p["t_u3_w"] = _init(next(ks), (512, 1, 8, 8));   p["t_u3_b"] = _init(next(ks), (1,))
    # column decoder
    p["c_c8a_w"] = _init(next(ks), (256, 256)); p["c_c8a_b"] = _init(next(ks), (256,))
    p["c_c8b_w"] = _init(next(ks), (256, 256)); p["c_c8b_b"] = _init(next(ks), (256,))
    p["c_u1_w"] = _init(next(ks), (256, 128, 2, 2)); p["c_u1_b"] = _init(next(ks), (128,))
    p["c_u2_w"] = _init(next(ks), (640, 256, 2, 2)); p["c_u2_b"] = _init(next(ks), (256,))
    p["c_u3_w"] = _init(next(ks), (512, 1, 8, 8));   p["c_u3_b"] = _init(next(ks), (1,))
    return p


def _prep_1x1(w, b):
    return w.astype(jnp.bfloat16), b.reshape(1, -1).astype(jnp.bfloat16)


def _prep_deconv(w, b, *, split=None, pad_to=None):
    """PyTorch ConvTranspose2d (Cin, Cout, k, k) with kernel==stride -> matmul
    weight (Cin, Cout*k*k) + broadcast bias (1, Cout*k*k), bf16.  Optionally
    split the K (Cin) dim at `split` (fused channel concat) and zero-pad the
    output dim to `pad_to` lanes (lane-dense stores)."""
    Cin, Cout, k, _ = w.shape
    w2 = w.reshape(Cin, Cout * k * k)
    b2 = jnp.broadcast_to(b[:, None, None], (Cout, k, k)).reshape(1, Cout * k * k)
    if pad_to is not None and pad_to > w2.shape[1]:
        pad = pad_to - w2.shape[1]
        w2 = jnp.pad(w2, ((0, 0), (0, pad)))
        b2 = jnp.pad(b2, ((0, 0), (0, pad)))
    w2 = w2.astype(jnp.bfloat16)
    b2 = b2.astype(jnp.bfloat16)
    if split is None:
        return w2, b2
    return w2[:split], w2[split:], b2


def prepare_params(raw):
    p = {}
    for name in ("enc3", "enc4", "enc5", "c6_1", "c6_2", "t_c7", "c_c8a", "c_c8b"):
        p[name + "_w"], p[name + "_b"] = _prep_1x1(raw[name + "_w"], raw[name + "_b"])
    for name, split, pad in (("t_u1", None, None), ("c_u1", None, None),
                             ("t_u2", 128, None),  ("c_u2", 128, None),
                             ("t_u3", 256, 128),   ("c_u3", 256, 128)):
        w, b = raw[name + "_w"], raw[name + "_b"]
        if split is None:
            p[name + "_w"], p[name + "_b"] = _prep_deconv(w, b, pad_to=pad)
        else:
            wa, wb, b2 = _prep_deconv(w, b, split=split, pad_to=pad)
            p[name + "_wa"], p[name + "_wb"], p[name + "_b"] = wa, wb, b2
    return p


# ----------------------------------------------------------------------------
# TableNet forward (vgg configuration)
# ----------------------------------------------------------------------------
def encoder_stub(p, x_nhwc):
    # TODO(synk): the VGG19 backbone is not part of the provided module; replaced
    # by a deterministic strided avg-pool + Pallas 1x1 projection stub producing
    # features with VGG19 pool3/pool4/pool5 channel counts and spatial sizes.
    pool3 = conv1x1(avg_pool(x_nhwc, 8),  p["enc3_w"], p["enc3_b"], relu=True)   # (N, H/8,  W/8,  256)
    pool4 = conv1x1(avg_pool(x_nhwc, 16), p["enc4_w"], p["enc4_b"], relu=True)   # (N, H/16, W/16, 512)
    pool5 = conv1x1(avg_pool(x_nhwc, 32), p["enc5_w"], p["enc5_b"], relu=True)   # (N, H/32, W/32, 512)
    return pool3, pool4, pool5


def decoder(p, conv_out, pool3, pool4, prefix, head_layers):
    """Shared table/column decoder body (they differ only in the fused head)."""
    N, H32, W32, _ = conv_out.shape
    # head (1x1 chain) fused with upsample_1 (ConvTranspose k=s=2) in one kernel
    y = chain_matmul(conv_out.reshape(N * H32 * W32, 256), head_layers)
    up1 = depth_to_space(y, N, H32, W32, 128, 2)                  # (N, H/16, W/16, 128)
    # upsample_2 on concat(up1, pool4): split-K kernel, concat never materialized
    _, H16, W16, _ = up1.shape
    y = splitk_matmul(up1.reshape(N * H16 * W16, 128),
                      pool4.reshape(N * H16 * W16, 512),
                      p[prefix + "_u2_wa"], p[prefix + "_u2_wb"], p[prefix + "_u2_b"])
    up2 = depth_to_space(y, N, H16, W16, 256, 2)                  # (N, H/8, W/8, 256)
    # upsample_3 on concat(up2, pool3): split-K, output lanes padded 64 -> 128
    _, H8, W8, _ = up2.shape
    y = splitk_matmul(up2.reshape(N * H8 * W8, 256),
                      pool3.reshape(N * H8 * W8, 256),
                      p[prefix + "_u3_wa"], p[prefix + "_u3_wb"], p[prefix + "_u3_b"],
                      out_dtype=jnp.float32)
    y = y[:, :64]                                                 # drop lane padding
    return depth_to_space(y, N, H8, W8, 1, 8)                     # (N, H, W, 1)


def tablenet_forward(p, x_nchw):
    x = jnp.transpose(x_nchw, (0, 2, 3, 1)).astype(jnp.bfloat16)  # NCHW -> NHWC
    pool3, pool4, pool5 = encoder_stub(p, x)
    # conv6: 1x1 -> ReLU -> (Dropout=id) -> 1x1 -> ReLU -> (Dropout=id), fused
    N, H32, W32, C = pool5.shape
    conv_out = chain_matmul(
        pool5.reshape(N * H32 * W32, C),
        [(p["c6_1_w"], p["c6_1_b"], True), (p["c6_2_w"], p["c6_2_b"], True)],
    ).reshape(N, H32, W32, 256)
    table_out = decoder(
        p, conv_out, pool3, pool4, "t",
        [(p["t_c7_w"], p["t_c7_b"], False),            # conv_7_table (no ReLU)
         (p["t_u1_w"], p["t_u1_b"], False)])           # upsample_1_table
    column_out = decoder(
        p, conv_out, pool3, pool4, "c",
        [(p["c_c8a_w"], p["c_c8a_b"], True),           # conv + ReLU (+Dropout=id)
         (p["c_c8b_w"], p["c_c8b_b"], False),          # second conv, no ReLU
         (p["c_u1_w"], p["c_u1_b"], False)])           # upsample_1_column
    # back to PyTorch NCHW: (N, 1, H, W)
    return (jnp.transpose(table_out, (0, 3, 1, 2)).astype(jnp.float32),
            jnp.transpose(column_out, (0, 3, 1, 2)).astype(jnp.float32))


if __name__ == "__main__":
    key = jax.random.PRNGKey(0)
    pkey, xkey = jax.random.split(key)
    params = prepare_params(init_raw_params(pkey))
    # Small input consistent with TableNet's 1/32 downsampling + 32x upsampling.
    x = jax.random.normal(xkey, (2, 3, 32, 32), dtype=jnp.float32)

    table_out, column_out = jax.jit(tablenet_forward)(params, x)
    jax.block_until_ready((table_out, column_out))

    assert table_out.shape == (2, 1, 32, 32), table_out.shape
    assert column_out.shape == (2, 1, 32, 32), column_out.shape
    assert jnp.all(jnp.isfinite(table_out)) and jnp.all(jnp.isfinite(column_out))
    print("KERNEL_OK")
</pallas_src>

<mosaic_0001>
module attributes {stable_mosaic.version = 11 : i64} {
  func.func @_chain_kernel(%arg0: i32, %arg1: memref<2x512xbf16, #tpu.memory_space<vmem>>, %arg2: memref<512x256xbf16, #tpu.memory_space<vmem>>, %arg3: memref<1x256xbf16, #tpu.memory_space<vmem>>, %arg4: memref<256x256xbf16, #tpu.memory_space<vmem>>, %arg5: memref<1x256xbf16, #tpu.memory_space<vmem>>, %arg6: memref<2x256xbf16, #tpu.memory_space<vmem>>) attributes {dimension_semantics = [#tpu.dimension_semantics<parallel>], iteration_bounds = array<i64: 1>, scalar_prefetch = 0 : i64, scratch_operands = 0 : i64, tpu.core_type = #tpu.core_type<tc>, window_params = [{transform_indices = @transform_0, window_bounds = array<i64: 2, 512>}, {pipeline_mode = #tpu.pipeline_mode<synchronous>, transform_indices = @transform_1, window_bounds = array<i64: 512, 256>}, {pipeline_mode = #tpu.pipeline_mode<synchronous>, transform_indices = @transform_2, window_bounds = array<i64: 1, 256>}, {pipeline_mode = #tpu.pipeline_mode<synchronous>, transform_indices = @transform_3, window_bounds = array<i64: 256, 256>}, {pipeline_mode = #tpu.pipeline_mode<synchronous>, transform_indices = @transform_4, window_bounds = array<i64: 1, 256>}, {transform_indices = @transform_5, window_bounds = array<i64: 2, 256>}]} {
    %c0 = arith.constant 0 : index
    %c0_0 = arith.constant 0 : index
    %0 = vector.load %arg1[%c0, %c0_0] : memref<2x512xbf16, #tpu.memory_space<vmem>>, vector<2x512xbf16>
    %c0_1 = arith.constant 0 : index
    %c0_2 = arith.constant 0 : index
    %1 = vector.load %arg2[%c0_1, %c0_2] : memref<512x256xbf16, #tpu.memory_space<vmem>>, vector<512x256xbf16>
    %cst = arith.constant dense<0.000000e+00> : vector<2x256xf32>
    %2 = tpu.matmul %0, %1, %cst {dimension_numbers = #tpu.dot_dimension_numbers<[1], [0], [0], [1], [0, 0, 1, 1], [], []>} : vector<2x512xbf16>, vector<512x256xbf16>, vector<2x256xf32> -> vector<2x256xf32>
    %c0_3 = arith.constant 0 : index
    %c0_4 = arith.constant 0 : index
    %3 = vector.load %arg3[%c0_3, %c0_4] : memref<1x256xbf16, #tpu.memory_space<vmem>>, vector<1x256xbf16>
    %4 = arith.extf %3 : vector<1x256xbf16> to vector<1x256xf32>
    %5 = vector.broadcast %4 : vector<1x256xf32> to vector<2x256xf32>
    %6 = arith.addf %2, %5 : vector<2x256xf32>
    %cst_5 = arith.constant 0.000000e+00 : f32
    %7 = vector.broadcast %cst_5 : f32 to vector<2x256xf32>
    %8 = arith.maximumf %6, %7 : vector<2x256xf32>
    %9 = arith.truncf %8 : vector<2x256xf32> to vector<2x256xbf16>
    %c0_6 = arith.constant 0 : index
    %c0_7 = arith.constant 0 : index
    %10 = vector.load %arg4[%c0_6, %c0_7] : memref<256x256xbf16, #tpu.memory_space<vmem>>, vector<256x256xbf16>
    %cst_8 = arith.constant dense<0.000000e+00> : vector<2x256xf32>
    %11 = tpu.matmul %9, %10, %cst_8 {dimension_numbers = #tpu.dot_dimension_numbers<[1], [0], [0], [1], [0, 0, 1, 1], [], []>} : vector<2x256xbf16>, vector<256x256xbf16>, vector<2x256xf32> -> vector<2x256xf32>
    %c0_9 = arith.constant 0 : index
    %c0_10 = arith.constant 0 : index
    %12 = vector.load %arg5[%c0_9, %c0_10] : memref<1x256xbf16, #tpu.memory_space<vmem>>, vector<1x256xbf16>
    %13 = arith.extf %12 : vector<1x256xbf16> to vector<1x256xf32>
    %14 = vector.broadcast %13 : vector<1x256xf32> to vector<2x256xf32>
    %15 = arith.addf %11, %14 : vector<2x256xf32>
    %cst_11 = arith.constant 0.000000e+00 : f32
    %16 = vector.broadcast %cst_11 : f32 to vector<2x256xf32>
    %17 = arith.maximumf %15, %16 : vector<2x256xf32>
    %18 = arith.truncf %17 : vector<2x256xf32> to vector<2x256xbf16>
    %c0_12 = arith.constant 0 : index
    %c0_13 = arith.constant 0 : index
    %19 = vector.load %arg6[%c0_12, %c0_13] : memref<2x256xbf16, #tpu.memory_space<vmem>>, vector<2x256xbf16>
    tpu.vector_store %arg6[%c0_12, %c0_13], %18 {strides = array<i32>} : memref<2x256xbf16, #tpu.memory_space<vmem>>, vector<2x256xbf16>,
    return
  }
  func.func @transform_0(%arg0: i32) -> (i32, i32) {
    %c0_i32 = arith.constant 0 : i32
    %c0_i32_0 = arith.constant 0 : i32
    return %arg0, %c0_i32 : i32, i32
  }
  func.func @transform_1(%arg0: i32) -> (i32, i32) {
    %c0_i32 = arith.constant 0 : i32
    %c0_i32_0 = arith.constant 0 : i32
    %c0_i32_1 = arith.constant 0 : i32
    return %c0_i32, %c0_i32_0 : i32, i32
  }
  func.func @transform_2(%arg0: i32) -> (i32, i32) {
    %c0_i32 = arith.constant 0 : i32
    %c0_i32_0 = arith.constant 0 : i32
    %c0_i32_1 = arith.constant 0 : i32
    return %c0_i32, %c0_i32_0 : i32, i32
  }
  func.func @transform_3(%arg0: i32) -> (i32, i32) {
    %c0_i32 = arith.constant 0 : i32
    %c0_i32_0 = arith.constant 0 : i32
    %c0_i32_1 = arith.constant 0 : i32
    return %c0_i32, %c0_i32_0 : i32, i32
  }
  func.func @transform_4(%arg0: i32) -> (i32, i32) {
    %c0_i32 = arith.constant 0 : i32
    %c0_i32_0 = arith.constant 0 : i32
    %c0_i32_1 = arith.constant 0 : i32
    return %c0_i32, %c0_i32_0 : i32, i32
  }
  func.func @transform_5(%arg0: i32) -> (i32, i32) {
    %c0_i32 = arith.constant 0 : i32
    %c0_i32_0 = arith.constant 0 : i32
    return %arg0, %c0_i32 : i32, i32
  }
}

module attributes {stable_mosaic.version = 11 : i64} {
  func.func @_chain_kernel(%arg0: i32, %arg1: memref<2x3xbf16, #tpu.memory_space<vmem>>, %arg2: memref<3x512xbf16, #tpu.memory_space<vmem>>, %arg3: memref<1x512xbf16, #tpu.memory_space<vmem>>, %arg4: memref<2x512xbf16, #tpu.memory_space<vmem>>) attributes {dimension_semantics = [#tpu.dimension_semantics<parallel>], iteration_bounds = array<i64: 1>, scalar_prefetch = 0 : i64, scratch_operands = 0 : i64, tpu.core_type = #tpu.core_type<tc>, window_params = [{transform_indices = @transform_0, window_bounds = array<i64: 2, 3>}, {pipeline_mode = #tpu.pipeline_mode<synchronous>, transform_indices = @transform_1, window_bounds = array<i64: 3, 512>}, {pipeline_mode = #tpu.pipeline_mode<synchronous>, transform_indices = @transform_2, window_bounds = array<i64: 1, 512>}, {transform_indices = @transform_3, window_bounds = array<i64: 2, 512>}]} {
    %c0 = arith.constant 0 : index
    %c0_0 = arith.constant 0 : index
    %0 = vector.load %arg1[%c0, %c0_0] : memref<2x3xbf16, #tpu.memory_space<vmem>>, vector<2x3xbf16>
    %c0_1 = arith.constant 0 : index
    %c0_2 = arith.constant 0 : index
    %1 = vector.load %arg2[%c0_1, %c0_2] : memref<3x512xbf16, #tpu.memory_space<vmem>>, vector<3x512xbf16>
    %cst = arith.constant dense<0.000000e+00> : vector<2x512xf32>
    %2 = tpu.matmul %0, %1, %cst {dimension_numbers = #tpu.dot_dimension_numbers<[1], [0], [0], [1], [0, 0, 1, 1], [], []>} : vector<2x3xbf16>, vector<3x512xbf16>, vector<2x512xf32> -> vector<2x512xf32>
    %c0_3 = arith.constant 0 : index
    %c0_4 = arith.constant 0 : index
    %3 = vector.load %arg3[%c0_3, %c0_4] : memref<1x512xbf16, #tpu.memory_space<vmem>>, vector<1x512xbf16>
    %4 = arith.extf %3 : vector<1x512xbf16> to vector<1x512xf32>
    %5 = vector.broadcast %4 : vector<1x512xf32> to vector<2x512xf32>
    %6 = arith.addf %2, %5 : vector<2x512xf32>
    %cst_5 = arith.constant 0.000000e+00 : f32
    %7 = vector.broadcast %cst_5 : f32 to vector<2x512xf32>
    %8 = arith.maximumf %6, %7 : vector<2x512xf32>
    %9 = arith.truncf %8 : vector<2x512xf32> to vector<2x512xbf16>
    %c0_6 = arith.constant 0 : index
    %c0_7 = arith.constant 0 : index
    %10 = vector.load %arg4[%c0_6, %c0_7] : memref<2x512xbf16, #tpu.memory_space<vmem>>, vector<2x512xbf16>
    tpu.vector_store %arg4[%c0_6, %c0_7], %9 {strides = array<i32>} : memref<2x512xbf16, #tpu.memory_space<vmem>>, vector<2x512xbf16>,
    return
  }
  func.func @transform_0(%arg0: i32) -> (i32, i32) {
    %c0_i32 = arith.constant 0 : i32
    %c0_i32_0 = arith.constant 0 : i32
    return %arg0, %c0_i32 : i32, i32
  }
  func.func @transform_1(%arg0: i32) -> (i32, i32) {
    %c0_i32 = arith.constant 0 : i32
    %c0_i32_0 = arith.constant 0 : i32
    %c0_i32_1 = arith.constant 0 : i32
    return %c0_i32, %c0_i32_0 : i32, i32
  }
  func.func @transform_2(%arg0: i32) -> (i32, i32) {
    %c0_i32 = arith.constant 0 : i32
    %c0_i32_0 = arith.constant 0 : i32
    %c0_i32_1 = arith.constant 0 : i32
    return %c0_i32, %c0_i32_0 : i32, i32
  }
  func.func @transform_3(%arg0: i32) -> (i32, i32) {
    %c0_i32 = arith.constant 0 : i32
    %c0_i32_0 = arith.constant 0 : i32
    return %arg0, %c0_i32 : i32, i32
  }
}

module attributes {stable_mosaic.version = 11 : i64} {
  func.func @_chain_kernel(%arg0: i32, %arg1: memref<2x256xbf16, #tpu.memory_space<vmem>>, %arg2: memref<256x256xbf16, #tpu.memory_space<vmem>>, %arg3: memref<1x256xbf16, #tpu.memory_space<vmem>>, %arg4: memref<256x512xbf16, #tpu.memory_space<vmem>>, %arg5: memref<1x512xbf16, #tpu.memory_space<vmem>>, %arg6: memref<2x512xbf16, #tpu.memory_space<vmem>>) attributes {dimension_semantics = [#tpu.dimension_semantics<parallel>], iteration_bounds = array<i64: 1>, scalar_prefetch = 0 : i64, scratch_operands = 0 : i64, tpu.core_type = #tpu.core_type<tc>, window_params = [{transform_indices = @transform_0, window_bounds = array<i64: 2, 256>}, {pipeline_mode = #tpu.pipeline_mode<synchronous>, transform_indices = @transform_1, window_bounds = array<i64: 256, 256>}, {pipeline_mode = #tpu.pipeline_mode<synchronous>, transform_indices = @transform_2, window_bounds = array<i64: 1, 256>}, {pipeline_mode = #tpu.pipeline_mode<synchronous>, transform_indices = @transform_3, window_bounds = array<i64: 256, 512>}, {pipeline_mode = #tpu.pipeline_mode<synchronous>, transform_indices = @transform_4, window_bounds = array<i64: 1, 512>}, {transform_indices = @transform_5, window_bounds = array<i64: 2, 512>}]} {
    %c0 = arith.constant 0 : index
    %c0_0 = arith.constant 0 : index
    %0 = vector.load %arg1[%c0, %c0_0] : memref<2x256xbf16, #tpu.memory_space<vmem>>, vector<2x256xbf16>
    %c0_1 = arith.constant 0 : index
    %c0_2 = arith.constant 0 : index
    %1 = vector.load %arg2[%c0_1, %c0_2] : memref<256x256xbf16, #tpu.memory_space<vmem>>, vector<256x256xbf16>
    %cst = arith.constant dense<0.000000e+00> : vector<2x256xf32>
    %2 = tpu.matmul %0, %1, %cst {dimension_numbers = #tpu.dot_dimension_numbers<[1], [0], [0], [1], [0, 0, 1, 1], [], []>} : vector<2x256xbf16>, vector<256x256xbf16>, vector<2x256xf32> -> vector<2x256xf32>
    %c0_3 = arith.constant 0 : index
    %c0_4 = arith.constant 0 : index
    %3 = vector.load %arg3[%c0_3, %c0_4] : memref<1x256xbf16, #tpu.memory_space<vmem>>, vector<1x256xbf16>
    %4 = arith.extf %3 : vector<1x256xbf16> to vector<1x256xf32>
    %5 = vector.broadcast %4 : vector<1x256xf32> to vector<2x256xf32>
    %6 = arith.addf %2, %5 : vector<2x256xf32>
    %7 = arith.truncf %6 : vector<2x256xf32> to vector<2x256xbf16>
    %c0_5 = arith.constant 0 : index
    %c0_6 = arith.constant 0 : index
    %8 = vector.load %arg4[%c0_5, %c0_6] : memref<256x512xbf16, #tpu.memory_space<vmem>>, vector<256x512xbf16>
    %cst_7 = arith.constant dense<0.000000e+00> : vector<2x512xf32>
    %9 = tpu.matmul %7, %8, %cst_7 {dimension_numbers = #tpu.dot_dimension_numbers<[1], [0], [0], [1], [0, 0, 1, 1], [], []>} : vector<2x256xbf16>, vector<256x512xbf16>, vector<2x512xf32> -> vector<2x512xf32>
    %c0_8 = arith.constant 0 : index
    %c0_9 = arith.constant 0 : index
    %10 = vector.load %arg5[%c0_8, %c0_9] : memref<1x512xbf16, #tpu.memory_space<vmem>>, vector<1x512xbf16>
    %11 = arith.extf %10 : vector<1x512xbf16> to vector<1x512xf32>
    %12 = vector.broadcast %11 : vector<1x512xf32> to vector<2x512xf32>
    %13 = arith.addf %9, %12 : vector<2x512xf32>
    %14 = arith.truncf %13 : vector<2x512xf32> to vector<2x512xbf16>
    %c0_10 = arith.constant 0 : index
    %c0_11 = arith.constant 0 : index
    %15 = vector.load %arg6[%c0_10, %c0_11] : memref<2x512xbf16, #tpu.memory_space<vmem>>, vector<2x512xbf16>
    tpu.vector_store %arg6[%c0_10, %c0_11], %14 {strides = array<i32>} : memref<2x512xbf16, #tpu.memory_space<vmem>>, vector<2x512xbf16>,
    return
  }
  func.func @transform_0(%arg0: i32) -> (i32, i32) {
    %c0_i32 = arith.constant 0 : i32
    %c0_i32_0 = arith.constant 0 : i32
    return %arg0, %c0_i32 : i32, i32
  }
  func.func @transform_1(%arg0: i32) -> (i32, i32) {
    %c0_i32 = arith.constant 0 : i32
    %c0_i32_0 = arith.constant 0 : i32
    %c0_i32_1 = arith.constant 0 : i32
    return %c0_i32, %c0_i32_0 : i32, i32
  }
  func.func @transform_2(%arg0: i32) -> (i32, i32) {
    %c0_i32 = arith.constant 0 : i32
    %c0_i32_0 = arith.constant 0 : i32
    %c0_i32_1 = arith.constant 0 : i32
    return %c0_i32, %c0_i32_0 : i32, i32
  }
  func.func @transform_3(%arg0: i32) -> (i32, i32) {
    %c0_i32 = arith.constant 0 : i32
    %c0_i32_0 = arith.constant 0 : i32
    %c0_i32_1 = arith.constant 0 : i32
    return %c0_i32, %c0_i32_0 : i32, i32
  }
  func.func @transform_4(%arg0: i32) -> (i32, i32) {
    %c0_i32 = arith.constant 0 : i32
    %c0_i32_0 = arith.constant 0 : i32
    %c0_i32_1 = arith.constant 0 : i32
    return %c0_i32, %c0_i32_0 : i32, i32
  }
  func.func @transform_5(%arg0: i32) -> (i32, i32) {
    %c0_i32 = arith.constant 0 : i32
    %c0_i32_0 = arith.constant 0 : i32
    return %arg0, %c0_i32 : i32, i32
  }
}

module attributes {stable_mosaic.version = 11 : i64} {
  func.func @_chain_kernel(%arg0: i32, %arg1: memref<2x256xbf16, #tpu.memory_space<vmem>>, %arg2: memref<256x256xbf16, #tpu.memory_space<vmem>>, %arg3: memref<1x256xbf16, #tpu.memory_space<vmem>>, %arg4: memref<256x256xbf16, #tpu.memory_space<vmem>>, %arg5: memref<1x256xbf16, #tpu.memory_space<vmem>>, %arg6: memref<256x512xbf16, #tpu.memory_space<vmem>>, %arg7: memref<1x512xbf16, #tpu.memory_space<vmem>>, %arg8: memref<2x512xbf16, #tpu.memory_space<vmem>>) attributes {dimension_semantics = [#tpu.dimension_semantics<parallel>], iteration_bounds = array<i64: 1>, scalar_prefetch = 0 : i64, scratch_operands = 0 : i64, tpu.core_type = #tpu.core_type<tc>, window_params = [{transform_indices = @transform_0, window_bounds = array<i64: 2, 256>}, {pipeline_mode = #tpu.pipeline_mode<synchronous>, transform_indices = @transform_1, window_bounds = array<i64: 256, 256>}, {pipeline_mode = #tpu.pipeline_mode<synchronous>, transform_indices = @transform_2, window_bounds = array<i64: 1, 256>}, {pipeline_mode = #tpu.pipeline_mode<synchronous>, transform_indices = @transform_3, window_bounds = array<i64: 256, 256>}, {pipeline_mode = #tpu.pipeline_mode<synchronous>, transform_indices = @transform_4, window_bounds = array<i64: 1, 256>}, {pipeline_mode = #tpu.pipeline_mode<synchronous>, transform_indices = @transform_5, window_bounds = array<i64: 256, 512>}, {pipeline_mode = #tpu.pipeline_mode<synchronous>, transform_indices = @transform_6, window_bounds = array<i64: 1, 512>}, {transform_indices = @transform_7, window_bounds = array<i64: 2, 512>}]} {
    %c0 = arith.constant 0 : index
    %c0_0 = arith.constant 0 : index
    %0 = vector.load %arg1[%c0, %c0_0] : memref<2x256xbf16, #tpu.memory_space<vmem>>, vector<2x256xbf16>
    %c0_1 = arith.constant 0 : index
    %c0_2 = arith.constant 0 : index
    %1 = vector.load %arg2[%c0_1, %c0_2] : memref<256x256xbf16, #tpu.memory_space<vmem>>, vector<256x256xbf16>
    %cst = arith.constant dense<0.000000e+00> : vector<2x256xf32>
    %2 = tpu.matmul %0, %1, %cst {dimension_numbers = #tpu.dot_dimension_numbers<[1], [0], [0], [1], [0, 0, 1, 1], [], []>} : vector<2x256xbf16>, vector<256x256xbf16>, vector<2x256xf32> -> vector<2x256xf32>
    %c0_3 = arith.constant 0 : index
    %c0_4 = arith.constant 0 : index
    %3 = vector.load %arg3[%c0_3, %c0_4] : memref<1x256xbf16, #tpu.memory_space<vmem>>, vector<1x256xbf16>
    %4 = arith.extf %3 : vector<1x256xbf16> to vector<1x256xf32>
    %5 = vector.broadcast %4 : vector<1x256xf32> to vector<2x256xf32>
    %6 = arith.addf %2, %5 : vector<2x256xf32>
    %cst_5 = arith.constant 0.000000e+00 : f32
    %7 = vector.broadcast %cst_5 : f32 to vector<2x256xf32>
    %8 = arith.maximumf %6, %7 : vector<2x256xf32>
    %9 = arith.truncf %8 : vector<2x256xf32> to vector<2x256xbf16>
    %c0_6 = arith.constant 0 : index
    %c0_7 = arith.constant 0 : index
    %10 = vector.load %arg4[%c0_6, %c0_7] : memref<256x256xbf16, #tpu.memory_space<vmem>>, vector<256x256xbf16>
    %cst_8 = arith.constant dense<0.000000e+00> : vector<2x256xf32>
    %11 = tpu.matmul %9, %10, %cst_8 {dimension_numbers = #tpu.dot_dimension_numbers<[1], [0], [0], [1], [0, 0, 1, 1], [], []>} : vector<2x256xbf16>, vector<256x256xbf16>, vector<2x256xf32> -> vector<2x256xf32>
    %c0_9 = arith.constant 0 : index
    %c0_10 = arith.constant 0 : index
    %12 = vector.load %arg5[%c0_9, %c0_10] : memref<1x256xbf16, #tpu.memory_space<vmem>>, vector<1x256xbf16>
    %13 = arith.extf %12 : vector<1x256xbf16> to vector<1x256xf32>
    %14 = vector.broadcast %13 : vector<1x256xf32> to vector<2x256xf32>
    %15 = arith.addf %11, %14 : vector<2x256xf32>
    %16 = arith.truncf %15 : vector<2x256xf32> to vector<2x256xbf16>
    %c0_11 = arith.constant 0 : index
    %c0_12 = arith.constant 0 : index
    %17 = vector.load %arg6[%c0_11, %c0_12] : memref<256x512xbf16, #tpu.memory_space<vmem>>, vector<256x512xbf16>
    %cst_13 = arith.constant dense<0.000000e+00> : vector<2x512xf32>
    %18 = tpu.matmul %16, %17, %cst_13 {dimension_numbers = #tpu.dot_dimension_numbers<[1], [0], [0], [1], [0, 0, 1, 1], [], []>} : vector<2x256xbf16>, vector<256x512xbf16>, vector<2x512xf32> -> vector<2x512xf32>
    %c0_14 = arith.constant 0 : index
    %c0_15 = arith.constant 0 : index
    %19 = vector.load %arg7[%c0_14, %c0_15] : memref<1x512xbf16, #tpu.memory_space<vmem>>, vector<1x512xbf16>
    %20 = arith.extf %19 : vector<1x512xbf16> to vector<1x512xf32>
    %21 = vector.broadcast %20 : vector<1x512xf32> to vector<2x512xf32>
    %22 = arith.addf %18, %21 : vector<2x512xf32>
    %23 = arith.truncf %22 : vector<2x512xf32> to vector<2x512xbf16>
    %c0_16 = arith.constant 0 : index
    %c0_17 = arith.constant 0 : index
    %24 = vector.load %arg8[%c0_16, %c0_17] : memref<2x512xbf16, #tpu.memory_space<vmem>>, vector<2x512xbf16>
    tpu.vector_store %arg8[%c0_16, %c0_17], %23 {strides = array<i32>} : memref<2x512xbf16, #tpu.memory_space<vmem>>, vector<2x512xbf16>,
    return
  }
  func.func @transform_0(%arg0: i32) -> (i32, i32) {
    %c0_i32 = arith.constant 0 : i32
    %c0_i32_0 = arith.constant 0 : i32
    return %arg0, %c0_i32 : i32, i32
  }
  func.func @transform_1(%arg0: i32) -> (i32, i32) {
    %c0_i32 = arith.constant 0 : i32
    %c0_i32_0 = arith.constant 0 : i32
    %c0_i32_1 = arith.constant 0 : i32
    return %c0_i32, %c0_i32_0 : i32, i32
  }
  func.func @transform_2(%arg0: i32) -> (i32, i32) {
    %c0_i32 = arith.constant 0 : i32
    %c0_i32_0 = arith.constant 0 : i32
    %c0_i32_1 = arith.constant 0 : i32
    return %c0_i32, %c0_i32_0 : i32, i32
  }
  func.func @transform_3(%arg0: i32) -> (i32, i32) {
    %c0_i32 = arith.constant 0 : i32
    %c0_i32_0 = arith.constant 0 : i32
    %c0_i32_1 = arith.constant 0 : i32
    return %c0_i32, %c0_i32_0 : i32, i32
  }
  func.func @transform_4(%arg0: i32) -> (i32, i32) {
    %c0_i32 = arith.constant 0 : i32
    %c0_i32_0 = arith.constant 0 : i32
    %c0_i32_1 = arith.constant 0 : i32
    return %c0_i32, %c0_i32_0 : i32, i32
  }
  func.func @transform_5(%arg0: i32) -> (i32, i32) {
    %c0_i32 = arith.constant 0 : i32
    %c0_i32_0 = arith.constant 0 : i32
    %c0_i32_1 = arith.constant 0 : i32
    return %c0_i32, %c0_i32_0 : i32, i32
  }
  func.func @transform_6(%arg0: i32) -> (i32, i32) {
    %c0_i32 = arith.constant 0 : i32
    %c0_i32_0 = arith.constant 0 : i32
    %c0_i32_1 = arith.constant 0 : i32
    return %c0_i32, %c0_i32_0 : i32, i32
  }
  func.func @transform_7(%arg0: i32) -> (i32, i32) {
    %c0_i32 = arith.constant 0 : i32
    %c0_i32_0 = arith.constant 0 : i32
    return %arg0, %c0_i32 : i32, i32
  }
}

module attributes {stable_mosaic.version = 11 : i64} {
  func.func @_chain_kernel(%arg0: i32, %arg1: memref<8x3xbf16, #tpu.memory_space<vmem>>, %arg2: memref<3x512xbf16, #tpu.memory_space<vmem>>, %arg3: memref<1x512xbf16, #tpu.memory_space<vmem>>, %arg4: memref<8x512xbf16, #tpu.memory_space<vmem>>) attributes {dimension_semantics = [#tpu.dimension_semantics<parallel>], iteration_bounds = array<i64: 1>, scalar_prefetch = 0 : i64, scratch_operands = 0 : i64, tpu.core_type = #tpu.core_type<tc>, window_params = [{transform_indices = @transform_0, window_bounds = array<i64: 8, 3>}, {pipeline_mode = #tpu.pipeline_mode<synchronous>, transform_indices = @transform_1, window_bounds = array<i64: 3, 512>}, {pipeline_mode = #tpu.pipeline_mode<synchronous>, transform_indices = @transform_2, window_bounds = array<i64: 1, 512>}, {transform_indices = @transform_3, window_bounds = array<i64: 8, 512>}]} {
    %c0 = arith.constant 0 : index
    %c0_0 = arith.constant 0 : index
    %0 = vector.load %arg1[%c0, %c0_0] : memref<8x3xbf16, #tpu.memory_space<vmem>>, vector<8x3xbf16>
    %c0_1 = arith.constant 0 : index
    %c0_2 = arith.constant 0 : index
    %1 = vector.load %arg2[%c0_1, %c0_2] : memref<3x512xbf16, #tpu.memory_space<vmem>>, vector<3x512xbf16>
    %cst = arith.constant dense<0.000000e+00> : vector<8x512xf32>
    %2 = tpu.matmul %0, %1, %cst {dimension_numbers = #tpu.dot_dimension_numbers<[1], [0], [0], [1], [0, 0, 1, 1], [], []>} : vector<8x3xbf16>, vector<3x512xbf16>, vector<8x512xf32> -> vector<8x512xf32>
    %c0_3 = arith.constant 0 : index
    %c0_4 = arith.constant 0 : index
    %3 = vector.load %arg3[%c0_3, %c0_4] : memref<1x512xbf16, #tpu.memory_space<vmem>>, vector<1x512xbf16>
    %4 = arith.extf %3 : vector<1x512xbf16> to vector<1x512xf32>
    %5 = vector.broadcast %4 : vector<1x512xf32> to vector<8x512xf32>
    %6 = arith.addf %2, %5 : vector<8x512xf32>
    %cst_5 = arith.constant 0.000000e+00 : f32
    %7 = vector.broadcast %cst_5 : f32 to vector<8x512xf32>
    %8 = arith.maximumf %6, %7 : vector<8x512xf32>
    %9 = arith.truncf %8 : vector<8x512xf32> to vector<8x512xbf16>
    %c0_6 = arith.constant 0 : index
    %c0_7 = arith.constant 0 : index
    %10 = vector.load %arg4[%c0_6, %c0_7] : memref<8x512xbf16, #tpu.memory_space<vmem>>, vector<8x512xbf16>
    tpu.vector_store %arg4[%c0_6, %c0_7], %9 {strides = array<i32>} : memref<8x512xbf16, #tpu.memory_space<vmem>>, vector<8x512xbf16>,
    return
  }
  func.func @transform_0(%arg0: i32) -> (i32, i32) {
    %c0_i32 = arith.constant 0 : i32
    %c0_i32_0 = arith.constant 0 : i32
    return %arg0, %c0_i32 : i32, i32
  }
  func.func @transform_1(%arg0: i32) -> (i32, i32) {
    %c0_i32 = arith.constant 0 : i32
    %c0_i32_0 = arith.constant 0 : i32
    %c0_i32_1 = arith.constant 0 : i32
    return %c0_i32, %c0_i32_0 : i32, i32
  }
  func.func @transform_2(%arg0: i32) -> (i32, i32) {
    %c0_i32 = arith.constant 0 : i32
    %c0_i32_0 = arith.constant 0 : i32
    %c0_i32_1 = arith.constant 0 : i32
    return %c0_i32, %c0_i32_0 : i32, i32
  }
  func.func @transform_3(%arg0: i32) -> (i32, i32) {
    %c0_i32 = arith.constant 0 : i32
    %c0_i32_0 = arith.constant 0 : i32
    return %arg0, %c0_i32 : i32, i32
  }
}

module attributes {stable_mosaic.version = 11 : i64} {
  func.func @_splitk_kernel(%arg0: i32, %arg1: memref<8x128xbf16, #tpu.memory_space<vmem>>, %arg2: memref<8x512xbf16, #tpu.memory_space<vmem>>, %arg3: memref<128x1024xbf16, #tpu.memory_space<vmem>>, %arg4: memref<512x1024xbf16, #tpu.memory_space<vmem>>, %arg5: memref<1x1024xbf16, #tpu.memory_space<vmem>>, %arg6: memref<8x1024xbf16, #tpu.memory_space<vmem>>) attributes {dimension_semantics = [#tpu.dimension_semantics<parallel>], iteration_bounds = array<i64: 1>, scalar_prefetch = 0 : i64, scratch_operands = 0 : i64, tpu.core_type = #tpu.core_type<tc>, window_params = [{transform_indices = @transform_0, window_bounds = array<i64: 8, 128>}, {transform_indices = @transform_1, window_bounds = array<i64: 8, 512>}, {pipeline_mode = #tpu.pipeline_mode<synchronous>, transform_indices = @transform_2, window_bounds = array<i64: 128, 1024>}, {pipeline_mode = #tpu.pipeline_mode<synchronous>, transform_indices = @transform_3, window_bounds = array<i64: 512, 1024>}, {pipeline_mode = #tpu.pipeline_mode<synchronous>, transform_indices = @transform_4, window_bounds = array<i64: 1, 1024>}, {transform_indices = @transform_5, window_bounds = array<i64: 8, 1024>}]} {
    %c0 = arith.constant 0 : index
    %c0_0 = arith.constant 0 : index
    %0 = vector.load %arg1[%c0, %c0_0] : memref<8x128xbf16, #tpu.memory_space<vmem>>, vector<8x128xbf16>
    %c0_1 = arith.constant 0 : index
    %c0_2 = arith.constant 0 : index
    %1 = vector.load %arg3[%c0_1, %c0_2] : memref<128x1024xbf16, #tpu.memory_space<vmem>>, vector<128x1024xbf16>
    %cst = arith.constant dense<0.000000e+00> : vector<8x1024xf32>
    %2 = tpu.matmul %0, %1, %cst {dimension_numbers = #tpu.dot_dimension_numbers<[1], [0], [0], [1], [0, 0, 1, 1], [], []>} : vector<8x128xbf16>, vector<128x1024xbf16>, vector<8x1024xf32> -> vector<8x1024xf32>
    %c0_3 = arith.constant 0 : index
    %c0_4 = arith.constant 0 : index
    %3 = vector.load %arg2[%c0_3, %c0_4] : memref<8x512xbf16, #tpu.memory_space<vmem>>, vector<8x512xbf16>
    %c0_5 = arith.constant 0 : index
    %c0_6 = arith.constant 0 : index
    %4 = vector.load %arg4[%c0_5, %c0_6] : memref<512x1024xbf16, #tpu.memory_space<vmem>>, vector<512x1024xbf16>
    %cst_7 = arith.constant dense<0.000000e+00> : vector<8x1024xf32>
    %5 = tpu.matmul %3, %4, %cst_7 {dimension_numbers = #tpu.dot_dimension_numbers<[1], [0], [0], [1], [0, 0, 1, 1], [], []>} : vector<8x512xbf16>, vector<512x1024xbf16>, vector<8x1024xf32> -> vector<8x1024xf32>
    %6 = arith.addf %2, %5 : vector<8x1024xf32>
    %c0_8 = arith.constant 0 : index
    %c0_9 = arith.constant 0 : index
    %7 = vector.load %arg5[%c0_8, %c0_9] : memref<1x1024xbf16, #tpu.memory_space<vmem>>, vector<1x1024xbf16>
    %8 = arith.extf %7 : vector<1x1024xbf16> to vector<1x1024xf32>
    %9 = vector.broadcast %8 : vector<1x1024xf32> to vector<8x1024xf32>
    %10 = arith.addf %6, %9 : vector<8x1024xf32>
    %11 = arith.truncf %10 : vector<8x1024xf32> to vector<8x1024xbf16>
    %c0_10 = arith.constant 0 : index
    %c0_11 = arith.constant 0 : index
    %12 = vector.load %arg6[%c0_10, %c0_11] : memref<8x1024xbf16, #tpu.memory_space<vmem>>, vector<8x1024xbf16>
    tpu.vector_store %arg6[%c0_10, %c0_11], %11 {strides = array<i32>} : memref<8x1024xbf16, #tpu.memory_space<vmem>>, vector<8x1024xbf16>,
    return
  }
  func.func @transform_0(%arg0: i32) -> (i32, i32) {
    %c0_i32 = arith.constant 0 : i32
    %c0_i32_0 = arith.constant 0 : i32
    return %arg0, %c0_i32 : i32, i32
  }
  func.func @transform_1(%arg0: i32) -> (i32, i32) {
    %c0_i32 = arith.constant 0 : i32
    %c0_i32_0 = arith.constant 0 : i32
    return %arg0, %c0_i32 : i32, i32
  }
  func.func @transform_2(%arg0: i32) -> (i32, i32) {
    %c0_i32 = arith.constant 0 : i32
    %c0_i32_0 = arith.constant 0 : i32
    %c0_i32_1 = arith.constant 0 : i32
    return %c0_i32, %c0_i32_0 : i32, i32
  }
  func.func @transform_3(%arg0: i32) -> (i32, i32) {
    %c0_i32 = arith.constant 0 : i32
    %c0_i32_0 = arith.constant 0 : i32
    %c0_i32_1 = arith.constant 0 : i32
    return %c0_i32, %c0_i32_0 : i32, i32
  }
  func.func @transform_4(%arg0: i32) -> (i32, i32) {
    %c0_i32 = arith.constant 0 : i32
    %c0_i32_0 = arith.constant 0 : i32
    %c0_i32_1 = arith.constant 0 : i32
    return %c0_i32, %c0_i32_0 : i32, i32
  }
  func.func @transform_5(%arg0: i32) -> (i32, i32) {
    %c0_i32 = arith.constant 0 : i32
    %c0_i32_0 = arith.constant 0 : i32
    return %arg0, %c0_i32 : i32, i32
  }
}

module attributes {stable_mosaic.version = 11 : i64} {
  func.func @_chain_kernel(%arg0: i32, %arg1: memref<32x3xbf16, #tpu.memory_space<vmem>>, %arg2: memref<3x256xbf16, #tpu.memory_space<vmem>>, %arg3: memref<1x256xbf16, #tpu.memory_space<vmem>>, %arg4: memref<32x256xbf16, #tpu.memory_space<vmem>>) attributes {dimension_semantics = [#tpu.dimension_semantics<parallel>], iteration_bounds = array<i64: 1>, scalar_prefetch = 0 : i64, scratch_operands = 0 : i64, tpu.core_type = #tpu.core_type<tc>, window_params = [{transform_indices = @transform_0, window_bounds = array<i64: 32, 3>}, {pipeline_mode = #tpu.pipeline_mode<synchronous>, transform_indices = @transform_1, window_bounds = array<i64: 3, 256>}, {pipeline_mode = #tpu.pipeline_mode<synchronous>, transform_indices = @transform_2, window_bounds = array<i64: 1, 256>}, {transform_indices = @transform_3, window_bounds = array<i64: 32, 256>}]} {
    %c0 = arith.constant 0 : index
    %c0_0 = arith.constant 0 : index
    %0 = vector.load %arg1[%c0, %c0_0] : memref<32x3xbf16, #tpu.memory_space<vmem>>, vector<32x3xbf16>
    %c0_1 = arith.constant 0 : index
    %c0_2 = arith.constant 0 : index
    %1 = vector.load %arg2[%c0_1, %c0_2] : memref<3x256xbf16, #tpu.memory_space<vmem>>, vector<3x256xbf16>
    %cst = arith.constant dense<0.000000e+00> : vector<32x256xf32>
    %2 = tpu.matmul %0, %1, %cst {dimension_numbers = #tpu.dot_dimension_numbers<[1], [0], [0], [1], [0, 0, 1, 1], [], []>} : vector<32x3xbf16>, vector<3x256xbf16>, vector<32x256xf32> -> vector<32x256xf32>
    %c0_3 = arith.constant 0 : index
    %c0_4 = arith.constant 0 : index
    %3 = vector.load %arg3[%c0_3, %c0_4] : memref<1x256xbf16, #tpu.memory_space<vmem>>, vector<1x256xbf16>
    %4 = arith.extf %3 : vector<1x256xbf16> to vector<1x256xf32>
    %5 = vector.broadcast %4 : vector<1x256xf32> to vector<32x256xf32>
    %6 = arith.addf %2, %5 : vector<32x256xf32>
    %cst_5 = arith.constant 0.000000e+00 : f32
    %7 = vector.broadcast %cst_5 : f32 to vector<32x256xf32>
    %8 = arith.maximumf %6, %7 : vector<32x256xf32>
    %9 = arith.truncf %8 : vector<32x256xf32> to vector<32x256xbf16>
    %c0_6 = arith.constant 0 : index
    %c0_7 = arith.constant 0 : index
    %10 = vector.load %arg4[%c0_6, %c0_7] : memref<32x256xbf16, #tpu.memory_space<vmem>>, vector<32x256xbf16>
    tpu.vector_store %arg4[%c0_6, %c0_7], %9 {strides = array<i32>} : memref<32x256xbf16, #tpu.memory_space<vmem>>, vector<32x256xbf16>,
    return
  }
  func.func @transform_0(%arg0: i32) -> (i32, i32) {
    %c0_i32 = arith.constant 0 : i32
    %c0_i32_0 = arith.constant 0 : i32
    return %arg0, %c0_i32 : i32, i32
  }
  func.func @transform_1(%arg0: i32) -> (i32, i32) {
    %c0_i32 = arith.constant 0 : i32
    %c0_i32_0 = arith.constant 0 : i32
    %c0_i32_1 = arith.constant 0 : i32
    return %c0_i32, %c0_i32_0 : i32, i32
  }
  func.func @transform_2(%arg0: i32) -> (i32, i32) {
    %c0_i32 = arith.constant 0 : i32
    %c0_i32_0 = arith.constant 0 : i32
    %c0_i32_1 = arith.constant 0 : i32
    return %c0_i32, %c0_i32_0 : i32, i32
  }
  func.func @transform_3(%arg0: i32) -> (i32, i32) {
    %c0_i32 = arith.constant 0 : i32
    %c0_i32_0 = arith.constant 0 : i32
    return %arg0, %c0_i32 : i32, i32
  }
}

module attributes {stable_mosaic.version = 11 : i64} {
  func.func @_splitk_kernel(%arg0: i32, %arg1: memref<32x256xbf16, #tpu.memory_space<vmem>>, %arg2: memref<32x256xbf16, #tpu.memory_space<vmem>>, %arg3: memref<256x128xbf16, #tpu.memory_space<vmem>>, %arg4: memref<256x128xbf16, #tpu.memory_space<vmem>>, %arg5: memref<1x128xbf16, #tpu.memory_space<vmem>>, %arg6: memref<32x128xf32, #tpu.memory_space<vmem>>) attributes {dimension_semantics = [#tpu.dimension_semantics<parallel>], iteration_bounds = array<i64: 1>, scalar_prefetch = 0 : i64, scratch_operands = 0 : i64, tpu.core_type = #tpu.core_type<tc>, window_params = [{transform_indices = @transform_0, window_bounds = array<i64: 32, 256>}, {transform_indices = @transform_1, window_bounds = array<i64: 32, 256>}, {pipeline_mode = #tpu.pipeline_mode<synchronous>, transform_indices = @transform_2, window_bounds = array<i64: 256, 128>}, {pipeline_mode = #tpu.pipeline_mode<synchronous>, transform_indices = @transform_3, window_bounds = array<i64: 256, 128>}, {pipeline_mode = #tpu.pipeline_mode<synchronous>, transform_indices = @transform_4, window_bounds = array<i64: 1, 128>}, {transform_indices = @transform_5, window_bounds = array<i64: 32, 128>}]} {
    %c0 = arith.constant 0 : index
    %c0_0 = arith.constant 0 : index
    %0 = vector.load %arg1[%c0, %c0_0] : memref<32x256xbf16, #tpu.memory_space<vmem>>, vector<32x256xbf16>
    %c0_1 = arith.constant 0 : index
    %c0_2 = arith.constant 0 : index
    %1 = vector.load %arg3[%c0_1, %c0_2] : memref<256x128xbf16, #tpu.memory_space<vmem>>, vector<256x128xbf16>
    %cst = arith.constant dense<0.000000e+00> : vector<32x128xf32>
    %2 = tpu.matmul %0, %1, %cst {dimension_numbers = #tpu.dot_dimension_numbers<[1], [0], [0], [1], [0, 0, 1, 1], [], []>} : vector<32x256xbf16>, vector<256x128xbf16>, vector<32x128xf32> -> vector<32x128xf32>
    %c0_3 = arith.constant 0 : index
    %c0_4 = arith.constant 0 : index
    %3 = vector.load %arg2[%c0_3, %c0_4] : memref<32x256xbf16, #tpu.memory_space<vmem>>, vector<32x256xbf16>
    %c0_5 = arith.constant 0 : index
    %c0_6 = arith.constant 0 : index
    %4 = vector.load %arg4[%c0_5, %c0_6] : memref<256x128xbf16, #tpu.memory_space<vmem>>, vector<256x128xbf16>
    %cst_7 = arith.constant dense<0.000000e+00> : vector<32x128xf32>
    %5 = tpu.matmul %3, %4, %cst_7 {dimension_numbers = #tpu.dot_dimension_numbers<[1], [0], [0], [1], [0, 0, 1, 1], [], []>} : vector<32x256xbf16>, vector<256x128xbf16>, vector<32x128xf32> -> vector<32x128xf32>
    %6 = arith.addf %2, %5 : vector<32x128xf32>
    %c0_8 = arith.constant 0 : index
    %c0_9 = arith.constant 0 : index
    %7 = vector.load %arg5[%c0_8, %c0_9] : memref<1x128xbf16, #tpu.memory_space<vmem>>, vector<1x128xbf16>
    %8 = arith.extf %7 : vector<1x128xbf16> to vector<1x128xf32>
    %9 = vector.broadcast %8 : vector<1x128xf32> to vector<32x128xf32>
    %10 = arith.addf %6, %9 : vector<32x128xf32>
    %c0_10 = arith.constant 0 : index
    %c0_11 = arith.constant 0 : index
    %11 = vector.load %arg6[%c0_10, %c0_11] : memref<32x128xf32, #tpu.memory_space<vmem>>, vector<32x128xf32>
    tpu.vector_store %arg6[%c0_10, %c0_11], %10 {strides = array<i32>} : memref<32x128xf32, #tpu.memory_space<vmem>>, vector<32x128xf32>,
    return
  }
  func.func @transform_0(%arg0: i32) -> (i32, i32) {
    %c0_i32 = arith.constant 0 : i32
    %c0_i32_0 = arith.constant 0 : i32
    return %arg0, %c0_i32 : i32, i32
  }
  func.func @transform_1(%arg0: i32) -> (i32, i32) {
    %c0_i32 = arith.constant 0 : i32
    %c0_i32_0 = arith.constant 0 : i32
    return %arg0, %c0_i32 : i32, i32
  }
  func.func @transform_2(%arg0: i32) -> (i32, i32) {
    %c0_i32 = arith.constant 0 : i32
    %c0_i32_0 = arith.constant 0 : i32
    %c0_i32_1 = arith.constant 0 : i32
    return %c0_i32, %c0_i32_0 : i32, i32
  }
  func.func @transform_3(%arg0: i32) -> (i32, i32) {
    %c0_i32 = arith.constant 0 : i32
    %c0_i32_0 = arith.constant 0 : i32
    %c0_i32_1 = arith.constant 0 : i32
    return %c0_i32, %c0_i32_0 : i32, i32
  }
  func.func @transform_4(%arg0: i32) -> (i32, i32) {
    %c0_i32 = arith.constant 0 : i32
    %c0_i32_0 = arith.constant 0 : i32
    %c0_i32_1 = arith.constant 0 : i32
    return %c0_i32, %c0_i32_0 : i32, i32
  }
  func.func @transform_5(%arg0: i32) -> (i32, i32) {
    %c0_i32 = arith.constant 0 : i32
    %c0_i32_0 = arith.constant 0 : i32
    return %arg0, %c0_i32 : i32, i32
  }
}

</mosaic_0001>

<llo_original>
// kernel: tablenet_forward.12
$region0: #{tablenet_forward.12}
  #allocation0 [shape = 'u32[]', space=smem, size = 0x4, offset = 0x4, fixed_abs, tag = 'smem constant byte address 0x4 - core index']
  #allocation1 [shape = 'u32[144,128]{1,0:T(1,128)}', space=vmem, size = 0x12000, scoped, tag = 'internal scratch']
  %s0 = inlined_call_operand.vmem [shape: bf16[2,3], index: 0, kind: input, shape index: {}]
  %s1 = inlined_call_operand.vmem [shape: bf16[3,512], index: 1, kind: input, shape index: {}]
  %s2 = inlined_call_operand.vmem [shape: bf16[1,512], index: 2, kind: input, shape index: {}]
  %s3 = inlined_call_operand.vmem [shape: bf16[2,512], index: 3, kind: output, shape index: {}]
  %s4 = sld [smem:[#allocation0]]
  $region22: #{tablenet_forward.12} parent=0
    _
  %s6 = ssub.s32 1, %s4
  %s7 = scalar_select 0, %s6, %s4
  // Predicated region
  $region2: #{tablenet_forward.12} parent=0 // pred_check
    _
  $region3: #{tablenet_forward.12} parent=0 // pred_check_branch
    %9 = sbr.rel (0) target = $region5
  $region4: #{tablenet_forward.12} parent=0 // pred_region
    _
  $region5: #{tablenet_forward.12} parent=0 // pred_fallthru
    _
  // Predicated region
  $region6: #{tablenet_forward.12} parent=0 // pred_check
    _
  $region7: #{tablenet_forward.12} parent=0 // pred_check_branch
    %11 = sbr.rel (0) target = $region9
  $region8: #{tablenet_forward.12} parent=0 // pred_region
    _
  $region9: #{tablenet_forward.12} parent=0 // pred_fallthru
    _
  // Predicated region
  $region10: #{tablenet_forward.12} parent=0 // pred_check
    _
  $region11: #{tablenet_forward.12} parent=0 // pred_check_branch
    %13 = sbr.rel (0) target = $region13
  $region12: #{tablenet_forward.12} parent=0 // pred_region
    _
  $region13: #{tablenet_forward.12} parent=0 // pred_fallthru
    _
  %v15 = vld [vmem:[%s0] sm:$0x1]
  %v16 = vld [vmem:[%s1] sm:$0xff]
  %v17 = vld [vmem:[%s2] sm:$0xf]
  %v18 = vunpack.c.l.bf16 %v17
  %v20 = vlaneseq
  %v21 = vshrl.u32 %v20, 7
  %v22 = vsub.s32 0, %v21
  %v23 = vrot.slane %v18, %v22
  %v24 = vlaneseq
  %v25 = vshrl.u32 %v24, 7
  %v26 = vsub.s32 2, %v25
  %v27 = vrot.slane %v18, %v26
  %v28 = vlaneseq
  %v29 = vshrl.u32 %v28, 7
  %v30 = vsub.s32 4, %v29
  %v31 = vrot.slane %v18, %v30
  %v32 = vlaneseq
  %v33 = vshrl.u32 %v32, 7
  %v34 = vsub.s32 6, %v33
  %v35 = vrot.slane %v18, %v34
  %v40 = vlaneseq
  %v41 = vshrl.u32 %v40, 7
  %v42 = vsub.s32 0, %v41
  %v43 = vrot.slane %v23, %v42
  %v44 = vlaneseq
  %v45 = vshrl.u32 %v44, 7
  %v46 = vsub.s32 0, %v45
  %v47 = vrot.slane %v27, %v46
  %v48 = vlaneseq
  %v49 = vshrl.u32 %v48, 7
  %v50 = vsub.s32 0, %v49
  %v51 = vrot.slane %v31, %v50
  %v52 = vlaneseq
  %v53 = vshrl.u32 %v52, 7
  %v54 = vsub.s32 0, %v53
  %v55 = vrot.slane %v35, %v54
  %v57 = vcombine.high %v16, %v16
  %v59 = vunpack.c.l.s4 1983009808
  %v60 = vunpack.c.0.s8 %v59
  %v61 = vlaneseq
  %v62 = vshrl.u32 %v61, 7
  %v63 = vsub.s32 %v60, %v62
  %v64 = vrot.slane %v16, %v63
  %v66 = vunpack.c.l.s4 1983009808
  %v67 = vunpack.c.0.s8 %v66
  %v68 = vlaneseq
  %v69 = vshrl.u32 %v68, 7
  %v70 = vsub.s32 %v67, %v69
  %v71 = vrot.slane %v57, %v70
  %v72 = vcombine.high %v64, %v64
  %v73 = vcombine.high %v71, %v71
  %vm74 = vcmask 23552
  %v76 = vsel %vm74, %v15, 0
  %vm78 = vcmask 1040384
  %vm79 = vcmask 1041408
  %v80 = vsel %vm78, 4294967295, 65535
  %v81 = vsel %vm79, %v80, 0
  %v83 = vand.u32 %v64, %v81
  %v86 = vand.u32 %v72, %v81
  %v89 = vand.u32 %v71, %v81
  %v92 = vand.u32 %v73, %v81
  %94 = vmatprep.subr.bf16.mxu0 %v86
  %95 = vmatpush1.bf16.msra.mxu0 %v83
  %96 = vmatprep.subr.bf16.mxu0 0
  %97 = vmatpush1.bf16.msra.mxu0 0
  %98 = vmatprep.subr.bf16.mxu0 0
  %99 = vmatpush1.bf16.msra.mxu0 0
  %100 = vmatprep.subr.bf16.mxu0 0
  %101 = vmatpush1.bf16.msra.mxu0 0
  %102 = vmatprep.subr.bf16.mxu0 0
  %103 = vmatpush1.bf16.msra.mxu0 0
  %104 = vmatprep.subr.bf16.mxu0 0
  %105 = vmatpush1.bf16.msra.mxu0 0
  %106 = vmatprep.subr.bf16.mxu0 0
  %107 = vmatpush1.bf16.msra.mxu0 0
  %108 = vmatprep.subr.bf16.mxu0 0
  %109 = vmatpush1.bf16.msra.mxu0 0
  %110 = vmatprep.subr.bf16.mxu0 0
  %111 = vmatpush1.bf16.msra.mxu0 0
  %112 = vmatprep.subr.bf16.mxu0 0
  %113 = vmatpush1.bf16.msra.mxu0 0
  %114 = vmatprep.subr.bf16.mxu0 0
  %115 = vmatpush1.bf16.msra.mxu0 0
  %116 = vmatprep.subr.bf16.mxu0 0
  %117 = vmatpush1.bf16.msra.mxu0 0
  %118 = vmatprep.subr.bf16.mxu0 0
  %119 = vmatpush1.bf16.msra.mxu0 0
  %120 = vmatprep.subr.bf16.mxu0 0
  %121 = vmatpush1.bf16.msra.mxu0 0
  %122 = vmatprep.subr.bf16.mxu0 0
  %123 = vmatpush1.bf16.msra.mxu0 0
  %124 = vmatprep.subr.bf16.mxu0 0
  %125 = vmatpush1.bf16.msra.mxu0 0
  %126 = vmatprep.mubr.bf16.mxu0 0
  %127 = vmatmul.mubr.bf16.gmra.mrb[0].mxu0 %v76
  %v128 = vpop.f32.mrb[0].mxu0
  %v129 = vadd.f32 %v43, %v128
  %v130 = vpop.f32.mrb[0].mxu0
  %v131 = vadd.f32 %v47, %v130
  %v132 = vpop.f32.mrb[0].mxu0
  %v133 = vpop.f32.mrb[0].mxu0
  %134 = vdwg.mxu0
  %135 = vmatprep.subr.bf16.mxu0 %v92
  %136 = vmatpush1.bf16.msra.mxu0 %v89
  %137 = vmatprep.subr.bf16.mxu0 0
  %138 = vmatpush1.bf16.msra.mxu0 0
  %139 = vmatprep.subr.bf16.mxu0 0
  %140 = vmatpush1.bf16.msra.mxu0 0
  %141 = vmatprep.subr.bf16.mxu0 0
  %142 = vmatpush1.bf16.msra.mxu0 0
  %143 = vmatprep.subr.bf16.mxu0 0
  %144 = vmatpush1.bf16.msra.mxu0 0
  %145 = vmatprep.subr.bf16.mxu0 0
  %146 = vmatpush1.bf16.msra.mxu0 0
  %147 = vmatprep.subr.bf16.mxu0 0
  %148 = vmatpush1.bf16.msra.mxu0 0
  %149 = vmatprep.subr.bf16.mxu0 0
  %150 = vmatpush1.bf16.msra.mxu0 0
  %151 = vmatprep.subr.bf16.mxu0 0
  %152 = vmatpush1.bf16.msra.mxu0 0
  %153 = vmatprep.subr.bf16.mxu0 0
  %154 = vmatpush1.bf16.msra.mxu0 0
  %155 = vmatprep.subr.bf16.mxu0 0
  %156 = vmatpush1.bf16.msra.mxu0 0
  %157 = vmatprep.subr.bf16.mxu0 0
  %158 = vmatpush1.bf16.msra.mxu0 0
  %159 = vmatprep.subr.bf16.mxu0 0
  %160 = vmatpush1.bf16.msra.mxu0 0
  %161 = vmatprep.subr.bf16.mxu0 0
  %162 = vmatpush1.bf16.msra.mxu0 0
  %163 = vmatprep.subr.bf16.mxu0 0
  %164 = vmatpush1.bf16.msra.mxu0 0
  %165 = vmatprep.subr.bf16.mxu0 0
  %166 = vmatpush1.bf16.msra.mxu0 0
  %167 = vmatprep.mubr.bf16.mxu0 0
  %168 = vmatmul.mubr.bf16.gmra.mrb[0].mxu0 %v76
  %v169 = vpop.f32.mrb[0].mxu0
  %v170 = vadd.f32 %v51, %v169
  %v171 = vpop.f32.mrb[0].mxu0
  %v172 = vadd.f32 %v55, %v171
  %v173 = vpop.f32.mrb[0].mxu0
  %v174 = vpop.f32.mrb[0].mxu0
  %175 = vdwg.mxu0
  %v176 = vmax.f32 %v129, 0.0
  %v177 = vmax.f32 %v131, 0.0
  %v178 = vmax.f32 %v170, 0.0
  %v179 = vmax.f32 %v172, 0.0
  %v180 = vpack.c.bf16 %v176, %v176
  %v181 = vpack.c.bf16 %v177, %v177
  %v182 = vpack.c.bf16 %v178, %v178
  %v183 = vpack.c.bf16 %v179, %v179
  %v188 = vcombine.low %v180, %v181
  %v189 = vcombine.low %v182, %v183
  %v191 = vunpack.c.l.s4 1966171168
  %v192 = vunpack.c.0.s8 %v191
  %v193 = vlaneseq
  %v194 = vshrl.u32 %v193, 7
  %v195 = vsub.s32 %v192, %v194
  %v196 = vrot.slane %v188, %v195
  %v198 = vunpack.c.l.s4 1966171168
  %v199 = vunpack.c.0.s8 %v198
  %v200 = vlaneseq
  %v201 = vshrl.u32 %v200, 7
  %v202 = vsub.s32 %v199, %v201
  %v203 = vrot.slane %v189, %v202
  %v204 = vcombine.low %v196, %v203
  %v206 = vunpack.c.l.s4 1966171168
  %v207 = vunpack.c.0.s8 %v206
  %v208 = vlaneseq
  %v209 = vshrl.u32 %v208, 7
  %v210 = vsub.s32 %v207, %v209
  %v211 = vrot.slane %v204, %v210
  %213 = vst [vmem:[%s3] sm:$0xf] %v211
  // Predicated region
  $region14: #{tablenet_forward.12} parent=0 // pred_check
    _
  $region15: #{tablenet_forward.12} parent=0 // pred_check_branch
    %215 = sbr.rel (0) target = $region17
  $region16: #{tablenet_forward.12} parent=0 // pred_region
    _
  $region17: #{tablenet_forward.12} parent=0 // pred_fallthru
    _
  // Predicated region
  $region18: #{tablenet_forward.12} parent=0 // pred_check
    _
  $region19: #{tablenet_forward.12} parent=0 // pred_check_branch
    %217 = sbr.rel (0) target = $region21
  $region20: #{tablenet_forward.12} parent=0 // pred_region
    _
  $region21: #{tablenet_forward.12} parent=0 // pred_fallthru
    _

// kernel: tablenet_forward.13
$region0: #{tablenet_forward.13}
  #allocation0 [shape = 'u32[]', space=smem, size = 0x4, offset = 0x4, fixed_abs, tag = 'smem constant byte address 0x4 - core index']
  #allocation1 [shape = 'u32[144,128]{1,0:T(1,128)}', space=vmem, size = 0x12000, scoped, tag = 'internal scratch']
  %s0 = inlined_call_operand.vmem [shape: bf16[2,512], index: 0, kind: input, shape index: {}]
  %s1 = inlined_call_operand.hbm [shape: bf16[512,256], index: 1, kind: input, shape index: {}]
  %s2 = inlined_call_operand.hbm [shape: bf16[1,256], index: 2, kind: input, shape index: {}]
  %s3 = inlined_call_operand.vmem [shape: bf16[256,256], index: 3, kind: input, shape index: {}]
  %s4 = inlined_call_operand.vmem [shape: bf16[1,256], index: 4, kind: input, shape index: {}]
  %s5 = inlined_call_operand.vmem [shape: bf16[2,256], index: 5, kind: output, shape index: {}]
  %s6 = sld [smem:[#allocation0]]
  $region38: #{tablenet_forward.13} parent=0
    _
  %s8 = ssub.s32 1, %s6
  %s9 = scalar_select 0, %s8, %s6
  $region1: #{tablenet_forward.13} parent=0
    #allocation2 [shape = 'u8[262144]{0}', space=vmem, size = 0x40000, scoped, tag = 'input window, operand 1, single buffered']
    #allocation3 [shape = 's32[1]{0}', space=sflag, size = 0x4, scoped, tag = 'scoped memory for tablenet_forward.13']
    #allocation4 [shape = 'u8[1024]{0}', space=vmem, size = 0x400, scoped, tag = 'input window, operand 2, single buffered']
    #allocation5 [shape = 's32[1]{0}', space=sflag, size = 0x4, scoped, tag = 'scoped memory for tablenet_forward.13']
    %10 = vsyncpa [#allocation3], 0
    %11 = vsyncpa [#allocation5], 0
    // Predicated region
    $region2: #{tablenet_forward.13} parent=1 // pred_check
      _
    $region3: #{tablenet_forward.13} parent=1 // pred_check_branch
      %13 = sbr.rel (0) target = $region5
    $region4: #{tablenet_forward.13} parent=1 // pred_region
      _
    $region5: #{tablenet_forward.13} parent=1 // pred_fallthru
      _
    // Predicated region
    $region6: #{tablenet_forward.13} parent=1 // pred_check
      _
    $region7: #{tablenet_forward.13} parent=1 // pred_check_branch
      %15 = sbr.rel (0) target = $region9
    $region8: #{tablenet_forward.13} parent=1 // pred_region
      %s17 = ssub.s32 8192, 8192
      %18 = vsyncadd [#allocation3], %s17
      %s19 = sshll.u32 [#allocation2], 4
      %s20 = int_to_ptr.vmem [resolvable:$true] %s19
      %25 = dma.hbm_to_vmem [thread:$0]  %s1, 8192, %s20, [#allocation3], 128, 128, 8
    $region9: #{tablenet_forward.13} parent=1 // pred_fallthru
      _
    // Predicated region
    $region10: #{tablenet_forward.13} parent=1 // pred_check
      _
    $region11: #{tablenet_forward.13} parent=1 // pred_check_branch
      %27 = sbr.rel (0) target = $region13
    $region12: #{tablenet_forward.13} parent=1 // pred_region
      %s29 = ssub.s32 32, 32
      %30 = vsyncadd [#allocation5], %s29
      %s32 = sshll.u32 [#allocation4], 4
      %s33 = int_to_ptr.vmem [resolvable:$true] %s32
      %35 = dma.hbm_to_vmem [thread:$0]  %s2, 32, %s33, [#allocation5]
    $region13: #{tablenet_forward.13} parent=1 // pred_fallthru
      _
    // Predicated region
    $region14: #{tablenet_forward.13} parent=1 // pred_check
      _
    $region15: #{tablenet_forward.13} parent=1 // pred_check_branch
      %37 = sbr.rel (0) target = $region17
    $region16: #{tablenet_forward.13} parent=1 // pred_region
      _
    $region17: #{tablenet_forward.13} parent=1 // pred_fallthru
      _
    // Predicated region
    $region18: #{tablenet_forward.13} parent=1 // pred_check
      _
    $region19: #{tablenet_forward.13} parent=1 // pred_check_branch
      %39 = sbr.rel (0) target = $region21
    $region20: #{tablenet_forward.13} parent=1 // pred_region
      _
    $region21: #{tablenet_forward.13} parent=1 // pred_fallthru
      _
    // Predicated region
    $region22: #{tablenet_forward.13} parent=1 // pred_check
      _
    $region23: #{tablenet_forward.13} parent=1 // pred_check_branch
      %41 = sbr.rel (0) target = $region25
    $region24: #{tablenet_forward.13} parent=1 // pred_region
      %42 = dma.done [#allocation3], 8192
    $region25: #{tablenet_forward.13} parent=1 // pred_fallthru
      _
    // Predicated region
    $region26: #{tablenet_forward.13} parent=1 // pred_check
      _
    $region27: #{tablenet_forward.13} parent=1 // pred_check_branch
      %44 = sbr.rel (0) target = $region29
    $region28: #{tablenet_forward.13} parent=1 // pred_region
      %45 = dma.done [#allocation5], 32
    $region29: #{tablenet_forward.13} parent=1 // pred_fallthru
      _
    %v46 = vld [vmem:[%s0] sm:$0xf]
    %v47 = vld [vmem:[#allocation2] sm:$0xff]
    %v48 = vld [vmem:[#allocation2 + $0x8] sm:$0xff]
    %v49 = vld [vmem:[#allocation2 + $0x10] sm:$0xff]
    %v50 = vld [vmem:[#allocation2 + $0x18] sm:$0xff]
    %v51 = vld [vmem:[#allocation2 + $0x20] sm:$0xff]
    %v52 = vld [vmem:[#allocation2 + $0x28] sm:$0xff]
    %v53 = vld [vmem:[#allocation2 + $0x30] sm:$0xff]
    %v54 = vld [vmem:[#allocation2 + $0x38] sm:$0xff]
    %v55 = vld [vmem:[#allocation2 + $0x40] sm:$0xff]
    %v56 = vld [vmem:[#allocation2 + $0x48] sm:$0xff]
    %v57 = vld [vmem:[#allocation2 + $0x50] sm:$0xff]
    %v58 = vld [vmem:[#allocation2 + $0x58] sm:$0xff]
    %v59 = vld [vmem:[#allocation2 + $0x60] sm:$0xff]
    %v60 = vld [vmem:[#allocation2 + $0x68] sm:$0xff]
    %v61 = vld [vmem:[#allocation2 + $0x70] sm:$0xff]
    %v62 = vld [vmem:[#allocation2 + $0x78] sm:$0xff]
    %v63 = vld [vmem:[#allocation2 + $0x80] sm:$0xff]
    %v64 = vld [vmem:[#allocation2 + $0x88] sm:$0xff]
    %v65 = vld [vmem:[#allocation2 + $0x90] sm:$0xff]
    %v66 = vld [vmem:[#allocation2 + $0x98] sm:$0xff]
    %v67 = vld [vmem:[#allocation2 + $0xa0] sm:$0xff]
    %v68 = vld [vmem:[#allocation2 + $0xa8] sm:$0xff]
    %v69 = vld [vmem:[#allocation2 + $0xb0] sm:$0xff]
    %v70 = vld [vmem:[#allocation2 + $0xb8] sm:$0xff]
    %v71 = vld [vmem:[#allocation2 + $0xc0] sm:$0xff]
    %v72 = vld [vmem:[#allocation2 + $0xc8] sm:$0xff]
    %v73 = vld [vmem:[#allocation2 + $0xd0] sm:$0xff]
    %v74 = vld [vmem:[#allocation2 + $0xd8] sm:$0xff]
    %v75 = vld [vmem:[#allocation2 + $0xe0] sm:$0xff]
    %v76 = vld [vmem:[#allocation2 + $0xe8] sm:$0xff]
    %v77 = vld [vmem:[#allocation2 + $0xf0] sm:$0xff]
    %v78 = vld [vmem:[#allocation2 + $0xf8] sm:$0xff]
    %v79 = vld [vmem:[#allocation2 + $0x100] sm:$0xff]
    %v80 = vld [vmem:[#allocation2 + $0x108] sm:$0xff]
    %v81 = vld [vmem:[#allocation2 + $0x110] sm:$0xff]
    %v82 = vld [vmem:[#allocation2 + $0x118] sm:$0xff]
    %v83 = vld [vmem:[#allocation2 + $0x120] sm:$0xff]
    %v84 = vld [vmem:[#allocation2 + $0x128] sm:$0xff]
    %v85 = vld [vmem:[#allocation2 + $0x130] sm:$0xff]
    %v86 = vld [vmem:[#allocation2 + $0x138] sm:$0xff]
    %v87 = vld [vmem:[#allocation2 + $0x140] sm:$0xff]
    %v88 = vld [vmem:[#allocation2 + $0x148] sm:$0xff]
    %v89 = vld [vmem:[#allocation2 + $0x150] sm:$0xff]
    %v90 = vld [vmem:[#allocation2 + $0x158] sm:$0xff]
    %v91 = vld [vmem:[#allocation2 + $0x160] sm:$0xff]
    %v92 = vld [vmem:[#allocation2 + $0x168] sm:$0xff]
    %v93 = vld [vmem:[#allocation2 + $0x170] sm:$0xff]
    %v94 = vld [vmem:[#allocation2 + $0x178] sm:$0xff]
    %v95 = vld [vmem:[#allocation2 + $0x180] sm:$0xff]
    %v96 = vld [vmem:[#allocation2 + $0x188] sm:$0xff]
    %v97 = vld [vmem:[#allocation2 + $0x190] sm:$0xff]
    %v98 = vld [vmem:[#allocation2 + $0x198] sm:$0xff]
    %v99 = vld [vmem:[#allocation2 + $0x1a0] sm:$0xff]
    %v100 = vld [vmem:[#allocation2 + $0x1a8] sm:$0xff]
    %v101 = vld [vmem:[#allocation2 + $0x1b0] sm:$0xff]
    %v102 = vld [vmem:[#allocation2 + $0x1b8] sm:$0xff]
    %v103 = vld [vmem:[#allocation2 + $0x1c0] sm:$0xff]
    %v104 = vld [vmem:[#allocation2 + $0x1c8] sm:$0xff]
    %v105 = vld [vmem:[#allocation2 + $0x1d0] sm:$0xff]
    %v106 = vld [vmem:[#allocation2 + $0x1d8] sm:$0xff]
    %v107 = vld [vmem:[#allocation2 + $0x1e0] sm:$0xff]
    %v108 = vld [vmem:[#allocation2 + $0x1e8] sm:$0xff]
    %v109 = vld [vmem:[#allocation2 + $0x1f0] sm:$0xff]
    %v110 = vld [vmem:[#allocation2 + $0x1f8] sm:$0xff]
    %v111 = vld [vmem:[#allocation4] sm:$0x3]
    %v112 = vunpack.c.l.bf16 %v111
    %v114 = vlaneseq
    %v115 = vshrl.u32 %v114, 7
    %v116 = vsub.s32 0, %v115
    %v117 = vrot.slane %v112, %v116
    %v118 = vlaneseq
    %v119 = vshrl.u32 %v118, 7
    %v120 = vsub.s32 2, %v119
    %v121 = vrot.slane %v112, %v120
    %v124 = vlaneseq
    %v125 = vshrl.u32 %v124, 7
    %v126 = vsub.s32 0, %v125
    %v127 = vrot.slane %v117, %v126
    %v128 = vlaneseq
    %v129 = vshrl.u32 %v128, 7
    %v130 = vsub.s32 0, %v129
    %v131 = vrot.slane %v121, %v130
    %v134 = vunpack.c.l.s4 1966171168
    %v135 = vunpack.c.0.s8 %v134
    %v136 = vlaneseq
    %v137 = vshrl.u32 %v136, 7
    %v138 = vsub.s32 %v135, %v137
    %v139 = vrot.slane %v46, %v138
    %v140 = vcombine.high %v139, %v139
    %v142 = vunpack.c.l.s4 1966171168
    %v143 = vunpack.c.0.s8 %v142
    %v144 = vlaneseq
    %v145 = vshrl.u32 %v144, 7
    %v146 = vsub.s32 %v143, %v145
    %v147 = vrot.slane %v139, %v146
    %v149 = vunpack.c.l.s4 1966171168
    %v150 = vunpack.c.0.s8 %v149
    %v151 = vlaneseq
    %v152 = vshrl.u32 %v151, 7
    %v153 = vsub.s32 %v150, %v152
    %v154 = vrot.slane %v140, %v153
    %v155 = vcombine.high %v147, %v147
    %v156 = vcombine.high %v154, %v154
    %v225 = vunpack.c.l.b16 %v47
    %v226 = vunpack.c.h.b16 %v47
    %v227 = vunpack.c.l.b16 %v48
    %v228 = vunpack.c.h.b16 %v48
    %v229 = vunpack.c.l.b16 %v49
    %v230 = vunpack.c.h.b16 %v49
    %v231 = vunpack.c.l.b16 %v50
    %v232 = vunpack.c.h.b16 %v50
    %v233 = vunpack.c.l.b16 %v51
    %v234 = vunpack.c.h.b16 %v51
    %v235 = vunpack.c.l.b16 %v52
    %v236 = vunpack.c.h.b16 %v52
    %v237 = vunpack.c.l.b16 %v53
    %v238 = vunpack.c.h.b16 %v53
    %v239 = vunpack.c.l.b16 %v54
    %v240 = vunpack.c.h.b16 %v54
    %v241 = vunpack.c.l.b16 %v55
    %v242 = vunpack.c.h.b16 %v55
    %v243 = vunpack.c.l.b16 %v56
    %v244 = vunpack.c.h.b16 %v56
    %v245 = vunpack.c.l.b16 %v57
    %v246 = vunpack.c.h.b16 %v57
    %v247 = vunpack.c.l.b16 %v58
    %v248 = vunpack.c.h.b16 %v58
    %v249 = vunpack.c.l.b16 %v59
    %v250 = vunpack.c.h.b16 %v59
    %v251 = vunpack.c.l.b16 %v60
    %v252 = vunpack.c.h.b16 %v60
    %v253 = vunpack.c.l.b16 %v61
    %v254 = vunpack.c.h.b16 %v61
    %v255 = vunpack.c.l.b16 %v62
    %v256 = vunpack.c.h.b16 %v62
    %v257 = vunpack.c.l.b16 %v63
    %v258 = vunpack.c.h.b16 %v63
    %v259 = vunpack.c.l.b16 %v64
    %v260 = vunpack.c.h.b16 %v64
    %v261 = vunpack.c.l.b16 %v65
    %v262 = vunpack.c.h.b16 %v65
    %v263 = vunpack.c.l.b16 %v66
    %v264 = vunpack.c.h.b16 %v66
    %v265 = vunpack.c.l.b16 %v67
    %v266 = vunpack.c.h.b16 %v67
    %v267 = vunpack.c.l.b16 %v68
    %v268 = vunpack.c.h.b16 %v68
    %v269 = vunpack.c.l.b16 %v69
    %v270 = vunpack.c.h.b16 %v69
    %v271 = vunpack.c.l.b16 %v70
    %v272 = vunpack.c.h.b16 %v70
    %v273 = vunpack.c.l.b16 %v71
    %v274 = vunpack.c.h.b16 %v71
    %v275 = vunpack.c.l.b16 %v72
    %v276 = vunpack.c.h.b16 %v72
    %v277 = vunpack.c.l.b16 %v73
    %v278 = vunpack.c.h.b16 %v73
    %v279 = vunpack.c.l.b16 %v74
    %v280 = vunpack.c.h.b16 %v74
    %v281 = vunpack.c.l.b16 %v75
    %v282 = vunpack.c.h.b16 %v75
    %v283 = vunpack.c.l.b16 %v76
    %v284 = vunpack.c.h.b16 %v76
    %v285 = vunpack.c.l.b16 %v77
    %v286 = vunpack.c.h.b16 %v77
    %v287 = vunpack.c.l.b16 %v78
    %v288 = vunpack.c.h.b16 %v78
    %v289 = vunpack.c.l.b16 %v79
    %v290 = vunpack.c.h.b16 %v79
    %v291 = vunpack.c.l.b16 %v80
    %v292 = vunpack.c.h.b16 %v80
    %v293 = vunpack.c.l.b16 %v81
    %v294 = vunpack.c.h.b16 %v81
    %v295 = vunpack.c.l.b16 %v82
    %v296 = vunpack.c.h.b16 %v82
    %v297 = vunpack.c.l.b16 %v83
    %v298 = vunpack.c.h.b16 %v83
    %v299 = vunpack.c.l.b16 %v84
    %v300 = vunpack.c.h.b16 %v84
    %v301 = vunpack.c.l.b16 %v85
    %v302 = vunpack.c.h.b16 %v85
    %v303 = vunpack.c.l.b16 %v86
    %v304 = vunpack.c.h.b16 %v86
    %v305 = vunpack.c.l.b16 %v87
    %v306 = vunpack.c.h.b16 %v87
    %v307 = vunpack.c.l.b16 %v88
    %v308 = vunpack.c.h.b16 %v88
    %v309 = vunpack.c.l.b16 %v89
    %v310 = vunpack.c.h.b16 %v89
    %v311 = vunpack.c.l.b16 %v90
    %v312 = vunpack.c.h.b16 %v90
    %v313 = vunpack.c.l.b16 %v91
    %v314 = vunpack.c.h.b16 %v91
    %v315 = vunpack.c.l.b16 %v92
    %v316 = vunpack.c.h.b16 %v92
    %v317 = vunpack.c.l.b16 %v93
    %v318 = vunpack.c.h.b16 %v93
    %v319 = vunpack.c.l.b16 %v94
    %v320 = vunpack.c.h.b16 %v94
    %v321 = vunpack.c.l.b16 %v95
    %v322 = vunpack.c.h.b16 %v95
    %v323 = vunpack.c.l.b16 %v96
    %v324 = vunpack.c.h.b16 %v96
    %v325 = vunpack.c.l.b16 %v97
    %v326 = vunpack.c.h.b16 %v97
    %v327 = vunpack.c.l.b16 %v98
    %v328 = vunpack.c.h.b16 %v98
    %v329 = vunpack.c.l.b16 %v99
    %v330 = vunpack.c.h.b16 %v99
    %v331 = vunpack.c.l.b16 %v100
    %v332 = vunpack.c.h.b16 %v100
    %v333 = vunpack.c.l.b16 %v101
    %v334 = vunpack.c.h.b16 %v101
    %v335 = vunpack.c.l.b16 %v102
    %v336 = vunpack.c.h.b16 %v102
    %v337 = vunpack.c.l.b16 %v103
    %v338 = vunpack.c.h.b16 %v103
    %v339 = vunpack.c.l.b16 %v104
    %v340 = vunpack.c.h.b16 %v104
    %v341 = vunpack.c.l.b16 %v105
    %v342 = vunpack.c.h.b16 %v105
    %v343 = vunpack.c.l.b16 %v106
    %v344 = vunpack.c.h.b16 %v106
    %v345 = vunpack.c.l.b16 %v107
    %v346 = vunpack.c.h.b16 %v107
    %v347 = vunpack.c.l.b16 %v108
    %v348 = vunpack.c.h.b16 %v108
    %v349 = vunpack.c.l.b16 %v109
    %v350 = vunpack.c.h.b16 %v109
    %v351 = vunpack.c.l.b16 %v110
    %v352 = vunpack.c.h.b16 %v110
    %v353 = vpack.c.b16 %v227, %v225
    %v354 = vpack.c.b16 %v228, %v226
    %v355 = vpack.c.b16 %v231, %v229
    %v356 = vpack.c.b16 %v232, %v230
    %v357 = vpack.c.b16 %v235, %v233
    %v358 = vpack.c.b16 %v236, %v234
    %v359 = vpack.c.b16 %v239, %v237
    %v360 = vpack.c.b16 %v240, %v238
    %v361 = vpack.c.b16 %v243, %v241
    %v362 = vpack.c.b16 %v244, %v242
    %v363 = vpack.c.b16 %v247, %v245
    %v364 = vpack.c.b16 %v248, %v246
    %v365 = vpack.c.b16 %v251, %v249
    %v366 = vpack.c.b16 %v252, %v250
    %v367 = vpack.c.b16 %v255, %v253
    %v368 = vpack.c.b16 %v256, %v254
    %v369 = vpack.c.b16 %v259, %v257
    %v370 = vpack.c.b16 %v260, %v258
    %v371 = vpack.c.b16 %v263, %v261
    %v372 = vpack.c.b16 %v264, %v262
    %v373 = vpack.c.b16 %v267, %v265
    %v374 = vpack.c.b16 %v268, %v266
    %v375 = vpack.c.b16 %v271, %v269
    %v376 = vpack.c.b16 %v272, %v270
    %v377 = vpack.c.b16 %v275, %v273
    %v378 = vpack.c.b16 %v276, %v274
    %v379 = vpack.c.b16 %v279, %v277
    %v380 = vpack.c.b16 %v280, %v278
    %v381 = vpack.c.b16 %v283, %v281
    %v382 = vpack.c.b16 %v284, %v282
    %v383 = vpack.c.b16 %v287, %v285
    %v384 = vpack.c.b16 %v288, %v286
    %v385 = vpack.c.b16 %v291, %v289
    %v386 = vpack.c.b16 %v292, %v290
    %v387 = vpack.c.b16 %v295, %v293
    %v388 = vpack.c.b16 %v296, %v294
    %v389 = vpack.c.b16 %v299, %v297
    %v390 = vpack.c.b16 %v300, %v298
    %v391 = vpack.c.b16 %v303, %v301
    %v392 = vpack.c.b16 %v304, %v302
    %v393 = vpack.c.b16 %v307, %v305
    %v394 = vpack.c.b16 %v308, %v306
    %v395 = vpack.c.b16 %v311, %v309
    %v396 = vpack.c.b16 %v312, %v310
    %v397 = vpack.c.b16 %v315, %v313
    %v398 = vpack.c.b16 %v316, %v314
    %v399 = vpack.c.b16 %v319, %v317
    %v400 = vpack.c.b16 %v320, %v318
    %v401 = vpack.c.b16 %v323, %v321
    %v402 = vpack.c.b16 %v324, %v322
    %v403 = vpack.c.b16 %v327, %v325
    %v404 = vpack.c.b16 %v328, %v326
    %v405 = vpack.c.b16 %v331, %v329
    %v406 = vpack.c.b16 %v332, %v330
    %v407 = vpack.c.b16 %v335, %v333
    %v408 = vpack.c.b16 %v336, %v334
    %v409 = vpack.c.b16 %v339, %v337
    %v410 = vpack.c.b16 %v340, %v338
    %v411 = vpack.c.b16 %v343, %v341
    %v412 = vpack.c.b16 %v344, %v342
    %v413 = vpack.c.b16 %v347, %v345
    %v414 = vpack.c.b16 %v348, %v346
    %v415 = vpack.c.b16 %v351, %v349
    %v416 = vpack.c.b16 %v352, %v350
    %481 = vmatprep.subr.bf16.mxu0 %v354
    %482 = vmatpush1.bf16.msra.mxu0 %v353
    %483 = vmatprep.subr.bf16.mxu0 %v356
    %484 = vmatpush1.bf16.msra.mxu0 %v355
    %485 = vmatprep.subr.bf16.mxu0 %v358
    %486 = vmatpush1.bf16.msra.mxu0 %v357
    %487 = vmatprep.subr.bf16.mxu0 %v360
    %488 = vmatpush1.bf16.msra.mxu0 %v359
    %489 = vmatprep.subr.bf16.mxu0 %v362
    %490 = vmatpush1.bf16.msra.mxu0 %v361
    %491 = vmatprep.subr.bf16.mxu0 %v364
    %492 = vmatpush1.bf16.msra.mxu0 %v363
    %493 = vmatprep.subr.bf16.mxu0 %v366
    %494 = vmatpush1.bf16.msra.mxu0 %v365
    %495 = vmatprep.subr.bf16.mxu0 %v368
    %496 = vmatpush1.bf16.msra.mxu0 %v367
    %497 = vmatprep.subr.bf16.mxu0 %v370
    %498 = vmatpush1.bf16.msra.mxu0 %v369
    %499 = vmatprep.subr.bf16.mxu0 %v372
    %500 = vmatpush1.bf16.msra.mxu0 %v371
    %501 = vmatprep.subr.bf16.mxu0 %v374
    %502 = vmatpush1.bf16.msra.mxu0 %v373
    %503 = vmatprep.subr.bf16.mxu0 %v376
    %504 = vmatpush1.bf16.msra.mxu0 %v375
    %505 = vmatprep.subr.bf16.mxu0 %v378
    %506 = vmatpush1.bf16.msra.mxu0 %v377
    %507 = vmatprep.subr.bf16.mxu0 %v380
    %508 = vmatpush1.bf16.msra.mxu0 %v379
    %509 = vmatprep.subr.bf16.mxu0 %v382
    %510 = vmatpush1.bf16.msra.mxu0 %v381
    %511 = vmatprep.subr.bf16.mxu0 %v384
    %512 = vmatpush1.bf16.msra.mxu0 %v383
    %513 = vmatprep.mubr.bf16.mxu0 %v154
    %514 = vmatmul.mubr.bf16.gmra.mrb[0].mxu0 %v147
    %v515 = vpop.f32.mrb[0].mxu0
    %v516 = vadd.f32 %v127, %v515
    %v517 = vpop.f32.mrb[0].mxu0
    %v518 = vadd.f32 %v131, %v517
    %v519 = vpop.f32.mrb[0].mxu0
    %v520 = vpop.f32.mrb[0].mxu0
    %521 = vdwg.mxu0
    %522 = vmatprep.subr.bf16.mxu0 %v386
    %523 = vmatpush1.bf16.msra.mxu0 %v385
    %524 = vmatprep.subr.bf16.mxu0 %v388
    %525 = vmatpush1.bf16.msra.mxu0 %v387
    %526 = vmatprep.subr.bf16.mxu0 %v390
    %527 = vmatpush1.bf16.msra.mxu0 %v389
    %528 = vmatprep.subr.bf16.mxu0 %v392
    %529 = vmatpush1.bf16.msra.mxu0 %v391
    %530 = vmatprep.subr.bf16.mxu0 %v394
    %531 = vmatpush1.bf16.msra.mxu0 %v393
    %532 = vmatprep.subr.bf16.mxu0 %v396
    %533 = vmatpush1.bf16.msra.mxu0 %v395
    %534 = vmatprep.subr.bf16.mxu0 %v398
    %535 = vmatpush1.bf16.msra.mxu0 %v397
    %536 = vmatprep.subr.bf16.mxu0 %v400
    %537 = vmatpush1.bf16.msra.mxu0 %v399
    %538 = vmatprep.subr.bf16.mxu0 %v402
    %539 = vmatpush1.bf16.msra.mxu0 %v401
    %540 = vmatprep.subr.bf16.mxu0 %v404
    %541 = vmatpush1.bf16.msra.mxu0 %v403
    %542 = vmatprep.subr.bf16.mxu0 %v406
    %543 = vmatpush1.bf16.msra.mxu0 %v405
    %544 = vmatprep.subr.bf16.mxu0 %v408
    %545 = vmatpush1.bf16.msra.mxu0 %v407
    %546 = vmatprep.subr.bf16.mxu0 %v410
    %547 = vmatpush1.bf16.msra.mxu0 %v409
    %548 = vmatprep.subr.bf16.mxu0 %v412
    %549 = vmatpush1.bf16.msra.mxu0 %v411
    %550 = vmatprep.subr.bf16.mxu0 %v414
    %551 = vmatpush1.bf16.msra.mxu0 %v413
    %552 = vmatprep.subr.bf16.mxu0 %v416
    %553 = vmatpush1.bf16.msra.mxu0 %v415
    %554 = vmatprep.mubr.bf16.mxu0 %v156
    %555 = vmatmul.mubr.bf16.gmra.mrb[0].mxu0 %v155
    %v556 = vpop.f32.mrb[0].mxu0
    %v557 = vadd.f32 %v516, %v556
    %v558 = vpop.f32.mrb[0].mxu0
    %v559 = vadd.f32 %v518, %v558
    %v560 = vpop.f32.mrb[0].mxu0
    %v561 = vpop.f32.mrb[0].mxu0
    %562 = vdwg.mxu0
    %v563 = vmax.f32 %v557, 0.0
    %v564 = vmax.f32 %v559, 0.0
    %v565 = vpack.c.bf16 %v563, %v563
    %v566 = vpack.c.bf16 %v564, %v564
    %v567 = vld [vmem:[%s3] sm:$0xff]
    %v568 = vld [vmem:[%s3 + $0x8] sm:$0xff]
    %v569 = vld [vmem:[%s3 + $0x10] sm:$0xff]
    %v570 = vld [vmem:[%s3 + $0x18] sm:$0xff]
    %v571 = vld [vmem:[%s3 + $0x20] sm:$0xff]
    %v572 = vld [vmem:[%s3 + $0x28] sm:$0xff]
    %v573 = vld [vmem:[%s3 + $0x30] sm:$0xff]
    %v574 = vld [vmem:[%s3 + $0x38] sm:$0xff]
    %v575 = vld [vmem:[%s3 + $0x40] sm:$0xff]
    %v576 = vld [vmem:[%s3 + $0x48] sm:$0xff]
    %v577 = vld [vmem:[%s3 + $0x50] sm:$0xff]
    %v578 = vld [vmem:[%s3 + $0x58] sm:$0xff]
    %v579 = vld [vmem:[%s3 + $0x60] sm:$0xff]
    %v580 = vld [vmem:[%s3 + $0x68] sm:$0xff]
    %v581 = vld [vmem:[%s3 + $0x70] sm:$0xff]
    %v582 = vld [vmem:[%s3 + $0x78] sm:$0xff]
    %v583 = vld [vmem:[%s3 + $0x80] sm:$0xff]
    %v584 = vld [vmem:[%s3 + $0x88] sm:$0xff]
    %v585 = vld [vmem:[%s3 + $0x90] sm:$0xff]
    %v586 = vld [vmem:[%s3 + $0x98] sm:$0xff]
    %v587 = vld [vmem:[%s3 + $0xa0] sm:$0xff]
    %v588 = vld [vmem:[%s3 + $0xa8] sm:$0xff]
    %v589 = vld [vmem:[%s3 + $0xb0] sm:$0xff]
    %v590 = vld [vmem:[%s3 + $0xb8] sm:$0xff]
    %v591 = vld [vmem:[%s3 + $0xc0] sm:$0xff]
    %v592 = vld [vmem:[%s3 + $0xc8] sm:$0xff]
    %v593 = vld [vmem:[%s3 + $0xd0] sm:$0xff]
    %v594 = vld [vmem:[%s3 + $0xd8] sm:$0xff]
    %v595 = vld [vmem:[%s3 + $0xe0] sm:$0xff]
    %v596 = vld [vmem:[%s3 + $0xe8] sm:$0xff]
    %v597 = vld [vmem:[%s3 + $0xf0] sm:$0xff]
    %v598 = vld [vmem:[%s3 + $0xf8] sm:$0xff]
    %v599 = vld [vmem:[%s4] sm:$0x3]
    %v600 = vunpack.c.l.bf16 %v599
    %v602 = vlaneseq
    %v603 = vshrl.u32 %v602, 7
    %v604 = vsub.s32 0, %v603
    %v605 = vrot.slane %v600, %v604
    %v606 = vlaneseq
    %v607 = vshrl.u32 %v606, 7
    %v608 = vsub.s32 2, %v607
    %v609 = vrot.slane %v600, %v608
    %v612 = vlaneseq
    %v613 = vshrl.u32 %v612, 7
    %v614 = vsub.s32 0, %v613
    %v615 = vrot.slane %v605, %v614
    %v616 = vlaneseq
    %v617 = vshrl.u32 %v616, 7
    %v618 = vsub.s32 0, %v617
    %v619 = vrot.slane %v609, %v618
    %v652 = vunpack.c.l.b16 %v567
    %v653 = vunpack.c.h.b16 %v567
    %v654 = vunpack.c.l.b16 %v568
    %v655 = vunpack.c.h.b16 %v568
    %v656 = vunpack.c.l.b16 %v569
    %v657 = vunpack.c.h.b16 %v569
    %v658 = vunpack.c.l.b16 %v570
    %v659 = vunpack.c.h.b16 %v570
    %v660 = vunpack.c.l.b16 %v571
    %v661 = vunpack.c.h.b16 %v571
    %v662 = vunpack.c.l.b16 %v572
    %v663 = vunpack.c.h.b16 %v572
    %v664 = vunpack.c.l.b16 %v573
    %v665 = vunpack.c.h.b16 %v573
    %v666 = vunpack.c.l.b16 %v574
    %v667 = vunpack.c.h.b16 %v574
    %v668 = vunpack.c.l.b16 %v575
    %v669 = vunpack.c.h.b16 %v575
    %v670 = vunpack.c.l.b16 %v576
    %v671 = vunpack.c.h.b16 %v576
    %v672 = vunpack.c.l.b16 %v577
    %v673 = vunpack.c.h.b16 %v577
    %v674 = vunpack.c.l.b16 %v578
    %v675 = vunpack.c.h.b16 %v578
    %v676 = vunpack.c.l.b16 %v579
    %v677 = vunpack.c.h.b16 %v579
    %v678 = vunpack.c.l.b16 %v580
    %v679 = vunpack.c.h.b16 %v580
    %v680 = vunpack.c.l.b16 %v581
    %v681 = vunpack.c.h.b16 %v581
    %v682 = vunpack.c.l.b16 %v582
    %v683 = vunpack.c.h.b16 %v582
    %v684 = vunpack.c.l.b16 %v583
    %v685 = vunpack.c.h.b16 %v583
    %v686 = vunpack.c.l.b16 %v584
    %v687 = vunpack.c.h.b16 %v584
    %v688 = vunpack.c.l.b16 %v585
    %v689 = vunpack.c.h.b16 %v585
    %v690 = vunpack.c.l.b16 %v586
    %v691 = vunpack.c.h.b16 %v586
    %v692 = vunpack.c.l.b16 %v587
    %v693 = vunpack.c.h.b16 %v587
    %v694 = vunpack.c.l.b16 %v588
    %v695 = vunpack.c.h.b16 %v588
    %v696 = vunpack.c.l.b16 %v589
    %v697 = vunpack.c.h.b16 %v589
    %v698 = vunpack.c.l.b16 %v590
    %v699 = vunpack.c.h.b16 %v590
    %v700 = vunpack.c.l.b16 %v591
    %v701 = vunpack.c.h.b16 %v591
    %v702 = vunpack.c.l.b16 %v592
    %v703 = vunpack.c.h.b16 %v592
    %v704 = vunpack.c.l.b16 %v593
    %v705 = vunpack.c.h.b16 %v593
    %v706 = vunpack.c.l.b16 %v594
    %v707 = vunpack.c.h.b16 %v594
    %v708 = vunpack.c.l.b16 %v595
    %v709 = vunpack.c.h.b16 %v595
    %v710 = vunpack.c.l.b16 %v596
    %v711 = vunpack.c.h.b16 %v596
    %v712 = vunpack.c.l.b16 %v597
    %v713 = vunpack.c.h.b16 %v597
    %v714 = vunpack.c.l.b16 %v598
    %v715 = vunpack.c.h.b16 %v598
    %v716 = vpack.c.b16 %v654, %v652
    %v717 = vpack.c.b16 %v655, %v653
    %v718 = vpack.c.b16 %v658, %v656
    %v719 = vpack.c.b16 %v659, %v657
    %v720 = vpack.c.b16 %v662, %v660
    %v721 = vpack.c.b16 %v663, %v661
    %v722 = vpack.c.b16 %v666, %v664
    %v723 = vpack.c.b16 %v667, %v665
    %v724 = vpack.c.b16 %v670, %v668
    %v725 = vpack.c.b16 %v671, %v669
    %v726 = vpack.c.b16 %v674, %v672
    %v727 = vpack.c.b16 %v675, %v673
    %v728 = vpack.c.b16 %v678, %v676
    %v729 = vpack.c.b16 %v679, %v677
    %v730 = vpack.c.b16 %v682, %v680
    %v731 = vpack.c.b16 %v683, %v681
    %v732 = vpack.c.b16 %v686, %v684
    %v733 = vpack.c.b16 %v687, %v685
    %v734 = vpack.c.b16 %v690, %v688
    %v735 = vpack.c.b16 %v691, %v689
    %v736 = vpack.c.b16 %v694, %v692
    %v737 = vpack.c.b16 %v695, %v693
    %v738 = vpack.c.b16 %v698, %v696
    %v739 = vpack.c.b16 %v699, %v697
    %v740 = vpack.c.b16 %v702, %v700
    %v741 = vpack.c.b16 %v703, %v701
    %v742 = vpack.c.b16 %v706, %v704
    %v743 = vpack.c.b16 %v707, %v705
    %v744 = vpack.c.b16 %v710, %v708
    %v745 = vpack.c.b16 %v711, %v709
    %v746 = vpack.c.b16 %v714, %v712
    %v747 = vpack.c.b16 %v715, %v713
    %780 = vmatprep.subr.bf16.mxu0 %v717
    %781 = vmatpush1.bf16.msra.mxu0 %v716
    %782 = vmatprep.subr.bf16.mxu0 %v719
    %783 = vmatpush1.bf16.msra.mxu0 %v718
    %784 = vmatprep.subr.bf16.mxu0 %v721
    %785 = vmatpush1.bf16.msra.mxu0 %v720
    %786 = vmatprep.subr.bf16.mxu0 %v723
    %787 = vmatpush1.bf16.msra.mxu0 %v722
    %788 = vmatprep.subr.bf16.mxu0 %v725
    %789 = vmatpush1.bf16.msra.mxu0 %v724
    %790 = vmatprep.subr.bf16.mxu0 %v727
    %791 = vmatpush1.bf16.msra.mxu0 %v726
    %792 = vmatprep.subr.bf16.mxu0 %v729
    %793 = vmatpush1.bf16.msra.mxu0 %v728
    %794 = vmatprep.subr.bf16.mxu0 %v731
    %795 = vmatpush1.bf16.msra.mxu0 %v730
    %796 = vmatprep.subr.bf16.mxu0 %v733
    %797 = vmatpush1.bf16.msra.mxu0 %v732
    %798 = vmatprep.subr.bf16.mxu0 %v735
    %799 = vmatpush1.bf16.msra.mxu0 %v734
    %800 = vmatprep.subr.bf16.mxu0 %v737
    %801 = vmatpush1.bf16.msra.mxu0 %v736
    %802 = vmatprep.subr.bf16.mxu0 %v739
    %803 = vmatpush1.bf16.msra.mxu0 %v738
    %804 = vmatprep.subr.bf16.mxu0 %v741
    %805 = vmatpush1.bf16.msra.mxu0 %v740
    %806 = vmatprep.subr.bf16.mxu0 %v743
    %807 = vmatpush1.bf16.msra.mxu0 %v742
    %808 = vmatprep.subr.bf16.mxu0 %v745
    %809 = vmatpush1.bf16.msra.mxu0 %v744
    %810 = vmatprep.subr.bf16.mxu0 %v747
    %811 = vmatpush1.bf16.msra.mxu0 %v746
    %812 = vmatprep.mubr.bf16.mxu0 %v566
    %813 = vmatmul.mubr.bf16.gmra.mrb[0].mxu0 %v565
    %v814 = vpop.f32.mrb[0].mxu0
    %v815 = vadd.f32 %v615, %v814
    %v816 = vpop.f32.mrb[0].mxu0
    %v817 = vadd.f32 %v619, %v816
    %v818 = vpop.f32.mrb[0].mxu0
    %v819 = vpop.f32.mrb[0].mxu0
    %820 = vdwg.mxu0
    %v821 = vmax.f32 %v815, 0.0
    %v822 = vmax.f32 %v817, 0.0
    %v823 = vpack.c.bf16 %v821, %v821
    %v824 = vpack.c.bf16 %v822, %v822
    %v827 = vcombine.low %v823, %v824
    %v829 = vunpack.c.l.s4 1966171168
    %v830 = vunpack.c.0.s8 %v829
    %v831 = vlaneseq
    %v832 = vshrl.u32 %v831, 7
    %v833 = vsub.s32 %v830, %v832
    %v834 = vrot.slane %v827, %v833
    %v836 = vunpack.c.l.s4 1966171168
    %v837 = vunpack.c.0.s8 %v836
    %v838 = vlaneseq
    %v839 = vshrl.u32 %v838, 7
    %v840 = vsub.s32 %v837, %v839
    %v841 = vrot.slane %v834, %v840
    %843 = vst [vmem:[%s5] sm:$0x3] %v841
    // Predicated region
    $region30: #{tablenet_forward.13} parent=1 // pred_check
      _
    $region31: #{tablenet_forward.13} parent=1 // pred_check_branch
      %845 = sbr.rel (0) target = $region33
    $region32: #{tablenet_forward.13} parent=1 // pred_region
      _
    $region33: #{tablenet_forward.13} parent=1 // pred_fallthru
      _
    // Predicated region
    $region34: #{tablenet_forward.13} parent=1 // pred_check
      _
    $region35: #{tablenet_forward.13} parent=1 // pred_check_branch
      %847 = sbr.rel (0) target = $region37
    $region36: #{tablenet_forward.13} parent=1 // pred_region
      _
    $region37: #{tablenet_forward.13} parent=1 // pred_fallthru
      _
    %848 = vsyncpa [#allocation3], 1
    %849 = vsyncpa [#allocation5], 1

// kernel: tablenet_forward.14
$region0: #{tablenet_forward.14}
  #allocation0 [shape = 'u32[]', space=smem, size = 0x4, offset = 0x4, fixed_abs, tag = 'smem constant byte address 0x4 - core index']
  #allocation1 [shape = 'u32[144,128]{1,0:T(1,128)}', space=vmem, size = 0x12000, scoped, tag = 'internal scratch']
  %s0 = inlined_call_operand.vmem [shape: bf16[2,256], index: 0, kind: input, shape index: {}]
  %s1 = inlined_call_operand.vmem [shape: bf16[256,256], index: 1, kind: input, shape index: {}]
  %s2 = inlined_call_operand.vmem [shape: bf16[1,256], index: 2, kind: input, shape index: {}]
  %s3 = inlined_call_operand.vmem [shape: bf16[256,512], index: 3, kind: input, shape index: {}]
  %s4 = inlined_call_operand.vmem [shape: bf16[1,512], index: 4, kind: input, shape index: {}]
  %s5 = inlined_call_operand.vmem [shape: bf16[2,512], index: 5, kind: output, shape index: {}]
  %s6 = sld [smem:[#allocation0]]
  $region30: #{tablenet_forward.14} parent=0
    _
  %s8 = ssub.s32 1, %s6
  %s9 = scalar_select 0, %s8, %s6
  // Predicated region
  $region2: #{tablenet_forward.14} parent=0 // pred_check
    _
  $region3: #{tablenet_forward.14} parent=0 // pred_check_branch
    %11 = sbr.rel (0) target = $region5
  $region4: #{tablenet_forward.14} parent=0 // pred_region
    _
  $region5: #{tablenet_forward.14} parent=0 // pred_fallthru
    _
  // Predicated region
  $region6: #{tablenet_forward.14} parent=0 // pred_check
    _
  $region7: #{tablenet_forward.14} parent=0 // pred_check_branch
    %13 = sbr.rel (0) target = $region9
  $region8: #{tablenet_forward.14} parent=0 // pred_region
    _
  $region9: #{tablenet_forward.14} parent=0 // pred_fallthru
    _
  // Predicated region
  $region10: #{tablenet_forward.14} parent=0 // pred_check
    _
  $region11: #{tablenet_forward.14} parent=0 // pred_check_branch
    %15 = sbr.rel (0) target = $region13
  $region12: #{tablenet_forward.14} parent=0 // pred_region
    _
  $region13: #{tablenet_forward.14} parent=0 // pred_fallthru
    _
  // Predicated region
  $region14: #{tablenet_forward.14} parent=0 // pred_check
    _
  $region15: #{tablenet_forward.14} parent=0 // pred_check_branch
    %17 = sbr.rel (0) target = $region17
  $region16: #{tablenet_forward.14} parent=0 // pred_region
    _
  $region17: #{tablenet_forward.14} parent=0 // pred_fallthru
    _
  // Predicated region
  $region18: #{tablenet_forward.14} parent=0 // pred_check
    _
  $region19: #{tablenet_forward.14} parent=0 // pred_check_branch
    %19 = sbr.rel (0) target = $region21
  $region20: #{tablenet_forward.14} parent=0 // pred_region
    _
  $region21: #{tablenet_forward.14} parent=0 // pred_fallthru
    _
  %v20 = vld [vmem:[%s0] sm:$0x3]
  %v21 = vld [vmem:[%s1] sm:$0xff]
  %v22 = vld [vmem:[%s1 + $0x8] sm:$0xff]
  %v23 = vld [vmem:[%s1 + $0x10] sm:$0xff]
  %v24 = vld [vmem:[%s1 + $0x18] sm:$0xff]
  %v25 = vld [vmem:[%s1 + $0x20] sm:$0xff]
  %v26 = vld [vmem:[%s1 + $0x28] sm:$0xff]
  %v27 = vld [vmem:[%s1 + $0x30] sm:$0xff]
  %v28 = vld [vmem:[%s1 + $0x38] sm:$0xff]
  %v29 = vld [vmem:[%s1 + $0x40] sm:$0xff]
  %v30 = vld [vmem:[%s1 + $0x48] sm:$0xff]
  %v31 = vld [vmem:[%s1 + $0x50] sm:$0xff]
  %v32 = vld [vmem:[%s1 + $0x58] sm:$0xff]
  %v33 = vld [vmem:[%s1 + $0x60] sm:$0xff]
  %v34 = vld [vmem:[%s1 + $0x68] sm:$0xff]
  %v35 = vld [vmem:[%s1 + $0x70] sm:$0xff]
  %v36 = vld [vmem:[%s1 + $0x78] sm:$0xff]
  %v37 = vld [vmem:[%s1 + $0x80] sm:$0xff]
  %v38 = vld [vmem:[%s1 + $0x88] sm:$0xff]
  %v39 = vld [vmem:[%s1 + $0x90] sm:$0xff]
  %v40 = vld [vmem:[%s1 + $0x98] sm:$0xff]
  %v41 = vld [vmem:[%s1 + $0xa0] sm:$0xff]
  %v42 = vld [vmem:[%s1 + $0xa8] sm:$0xff]
  %v43 = vld [vmem:[%s1 + $0xb0] sm:$0xff]
  %v44 = vld [vmem:[%s1 + $0xb8] sm:$0xff]
  %v45 = vld [vmem:[%s1 + $0xc0] sm:$0xff]
  %v46 = vld [vmem:[%s1 + $0xc8] sm:$0xff]
  %v47 = vld [vmem:[%s1 + $0xd0] sm:$0xff]
  %v48 = vld [vmem:[%s1 + $0xd8] sm:$0xff]
  %v49 = vld [vmem:[%s1 + $0xe0] sm:$0xff]
  %v50 = vld [vmem:[%s1 + $0xe8] sm:$0xff]
  %v51 = vld [vmem:[%s1 + $0xf0] sm:$0xff]
  %v52 = vld [vmem:[%s1 + $0xf8] sm:$0xff]
  %v53 = vld [vmem:[%s2] sm:$0x3]
  %v54 = vunpack.c.l.bf16 %v53
  %v56 = vlaneseq
  %v57 = vshrl.u32 %v56, 7
  %v58 = vsub.s32 0, %v57
  %v59 = vrot.slane %v54, %v58
  %v60 = vlaneseq
  %v61 = vshrl.u32 %v60, 7
  %v62 = vsub.s32 2, %v61
  %v63 = vrot.slane %v54, %v62
  %v66 = vlaneseq
  %v67 = vshrl.u32 %v66, 7
  %v68 = vsub.s32 0, %v67
  %v69 = vrot.slane %v59, %v68
  %v70 = vlaneseq
  %v71 = vshrl.u32 %v70, 7
  %v72 = vsub.s32 0, %v71
  %v73 = vrot.slane %v63, %v72
  %v76 = vunpack.c.l.s4 1966171168
  %v77 = vunpack.c.0.s8 %v76
  %v78 = vlaneseq
  %v79 = vshrl.u32 %v78, 7
  %v80 = vsub.s32 %v77, %v79
  %v81 = vrot.slane %v20, %v80
  %v82 = vcombine.high %v81, %v81
  %v84 = vunpack.c.l.s4 1966171168
  %v85 = vunpack.c.0.s8 %v84
  %v86 = vlaneseq
  %v87 = vshrl.u32 %v86, 7
  %v88 = vsub.s32 %v85, %v87
  %v89 = vrot.slane %v81, %v88
  %v91 = vunpack.c.l.s4 1966171168
  %v92 = vunpack.c.0.s8 %v91
  %v93 = vlaneseq
  %v94 = vshrl.u32 %v93, 7
  %v95 = vsub.s32 %v92, %v94
  %v96 = vrot.slane %v82, %v95
  %v131 = vunpack.c.l.b16 %v21
  %v132 = vunpack.c.h.b16 %v21
  %v133 = vunpack.c.l.b16 %v22
  %v134 = vunpack.c.h.b16 %v22
  %v135 = vunpack.c.l.b16 %v23
  %v136 = vunpack.c.h.b16 %v23
  %v137 = vunpack.c.l.b16 %v24
  %v138 = vunpack.c.h.b16 %v24
  %v139 = vunpack.c.l.b16 %v25
  %v140 = vunpack.c.h.b16 %v25
  %v141 = vunpack.c.l.b16 %v26
  %v142 = vunpack.c.h.b16 %v26
  %v143 = vunpack.c.l.b16 %v27
  %v144 = vunpack.c.h.b16 %v27
  %v145 = vunpack.c.l.b16 %v28
  %v146 = vunpack.c.h.b16 %v28
  %v147 = vunpack.c.l.b16 %v29
  %v148 = vunpack.c.h.b16 %v29
  %v149 = vunpack.c.l.b16 %v30
  %v150 = vunpack.c.h.b16 %v30
  %v151 = vunpack.c.l.b16 %v31
  %v152 = vunpack.c.h.b16 %v31
  %v153 = vunpack.c.l.b16 %v32
  %v154 = vunpack.c.h.b16 %v32
  %v155 = vunpack.c.l.b16 %v33
  %v156 = vunpack.c.h.b16 %v33
  %v157 = vunpack.c.l.b16 %v34
  %v158 = vunpack.c.h.b16 %v34
  %v159 = vunpack.c.l.b16 %v35
  %v160 = vunpack.c.h.b16 %v35
  %v161 = vunpack.c.l.b16 %v36
  %v162 = vunpack.c.h.b16 %v36
  %v163 = vunpack.c.l.b16 %v37
  %v164 = vunpack.c.h.b16 %v37
  %v165 = vunpack.c.l.b16 %v38
  %v166 = vunpack.c.h.b16 %v38
  %v167 = vunpack.c.l.b16 %v39
  %v168 = vunpack.c.h.b16 %v39
  %v169 = vunpack.c.l.b16 %v40
  %v170 = vunpack.c.h.b16 %v40
  %v171 = vunpack.c.l.b16 %v41
  %v172 = vunpack.c.h.b16 %v41
  %v173 = vunpack.c.l.b16 %v42
  %v174 = vunpack.c.h.b16 %v42
  %v175 = vunpack.c.l.b16 %v43
  %v176 = vunpack.c.h.b16 %v43
  %v177 = vunpack.c.l.b16 %v44
  %v178 = vunpack.c.h.b16 %v44
  %v179 = vunpack.c.l.b16 %v45
  %v180 = vunpack.c.h.b16 %v45
  %v181 = vunpack.c.l.b16 %v46
  %v182 = vunpack.c.h.b16 %v46
  %v183 = vunpack.c.l.b16 %v47
  %v184 = vunpack.c.h.b16 %v47
  %v185 = vunpack.c.l.b16 %v48
  %v186 = vunpack.c.h.b16 %v48
  %v187 = vunpack.c.l.b16 %v49
  %v188 = vunpack.c.h.b16 %v49
  %v189 = vunpack.c.l.b16 %v50
  %v190 = vunpack.c.h.b16 %v50
  %v191 = vunpack.c.l.b16 %v51
  %v192 = vunpack.c.h.b16 %v51
  %v193 = vunpack.c.l.b16 %v52
  %v194 = vunpack.c.h.b16 %v52
  %v195 = vpack.c.b16 %v133, %v131
  %v196 = vpack.c.b16 %v134, %v132
  %v197 = vpack.c.b16 %v137, %v135
  %v198 = vpack.c.b16 %v138, %v136
  %v199 = vpack.c.b16 %v141, %v139
  %v200 = vpack.c.b16 %v142, %v140
  %v201 = vpack.c.b16 %v145, %v143
  %v202 = vpack.c.b16 %v146, %v144
  %v203 = vpack.c.b16 %v149, %v147
  %v204 = vpack.c.b16 %v150, %v148
  %v205 = vpack.c.b16 %v153, %v151
  %v206 = vpack.c.b16 %v154, %v152
  %v207 = vpack.c.b16 %v157, %v155
  %v208 = vpack.c.b16 %v158, %v156
  %v209 = vpack.c.b16 %v161, %v159
  %v210 = vpack.c.b16 %v162, %v160
  %v211 = vpack.c.b16 %v165, %v163
  %v212 = vpack.c.b16 %v166, %v164
  %v213 = vpack.c.b16 %v169, %v167
  %v214 = vpack.c.b16 %v170, %v168
  %v215 = vpack.c.b16 %v173, %v171
  %v216 = vpack.c.b16 %v174, %v172
  %v217 = vpack.c.b16 %v177, %v175
  %v218 = vpack.c.b16 %v178, %v176
  %v219 = vpack.c.b16 %v181, %v179
  %v220 = vpack.c.b16 %v182, %v180
  %v221 = vpack.c.b16 %v185, %v183
  %v222 = vpack.c.b16 %v186, %v184
  %v223 = vpack.c.b16 %v189, %v187
  %v224 = vpack.c.b16 %v190, %v188
  %v225 = vpack.c.b16 %v193, %v191
  %v226 = vpack.c.b16 %v194, %v192
  %259 = vmatprep.subr.bf16.mxu0 %v196
  %260 = vmatpush1.bf16.msra.mxu0 %v195
  %261 = vmatprep.subr.bf16.mxu0 %v198
  %262 = vmatpush1.bf16.msra.mxu0 %v197
  %263 = vmatprep.subr.bf16.mxu0 %v200
  %264 = vmatpush1.bf16.msra.mxu0 %v199
  %265 = vmatprep.subr.bf16.mxu0 %v202
  %266 = vmatpush1.bf16.msra.mxu0 %v201
  %267 = vmatprep.subr.bf16.mxu0 %v204
  %268 = vmatpush1.bf16.msra.mxu0 %v203
  %269 = vmatprep.subr.bf16.mxu0 %v206
  %270 = vmatpush1.bf16.msra.mxu0 %v205
  %271 = vmatprep.subr.bf16.mxu0 %v208
  %272 = vmatpush1.bf16.msra.mxu0 %v207
  %273 = vmatprep.subr.bf16.mxu0 %v210
  %274 = vmatpush1.bf16.msra.mxu0 %v209
  %275 = vmatprep.subr.bf16.mxu0 %v212
  %276 = vmatpush1.bf16.msra.mxu0 %v211
  %277 = vmatprep.subr.bf16.mxu0 %v214
  %278 = vmatpush1.bf16.msra.mxu0 %v213
  %279 = vmatprep.subr.bf16.mxu0 %v216
  %280 = vmatpush1.bf16.msra.mxu0 %v215
  %281 = vmatprep.subr.bf16.mxu0 %v218
  %282 = vmatpush1.bf16.msra.mxu0 %v217
  %283 = vmatprep.subr.bf16.mxu0 %v220
  %284 = vmatpush1.bf16.msra.mxu0 %v219
  %285 = vmatprep.subr.bf16.mxu0 %v222
  %286 = vmatpush1.bf16.msra.mxu0 %v221
  %287 = vmatprep.subr.bf16.mxu0 %v224
  %288 = vmatpush1.bf16.msra.mxu0 %v223
  %289 = vmatprep.subr.bf16.mxu0 %v226
  %290 = vmatpush1.bf16.msra.mxu0 %v225
  %291 = vmatprep.mubr.bf16.mxu0 %v96
  %292 = vmatmul.mubr.bf16.gmra.mrb[0].mxu0 %v89
  %v293 = vpop.f32.mrb[0].mxu0
  %v294 = vadd.f32 %v69, %v293
  %v295 = vpop.f32.mrb[0].mxu0
  %v296 = vadd.f32 %v73, %v295
  %v297 = vpop.f32.mrb[0].mxu0
  %v298 = vpop.f32.mrb[0].mxu0
  %299 = vdwg.mxu0
  %v300 = vpack.c.bf16 %v294, %v294
  %v301 = vpack.c.bf16 %v296, %v296
  %v302 = vld [vmem:[%s3] sm:$0xff]
  %v303 = vld [vmem:[%s3 + $0x8] sm:$0xff]
  %v304 = vld [vmem:[%s3 + $0x10] sm:$0xff]
  %v305 = vld [vmem:[%s3 + $0x18] sm:$0xff]
  %v306 = vld [vmem:[%s3 + $0x20] sm:$0xff]
  %v307 = vld [vmem:[%s3 + $0x28] sm:$0xff]
  %v308 = vld [vmem:[%s3 + $0x30] sm:$0xff]
  %v309 = vld [vmem:[%s3 + $0x38] sm:$0xff]
  %v310 = vld [vmem:[%s3 + $0x40] sm:$0xff]
  %v311 = vld [vmem:[%s3 + $0x48] sm:$0xff]
  %v312 = vld [vmem:[%s3 + $0x50] sm:$0xff]
  %v313 = vld [vmem:[%s3 + $0x58] sm:$0xff]
  %v314 = vld [vmem:[%s3 + $0x60] sm:$0xff]
  %v315 = vld [vmem:[%s3 + $0x68] sm:$0xff]
  %v316 = vld [vmem:[%s3 + $0x70] sm:$0xff]
  %v317 = vld [vmem:[%s3 + $0x78] sm:$0xff]
  %v318 = vld [vmem:[%s3 + $0x80] sm:$0xff]
  %v319 = vld [vmem:[%s3 + $0x88] sm:$0xff]
  %v320 = vld [vmem:[%s3 + $0x90] sm:$0xff]
  %v321 = vld [vmem:[%s3 + $0x98] sm:$0xff]
  %v322 = vld [vmem:[%s3 + $0xa0] sm:$0xff]
  %v323 = vld [vmem:[%s3 + $0xa8] sm:$0xff]
  %v324 = vld [vmem:[%s3 + $0xb0] sm:$0xff]
  %v325 = vld [vmem:[%s3 + $0xb8] sm:$0xff]
  %v326 = vld [vmem:[%s3 + $0xc0] sm:$0xff]
  %v327 = vld [vmem:[%s3 + $0xc8] sm:$0xff]
  %v328 = vld [vmem:[%s3 + $0xd0] sm:$0xff]
  %v329 = vld [vmem:[%s3 + $0xd8] sm:$0xff]
  %v330 = vld [vmem:[%s3 + $0xe0] sm:$0xff]
  %v331 = vld [vmem:[%s3 + $0xe8] sm:$0xff]
  %v332 = vld [vmem:[%s3 + $0xf0] sm:$0xff]
  %v333 = vld [vmem:[%s3 + $0xf8] sm:$0xff]
  %v334 = vld [vmem:[%s3 + $0x100] sm:$0xff]
  %v335 = vld [vmem:[%s3 + $0x108] sm:$0xff]
  %v336 = vld [vmem:[%s3 + $0x110] sm:$0xff]
  %v337 = vld [vmem:[%s3 + $0x118] sm:$0xff]
  %v338 = vld [vmem:[%s3 + $0x120] sm:$0xff]
  %v339 = vld [vmem:[%s3 + $0x128] sm:$0xff]
  %v340 = vld [vmem:[%s3 + $0x130] sm:$0xff]
  %v341 = vld [vmem:[%s3 + $0x138] sm:$0xff]
  %v342 = vld [vmem:[%s3 + $0x140] sm:$0xff]
  %v343 = vld [vmem:[%s3 + $0x148] sm:$0xff]
  %v344 = vld [vmem:[%s3 + $0x150] sm:$0xff]
  %v345 = vld [vmem:[%s3 + $0x158] sm:$0xff]
  %v346 = vld [vmem:[%s3 + $0x160] sm:$0xff]
  %v347 = vld [vmem:[%s3 + $0x168] sm:$0xff]
  %v348 = vld [vmem:[%s3 + $0x170] sm:$0xff]
  %v349 = vld [vmem:[%s3 + $0x178] sm:$0xff]
  %v350 = vld [vmem:[%s3 + $0x180] sm:$0xff]
  %v351 = vld [vmem:[%s3 + $0x188] sm:$0xff]
  %v352 = vld [vmem:[%s3 + $0x190] sm:$0xff]
  %v353 = vld [vmem:[%s3 + $0x198] sm:$0xff]
  %v354 = vld [vmem:[%s3 + $0x1a0] sm:$0xff]
  %v355 = vld [vmem:[%s3 + $0x1a8] sm:$0xff]
  %v356 = vld [vmem:[%s3 + $0x1b0] sm:$0xff]
  %v357 = vld [vmem:[%s3 + $0x1b8] sm:$0xff]
  %v358 = vld [vmem:[%s3 + $0x1c0] sm:$0xff]
  %v359 = vld [vmem:[%s3 + $0x1c8] sm:$0xff]
  %v360 = vld [vmem:[%s3 + $0x1d0] sm:$0xff]
  %v361 = vld [vmem:[%s3 + $0x1d8] sm:$0xff]
  %v362 = vld [vmem:[%s3 + $0x1e0] sm:$0xff]
  %v363 = vld [vmem:[%s3 + $0x1e8] sm:$0xff]
  %v364 = vld [vmem:[%s3 + $0x1f0] sm:$0xff]
  %v365 = vld [vmem:[%s3 + $0x1f8] sm:$0xff]
  %v366 = vld [vmem:[%s4] sm:$0xf]
  %v367 = vunpack.c.l.bf16 %v366
  %v369 = vlaneseq
  %v370 = vshrl.u32 %v369, 7
  %v371 = vsub.s32 0, %v370
  %v372 = vrot.slane %v367, %v371
  %v373 = vlaneseq
  %v374 = vshrl.u32 %v373, 7
  %v375 = vsub.s32 2, %v374
  %v376 = vrot.slane %v367, %v375
  %v377 = vlaneseq
  %v378 = vshrl.u32 %v377, 7
  %v379 = vsub.s32 4, %v378
  %v380 = vrot.slane %v367, %v379
  %v381 = vlaneseq
  %v382 = vshrl.u32 %v381, 7
  %v383 = vsub.s32 6, %v382
  %v384 = vrot.slane %v367, %v383
  %v389 = vlaneseq
  %v390 = vshrl.u32 %v389, 7
  %v391 = vsub.s32 0, %v390
  %v392 = vrot.slane %v372, %v391
  %v393 = vlaneseq
  %v394 = vshrl.u32 %v393, 7
  %v395 = vsub.s32 0, %v394
  %v396 = vrot.slane %v376, %v395
  %v397 = vlaneseq
  %v398 = vshrl.u32 %v397, 7
  %v399 = vsub.s32 0, %v398
  %v400 = vrot.slane %v380, %v399
  %v401 = vlaneseq
  %v402 = vshrl.u32 %v401, 7
  %v403 = vsub.s32 0, %v402
  %v404 = vrot.slane %v384, %v403
  %v469 = vunpack.c.l.b16 %v302
  %v470 = vunpack.c.h.b16 %v302
  %v471 = vunpack.c.l.b16 %v303
  %v472 = vunpack.c.h.b16 %v303
  %v473 = vunpack.c.l.b16 %v304
  %v474 = vunpack.c.h.b16 %v304
  %v475 = vunpack.c.l.b16 %v305
  %v476 = vunpack.c.h.b16 %v305
  %v477 = vunpack.c.l.b16 %v306
  %v478 = vunpack.c.h.b16 %v306
  %v479 = vunpack.c.l.b16 %v307
  %v480 = vunpack.c.h.b16 %v307
  %v481 = vunpack.c.l.b16 %v308
  %v482 = vunpack.c.h.b16 %v308
  %v483 = vunpack.c.l.b16 %v309
  %v484 = vunpack.c.h.b16 %v309
  %v485 = vunpack.c.l.b16 %v310
  %v486 = vunpack.c.h.b16 %v310
  %v487 = vunpack.c.l.b16 %v311
  %v488 = vunpack.c.h.b16 %v311
  %v489 = vunpack.c.l.b16 %v312
  %v490 = vunpack.c.h.b16 %v312
  %v491 = vunpack.c.l.b16 %v313
  %v492 = vunpack.c.h.b16 %v313
  %v493 = vunpack.c.l.b16 %v314
  %v494 = vunpack.c.h.b16 %v314
  %v495 = vunpack.c.l.b16 %v315
  %v496 = vunpack.c.h.b16 %v315
  %v497 = vunpack.c.l.b16 %v316
  %v498 = vunpack.c.h.b16 %v316
  %v499 = vunpack.c.l.b16 %v317
  %v500 = vunpack.c.h.b16 %v317
  %v501 = vunpack.c.l.b16 %v318
  %v502 = vunpack.c.h.b16 %v318
  %v503 = vunpack.c.l.b16 %v319
  %v504 = vunpack.c.h.b16 %v319
  %v505 = vunpack.c.l.b16 %v320
  %v506 = vunpack.c.h.b16 %v320
  %v507 = vunpack.c.l.b16 %v321
  %v508 = vunpack.c.h.b16 %v321
  %v509 = vunpack.c.l.b16 %v322
  %v510 = vunpack.c.h.b16 %v322
  %v511 = vunpack.c.l.b16 %v323
  %v512 = vunpack.c.h.b16 %v323
  %v513 = vunpack.c.l.b16 %v324
  %v514 = vunpack.c.h.b16 %v324
  %v515 = vunpack.c.l.b16 %v325
  %v516 = vunpack.c.h.b16 %v325
  %v517 = vunpack.c.l.b16 %v326
  %v518 = vunpack.c.h.b16 %v326
  %v519 = vunpack.c.l.b16 %v327
  %v520 = vunpack.c.h.b16 %v327
  %v521 = vunpack.c.l.b16 %v328
  %v522 = vunpack.c.h.b16 %v328
  %v523 = vunpack.c.l.b16 %v329
  %v524 = vunpack.c.h.b16 %v329
  %v525 = vunpack.c.l.b16 %v330
  %v526 = vunpack.c.h.b16 %v330
  %v527 = vunpack.c.l.b16 %v331
  %v528 = vunpack.c.h.b16 %v331
  %v529 = vunpack.c.l.b16 %v332
  %v530 = vunpack.c.h.b16 %v332
  %v531 = vunpack.c.l.b16 %v333
  %v532 = vunpack.c.h.b16 %v333
  %v533 = vunpack.c.l.b16 %v334
  %v534 = vunpack.c.h.b16 %v334
  %v535 = vunpack.c.l.b16 %v335
  %v536 = vunpack.c.h.b16 %v335
  %v537 = vunpack.c.l.b16 %v336
  %v538 = vunpack.c.h.b16 %v336
  %v539 = vunpack.c.l.b16 %v337
  %v540 = vunpack.c.h.b16 %v337
  %v541 = vunpack.c.l.b16 %v338
  %v542 = vunpack.c.h.b16 %v338
  %v543 = vunpack.c.l.b16 %v339
  %v544 = vunpack.c.h.b16 %v339
  %v545 = vunpack.c.l.b16 %v340
  %v546 = vunpack.c.h.b16 %v340
  %v547 = vunpack.c.l.b16 %v341
  %v548 = vunpack.c.h.b16 %v341
  %v549 = vunpack.c.l.b16 %v342
  %v550 = vunpack.c.h.b16 %v342
  %v551 = vunpack.c.l.b16 %v343
  %v552 = vunpack.c.h.b16 %v343
  %v553 = vunpack.c.l.b16 %v344
  %v554 = vunpack.c.h.b16 %v344
  %v555 = vunpack.c.l.b16 %v345
  %v556 = vunpack.c.h.b16 %v345
  %v557 = vunpack.c.l.b16 %v346
  %v558 = vunpack.c.h.b16 %v346
  %v559 = vunpack.c.l.b16 %v347
  %v560 = vunpack.c.h.b16 %v347
  %v561 = vunpack.c.l.b16 %v348
  %v562 = vunpack.c.h.b16 %v348
  %v563 = vunpack.c.l.b16 %v349
  %v564 = vunpack.c.h.b16 %v349
  %v565 = vunpack.c.l.b16 %v350
  %v566 = vunpack.c.h.b16 %v350
  %v567 = vunpack.c.l.b16 %v351
  %v568 = vunpack.c.h.b16 %v351
  %v569 = vunpack.c.l.b16 %v352
  %v570 = vunpack.c.h.b16 %v352
  %v571 = vunpack.c.l.b16 %v353
  %v572 = vunpack.c.h.b16 %v353
  %v573 = vunpack.c.l.b16 %v354
  %v574 = vunpack.c.h.b16 %v354
  %v575 = vunpack.c.l.b16 %v355
  %v576 = vunpack.c.h.b16 %v355
  %v577 = vunpack.c.l.b16 %v356
  %v578 = vunpack.c.h.b16 %v356
  %v579 = vunpack.c.l.b16 %v357
  %v580 = vunpack.c.h.b16 %v357
  %v581 = vunpack.c.l.b16 %v358
  %v582 = vunpack.c.h.b16 %v358
  %v583 = vunpack.c.l.b16 %v359
  %v584 = vunpack.c.h.b16 %v359
  %v585 = vunpack.c.l.b16 %v360
  %v586 = vunpack.c.h.b16 %v360
  %v587 = vunpack.c.l.b16 %v361
  %v588 = vunpack.c.h.b16 %v361
  %v589 = vunpack.c.l.b16 %v362
  %v590 = vunpack.c.h.b16 %v362
  %v591 = vunpack.c.l.b16 %v363
  %v592 = vunpack.c.h.b16 %v363
  %v593 = vunpack.c.l.b16 %v364
  %v594 = vunpack.c.h.b16 %v364
  %v595 = vunpack.c.l.b16 %v365
  %v596 = vunpack.c.h.b16 %v365
  %v597 = vpack.c.b16 %v473, %v469
  %v598 = vpack.c.b16 %v474, %v470
  %v599 = vpack.c.b16 %v475, %v471
  %v600 = vpack.c.b16 %v476, %v472
  %v601 = vpack.c.b16 %v481, %v477
  %v602 = vpack.c.b16 %v482, %v478
  %v603 = vpack.c.b16 %v483, %v479
  %v604 = vpack.c.b16 %v484, %v480
  %v605 = vpack.c.b16 %v489, %v485
  %v606 = vpack.c.b16 %v490, %v486
  %v607 = vpack.c.b16 %v491, %v487
  %v608 = vpack.c.b16 %v492, %v488
  %v609 = vpack.c.b16 %v497, %v493
  %v610 = vpack.c.b16 %v498, %v494
  %v611 = vpack.c.b16 %v499, %v495
  %v612 = vpack.c.b16 %v500, %v496
  %v613 = vpack.c.b16 %v505, %v501
  %v614 = vpack.c.b16 %v506, %v502
  %v615 = vpack.c.b16 %v507, %v503
  %v616 = vpack.c.b16 %v508, %v504
  %v617 = vpack.c.b16 %v513, %v509
  %v618 = vpack.c.b16 %v514, %v510
  %v619 = vpack.c.b16 %v515, %v511
  %v620 = vpack.c.b16 %v516, %v512
  %v621 = vpack.c.b16 %v521, %v517
  %v622 = vpack.c.b16 %v522, %v518
  %v623 = vpack.c.b16 %v523, %v519
  %v624 = vpack.c.b16 %v524, %v520
  %v625 = vpack.c.b16 %v529, %v525
  %v626 = vpack.c.b16 %v530, %v526
  %v627 = vpack.c.b16 %v531, %v527
  %v628 = vpack.c.b16 %v532, %v528
  %v629 = vpack.c.b16 %v537, %v533
  %v630 = vpack.c.b16 %v538, %v534
  %v631 = vpack.c.b16 %v539, %v535
  %v632 = vpack.c.b16 %v540, %v536
  %v633 = vpack.c.b16 %v545, %v541
  %v634 = vpack.c.b16 %v546, %v542
  %v635 = vpack.c.b16 %v547, %v543
  %v636 = vpack.c.b16 %v548, %v544
  %v637 = vpack.c.b16 %v553, %v549
  %v638 = vpack.c.b16 %v554, %v550
  %v639 = vpack.c.b16 %v555, %v551
  %v640 = vpack.c.b16 %v556, %v552
  %v641 = vpack.c.b16 %v561, %v557
  %v642 = vpack.c.b16 %v562, %v558
  %v643 = vpack.c.b16 %v563, %v559
  %v644 = vpack.c.b16 %v564, %v560
  %v645 = vpack.c.b16 %v569, %v565
  %v646 = vpack.c.b16 %v570, %v566
  %v647 = vpack.c.b16 %v571, %v567
  %v648 = vpack.c.b16 %v572, %v568
  %v649 = vpack.c.b16 %v577, %v573
  %v650 = vpack.c.b16 %v578, %v574
  %v651 = vpack.c.b16 %v579, %v575
  %v652 = vpack.c.b16 %v580, %v576
  %v653 = vpack.c.b16 %v585, %v581
  %v654 = vpack.c.b16 %v586, %v582
  %v655 = vpack.c.b16 %v587, %v583
  %v656 = vpack.c.b16 %v588, %v584
  %v657 = vpack.c.b16 %v593, %v589
  %v658 = vpack.c.b16 %v594, %v590
  %v659 = vpack.c.b16 %v595, %v591
  %v660 = vpack.c.b16 %v596, %v592
  %725 = vmatprep.subr.bf16.mxu0 %v598
  %726 = vmatpush1.bf16.msra.mxu0 %v597
  %727 = vmatprep.subr.bf16.mxu0 %v602
  %728 = vmatpush1.bf16.msra.mxu0 %v601
  %729 = vmatprep.subr.bf16.mxu0 %v606
  %730 = vmatpush1.bf16.msra.mxu0 %v605
  %731 = vmatprep.subr.bf16.mxu0 %v610
  %732 = vmatpush1.bf16.msra.mxu0 %v609
  %733 = vmatprep.subr.bf16.mxu0 %v614
  %734 = vmatpush1.bf16.msra.mxu0 %v613
  %735 = vmatprep.subr.bf16.mxu0 %v618
  %736 = vmatpush1.bf16.msra.mxu0 %v617
  %737 = vmatprep.subr.bf16.mxu0 %v622
  %738 = vmatpush1.bf16.msra.mxu0 %v621
  %739 = vmatprep.subr.bf16.mxu0 %v626
  %740 = vmatpush1.bf16.msra.mxu0 %v625
  %741 = vmatprep.subr.bf16.mxu0 %v630
  %742 = vmatpush1.bf16.msra.mxu0 %v629
  %743 = vmatprep.subr.bf16.mxu0 %v634
  %744 = vmatpush1.bf16.msra.mxu0 %v633
  %745 = vmatprep.subr.bf16.mxu0 %v638
  %746 = vmatpush1.bf16.msra.mxu0 %v637
  %747 = vmatprep.subr.bf16.mxu0 %v642
  %748 = vmatpush1.bf16.msra.mxu0 %v641
  %749 = vmatprep.subr.bf16.mxu0 %v646
  %750 = vmatpush1.bf16.msra.mxu0 %v645
  %751 = vmatprep.subr.bf16.mxu0 %v650
  %752 = vmatpush1.bf16.msra.mxu0 %v649
  %753 = vmatprep.subr.bf16.mxu0 %v654
  %754 = vmatpush1.bf16.msra.mxu0 %v653
  %755 = vmatprep.subr.bf16.mxu0 %v658
  %756 = vmatpush1.bf16.msra.mxu0 %v657
  %757 = vmatprep.mubr.bf16.mxu0 %v301
  %758 = vmatmul.mubr.bf16.gmra.mrb[0].mxu0 %v300
  %v759 = vpop.f32.mrb[0].mxu0
  %v760 = vadd.f32 %v392, %v759
  %v761 = vpop.f32.mrb[0].mxu0
  %v762 = vadd.f32 %v396, %v761
  %v763 = vpop.f32.mrb[0].mxu0
  %v764 = vpop.f32.mrb[0].mxu0
  %765 = vdwg.mxu0
  %766 = vmatprep.subr.bf16.mxu0 %v600
  %767 = vmatpush1.bf16.msra.mxu0 %v599
  %768 = vmatprep.subr.bf16.mxu0 %v604
  %769 = vmatpush1.bf16.msra.mxu0 %v603
  %770 = vmatprep.subr.bf16.mxu0 %v608
  %771 = vmatpush1.bf16.msra.mxu0 %v607
  %772 = vmatprep.subr.bf16.mxu0 %v612
  %773 = vmatpush1.bf16.msra.mxu0 %v611
  %774 = vmatprep.subr.bf16.mxu0 %v616
  %775 = vmatpush1.bf16.msra.mxu0 %v615
  %776 = vmatprep.subr.bf16.mxu0 %v620
  %777 = vmatpush1.bf16.msra.mxu0 %v619
  %778 = vmatprep.subr.bf16.mxu0 %v624
  %779 = vmatpush1.bf16.msra.mxu0 %v623
  %780 = vmatprep.subr.bf16.mxu0 %v628
  %781 = vmatpush1.bf16.msra.mxu0 %v627
  %782 = vmatprep.subr.bf16.mxu0 %v632
  %783 = vmatpush1.bf16.msra.mxu0 %v631
  %784 = vmatprep.subr.bf16.mxu0 %v636
  %785 = vmatpush1.bf16.msra.mxu0 %v635
  %786 = vmatprep.subr.bf16.mxu0 %v640
  %787 = vmatpush1.bf16.msra.mxu0 %v639
  %788 = vmatprep.subr.bf16.mxu0 %v644
  %789 = vmatpush1.bf16.msra.mxu0 %v643
  %790 = vmatprep.subr.bf16.mxu0 %v648
  %791 = vmatpush1.bf16.msra.mxu0 %v647
  %792 = vmatprep.subr.bf16.mxu0 %v652
  %793 = vmatpush1.bf16.msra.mxu0 %v651
  %794 = vmatprep.subr.bf16.mxu0 %v656
  %795 = vmatpush1.bf16.msra.mxu0 %v655
  %796 = vmatprep.subr.bf16.mxu0 %v660
  %797 = vmatpush1.bf16.msra.mxu0 %v659
  %798 = vmatprep.mubr.bf16.mxu0 %v301
  %799 = vmatmul.mubr.bf16.gmra.mrb[0].mxu0 %v300
  %v800 = vpop.f32.mrb[0].mxu0
  %v801 = vadd.f32 %v400, %v800
  %v802 = vpop.f32.mrb[0].mxu0
  %v803 = vadd.f32 %v404, %v802
  %v804 = vpop.f32.mrb[0].mxu0
  %v805 = vpop.f32.mrb[0].mxu0
  %806 = vdwg.mxu0
  %v807 = vpack.c.bf16 %v760, %v760
  %v808 = vpack.c.bf16 %v762, %v762
  %v809 = vpack.c.bf16 %v801, %v801
  %v810 = vpack.c.bf16 %v803, %v803
  %v815 = vcombine.low %v807, %v808
  %v816 = vcombine.low %v809, %v810
  %v818 = vunpack.c.l.s4 1966171168
  %v819 = vunpack.c.0.s8 %v818
  %v820 = vlaneseq
  %v821 = vshrl.u32 %v820, 7
  %v822 = vsub.s32 %v819, %v821
  %v823 = vrot.slane %v815, %v822
  %v825 = vunpack.c.l.s4 1966171168
  %v826 = vunpack.c.0.s8 %v825
  %v827 = vlaneseq
  %v828 = vshrl.u32 %v827, 7
  %v829 = vsub.s32 %v826, %v828
  %v830 = vrot.slane %v816, %v829
  %v831 = vcombine.low %v823, %v830
  %v833 = vunpack.c.l.s4 1966171168
  %v834 = vunpack.c.0.s8 %v833
  %v835 = vlaneseq
  %v836 = vshrl.u32 %v835, 7
  %v837 = vsub.s32 %v834, %v836
  %v838 = vrot.slane %v831, %v837
  %840 = vst [vmem:[%s5] sm:$0xf] %v838
  // Predicated region
  $region22: #{tablenet_forward.14} parent=0 // pred_check
    _
  $region23: #{tablenet_forward.14} parent=0 // pred_check_branch
    %842 = sbr.rel (0) target = $region25
  $region24: #{tablenet_forward.14} parent=0 // pred_region
    _
  $region25: #{tablenet_forward.14} parent=0 // pred_fallthru
    _
  // Predicated region
  $region26: #{tablenet_forward.14} parent=0 // pred_check
    _
  $region27: #{tablenet_forward.14} parent=0 // pred_check_branch
    %844 = sbr.rel (0) target = $region29
  $region28: #{tablenet_forward.14} parent=0 // pred_region
    _
  $region29: #{tablenet_forward.14} parent=0 // pred_fallthru
    _

// kernel: tablenet_forward.17
$region0: #{tablenet_forward.17}
  #allocation0 [shape = 'u32[]', space=smem, size = 0x4, offset = 0x4, fixed_abs, tag = 'smem constant byte address 0x4 - core index']
  #allocation1 [shape = 'u32[144,128]{1,0:T(1,128)}', space=vmem, size = 0x12000, scoped, tag = 'internal scratch']
  %s0 = inlined_call_operand.vmem [shape: bf16[2,256], index: 0, kind: input, shape index: {}]
  %s1 = inlined_call_operand.vmem [shape: bf16[256,256], index: 1, kind: input, shape index: {}]
  %s2 = inlined_call_operand.vmem [shape: bf16[1,256], index: 2, kind: input, shape index: {}]
  %s3 = inlined_call_operand.hbm [shape: bf16[256,256], index: 3, kind: input, shape index: {}]
  %s4 = inlined_call_operand.vmem [shape: bf16[1,256], index: 4, kind: input, shape index: {}]
  %s5 = inlined_call_operand.vmem [shape: bf16[256,512], index: 5, kind: input, shape index: {}]
  %s6 = inlined_call_operand.vmem [shape: bf16[1,512], index: 6, kind: input, shape index: {}]
  %s7 = inlined_call_operand.vmem [shape: bf16[2,512], index: 7, kind: output, shape index: {}]
  %s8 = sld [smem:[#allocation0]]
  $region42: #{tablenet_forward.17} parent=0
    _
  %s10 = ssub.s32 1, %s8
  %s11 = scalar_select 0, %s10, %s8
  $region1: #{tablenet_forward.17} parent=0
    #allocation2 [shape = 'u8[131072]{0}', space=vmem, size = 0x20000, scoped, tag = 'input window, operand 3, single buffered']
    #allocation3 [shape = 's32[1]{0}', space=sflag, size = 0x4, scoped, tag = 'scoped memory for tablenet_forward.17']
    %12 = vsyncpa [#allocation3], 0
    // Predicated region
    $region2: #{tablenet_forward.17} parent=1 // pred_check
      _
    $region3: #{tablenet_forward.17} parent=1 // pred_check_branch
      %14 = sbr.rel (0) target = $region5
    $region4: #{tablenet_forward.17} parent=1 // pred_region
      _
    $region5: #{tablenet_forward.17} parent=1 // pred_fallthru
      _
    // Predicated region
    $region6: #{tablenet_forward.17} parent=1 // pred_check
      _
    $region7: #{tablenet_forward.17} parent=1 // pred_check_branch
      %16 = sbr.rel (0) target = $region9
    $region8: #{tablenet_forward.17} parent=1 // pred_region
      _
    $region9: #{tablenet_forward.17} parent=1 // pred_fallthru
      _
    // Predicated region
    $region10: #{tablenet_forward.17} parent=1 // pred_check
      _
    $region11: #{tablenet_forward.17} parent=1 // pred_check_branch
      %18 = sbr.rel (0) target = $region13
    $region12: #{tablenet_forward.17} parent=1 // pred_region
      _
    $region13: #{tablenet_forward.17} parent=1 // pred_fallthru
      _
    // Predicated region
    $region14: #{tablenet_forward.17} parent=1 // pred_check
      _
    $region15: #{tablenet_forward.17} parent=1 // pred_check_branch
      %20 = sbr.rel (0) target = $region17
    $region16: #{tablenet_forward.17} parent=1 // pred_region
      %s22 = ssub.s32 4096, 4096
      %23 = vsyncadd [#allocation3], %s22
      %s24 = sshll.u32 [#allocation2], 4
      %s25 = int_to_ptr.vmem [resolvable:$true] %s24
      %30 = dma.hbm_to_vmem [thread:$0]  %s3, 4096, %s25, [#allocation3], 128, 128, 8
    $region17: #{tablenet_forward.17} parent=1 // pred_fallthru
      _
    // Predicated region
    $region18: #{tablenet_forward.17} parent=1 // pred_check
      _
    $region19: #{tablenet_forward.17} parent=1 // pred_check_branch
      %32 = sbr.rel (0) target = $region21
    $region20: #{tablenet_forward.17} parent=1 // pred_region
      _
    $region21: #{tablenet_forward.17} parent=1 // pred_fallthru
      _
    // Predicated region
    $region22: #{tablenet_forward.17} parent=1 // pred_check
      _
    $region23: #{tablenet_forward.17} parent=1 // pred_check_branch
      %34 = sbr.rel (0) target = $region25
    $region24: #{tablenet_forward.17} parent=1 // pred_region
      _
    $region25: #{tablenet_forward.17} parent=1 // pred_fallthru
      _
    // Predicated region
    $region26: #{tablenet_forward.17} parent=1 // pred_check
      _
    $region27: #{tablenet_forward.17} parent=1 // pred_check_branch
      %36 = sbr.rel (0) target = $region29
    $region28: #{tablenet_forward.17} parent=1 // pred_region
      _
    $region29: #{tablenet_forward.17} parent=1 // pred_fallthru
      _
    // Predicated region
    $region30: #{tablenet_forward.17} parent=1 // pred_check
      _
    $region31: #{tablenet_forward.17} parent=1 // pred_check_branch
      %38 = sbr.rel (0) target = $region33
    $region32: #{tablenet_forward.17} parent=1 // pred_region
      %39 = dma.done [#allocation3], 4096
    $region33: #{tablenet_forward.17} parent=1 // pred_fallthru
      _
    %v40 = vld [vmem:[%s0] sm:$0x3]
    %v41 = vld [vmem:[%s1] sm:$0xff]
    %v42 = vld [vmem:[%s1 + $0x8] sm:$0xff]
    %v43 = vld [vmem:[%s1 + $0x10] sm:$0xff]
    %v44 = vld [vmem:[%s1 + $0x18] sm:$0xff]
    %v45 = vld [vmem:[%s1 + $0x20] sm:$0xff]
    %v46 = vld [vmem:[%s1 + $0x28] sm:$0xff]
    %v47 = vld [vmem:[%s1 + $0x30] sm:$0xff]
    %v48 = vld [vmem:[%s1 + $0x38] sm:$0xff]
    %v49 = vld [vmem:[%s1 + $0x40] sm:$0xff]
    %v50 = vld [vmem:[%s1 + $0x48] sm:$0xff]
    %v51 = vld [vmem:[%s1 + $0x50] sm:$0xff]
    %v52 = vld [vmem:[%s1 + $0x58] sm:$0xff]
    %v53 = vld [vmem:[%s1 + $0x60] sm:$0xff]
    %v54 = vld [vmem:[%s1 + $0x68] sm:$0xff]
    %v55 = vld [vmem:[%s1 + $0x70] sm:$0xff]
    %v56 = vld [vmem:[%s1 + $0x78] sm:$0xff]
    %v57 = vld [vmem:[%s1 + $0x80] sm:$0xff]
    %v58 = vld [vmem:[%s1 + $0x88] sm:$0xff]
    %v59 = vld [vmem:[%s1 + $0x90] sm:$0xff]
    %v60 = vld [vmem:[%s1 + $0x98] sm:$0xff]
    %v61 = vld [vmem:[%s1 + $0xa0] sm:$0xff]
    %v62 = vld [vmem:[%s1 + $0xa8] sm:$0xff]
    %v63 = vld [vmem:[%s1 + $0xb0] sm:$0xff]
    %v64 = vld [vmem:[%s1 + $0xb8] sm:$0xff]
    %v65 = vld [vmem:[%s1 + $0xc0] sm:$0xff]
    %v66 = vld [vmem:[%s1 + $0xc8] sm:$0xff]
    %v67 = vld [vmem:[%s1 + $0xd0] sm:$0xff]
    %v68 = vld [vmem:[%s1 + $0xd8] sm:$0xff]
    %v69 = vld [vmem:[%s1 + $0xe0] sm:$0xff]
    %v70 = vld [vmem:[%s1 + $0xe8] sm:$0xff]
    %v71 = vld [vmem:[%s1 + $0xf0] sm:$0xff]
    %v72 = vld [vmem:[%s1 + $0xf8] sm:$0xff]
    %v73 = vld [vmem:[%s2] sm:$0x3]
    %v74 = vunpack.c.l.bf16 %v73
    %v76 = vlaneseq
    %v77 = vshrl.u32 %v76, 7
    %v78 = vsub.s32 0, %v77
    %v79 = vrot.slane %v74, %v78
    %v80 = vlaneseq
    %v81 = vshrl.u32 %v80, 7
    %v82 = vsub.s32 2, %v81
    %v83 = vrot.slane %v74, %v82
    %v86 = vlaneseq
    %v87 = vshrl.u32 %v86, 7
    %v88 = vsub.s32 0, %v87
    %v89 = vrot.slane %v79, %v88
    %v90 = vlaneseq
    %v91 = vshrl.u32 %v90, 7
    %v92 = vsub.s32 0, %v91
    %v93 = vrot.slane %v83, %v92
    %v96 = vunpack.c.l.s4 1966171168
    %v97 = vunpack.c.0.s8 %v96
    %v98 = vlaneseq
    %v99 = vshrl.u32 %v98, 7
    %v100 = vsub.s32 %v97, %v99
    %v101 = vrot.slane %v40, %v100
    %v102 = vcombine.high %v101, %v101
    %v104 = vunpack.c.l.s4 1966171168
    %v105 = vunpack.c.0.s8 %v104
    %v106 = vlaneseq
    %v107 = vshrl.u32 %v106, 7
    %v108 = vsub.s32 %v105, %v107
    %v109 = vrot.slane %v101, %v108
    %v111 = vunpack.c.l.s4 1966171168
    %v112 = vunpack.c.0.s8 %v111
    %v113 = vlaneseq
    %v114 = vshrl.u32 %v113, 7
    %v115 = vsub.s32 %v112, %v114
    %v116 = vrot.slane %v102, %v115
    %v151 = vunpack.c.l.b16 %v41
    %v152 = vunpack.c.h.b16 %v41
    %v153 = vunpack.c.l.b16 %v42
    %v154 = vunpack.c.h.b16 %v42
    %v155 = vunpack.c.l.b16 %v43
    %v156 = vunpack.c.h.b16 %v43
    %v157 = vunpack.c.l.b16 %v44
    %v158 = vunpack.c.h.b16 %v44
    %v159 = vunpack.c.l.b16 %v45
    %v160 = vunpack.c.h.b16 %v45
    %v161 = vunpack.c.l.b16 %v46
    %v162 = vunpack.c.h.b16 %v46
    %v163 = vunpack.c.l.b16 %v47
    %v164 = vunpack.c.h.b16 %v47
    %v165 = vunpack.c.l.b16 %v48
    %v166 = vunpack.c.h.b16 %v48
    %v167 = vunpack.c.l.b16 %v49
    %v168 = vunpack.c.h.b16 %v49
    %v169 = vunpack.c.l.b16 %v50
    %v170 = vunpack.c.h.b16 %v50
    %v171 = vunpack.c.l.b16 %v51
    %v172 = vunpack.c.h.b16 %v51
    %v173 = vunpack.c.l.b16 %v52
    %v174 = vunpack.c.h.b16 %v52
    %v175 = vunpack.c.l.b16 %v53
    %v176 = vunpack.c.h.b16 %v53
    %v177 = vunpack.c.l.b16 %v54
    %v178 = vunpack.c.h.b16 %v54
    %v179 = vunpack.c.l.b16 %v55
    %v180 = vunpack.c.h.b16 %v55
    %v181 = vunpack.c.l.b16 %v56
    %v182 = vunpack.c.h.b16 %v56
    %v183 = vunpack.c.l.b16 %v57
    %v184 = vunpack.c.h.b16 %v57
    %v185 = vunpack.c.l.b16 %v58
    %v186 = vunpack.c.h.b16 %v58
    %v187 = vunpack.c.l.b16 %v59
    %v188 = vunpack.c.h.b16 %v59
    %v189 = vunpack.c.l.b16 %v60
    %v190 = vunpack.c.h.b16 %v60
    %v191 = vunpack.c.l.b16 %v61
    %v192 = vunpack.c.h.b16 %v61
    %v193 = vunpack.c.l.b16 %v62
    %v194 = vunpack.c.h.b16 %v62
    %v195 = vunpack.c.l.b16 %v63
    %v196 = vunpack.c.h.b16 %v63
    %v197 = vunpack.c.l.b16 %v64
    %v198 = vunpack.c.h.b16 %v64
    %v199 = vunpack.c.l.b16 %v65
    %v200 = vunpack.c.h.b16 %v65
    %v201 = vunpack.c.l.b16 %v66
    %v202 = vunpack.c.h.b16 %v66
    %v203 = vunpack.c.l.b16 %v67
    %v204 = vunpack.c.h.b16 %v67
    %v205 = vunpack.c.l.b16 %v68
    %v206 = vunpack.c.h.b16 %v68
    %v207 = vunpack.c.l.b16 %v69
    %v208 = vunpack.c.h.b16 %v69
    %v209 = vunpack.c.l.b16 %v70
    %v210 = vunpack.c.h.b16 %v70
    %v211 = vunpack.c.l.b16 %v71
    %v212 = vunpack.c.h.b16 %v71
    %v213 = vunpack.c.l.b16 %v72
    %v214 = vunpack.c.h.b16 %v72
    %v215 = vpack.c.b16 %v153, %v151
    %v216 = vpack.c.b16 %v154, %v152
    %v217 = vpack.c.b16 %v157, %v155
    %v218 = vpack.c.b16 %v158, %v156
    %v219 = vpack.c.b16 %v161, %v159
    %v220 = vpack.c.b16 %v162, %v160
    %v221 = vpack.c.b16 %v165, %v163
    %v222 = vpack.c.b16 %v166, %v164
    %v223 = vpack.c.b16 %v169, %v167
    %v224 = vpack.c.b16 %v170, %v168
    %v225 = vpack.c.b16 %v173, %v171
    %v226 = vpack.c.b16 %v174, %v172
    %v227 = vpack.c.b16 %v177, %v175
    %v228 = vpack.c.b16 %v178, %v176
    %v229 = vpack.c.b16 %v181, %v179
    %v230 = vpack.c.b16 %v182, %v180
    %v231 = vpack.c.b16 %v185, %v183
    %v232 = vpack.c.b16 %v186, %v184
    %v233 = vpack.c.b16 %v189, %v187
    %v234 = vpack.c.b16 %v190, %v188
    %v235 = vpack.c.b16 %v193, %v191
    %v236 = vpack.c.b16 %v194, %v192
    %v237 = vpack.c.b16 %v197, %v195
    %v238 = vpack.c.b16 %v198, %v196
    %v239 = vpack.c.b16 %v201, %v199
    %v240 = vpack.c.b16 %v202, %v200
    %v241 = vpack.c.b16 %v205, %v203
    %v242 = vpack.c.b16 %v206, %v204
    %v243 = vpack.c.b16 %v209, %v207
    %v244 = vpack.c.b16 %v210, %v208
    %v245 = vpack.c.b16 %v213, %v211
    %v246 = vpack.c.b16 %v214, %v212
    %279 = vmatprep.subr.bf16.mxu0 %v216
    %280 = vmatpush1.bf16.msra.mxu0 %v215
    %281 = vmatprep.subr.bf16.mxu0 %v218
    %282 = vmatpush1.bf16.msra.mxu0 %v217
    %283 = vmatprep.subr.bf16.mxu0 %v220
    %284 = vmatpush1.bf16.msra.mxu0 %v219
    %285 = vmatprep.subr.bf16.mxu0 %v222
    %286 = vmatpush1.bf16.msra.mxu0 %v221
    %287 = vmatprep.subr.bf16.mxu0 %v224
    %288 = vmatpush1.bf16.msra.mxu0 %v223
    %289 = vmatprep.subr.bf16.mxu0 %v226
    %290 = vmatpush1.bf16.msra.mxu0 %v225
    %291 = vmatprep.subr.bf16.mxu0 %v228
    %292 = vmatpush1.bf16.msra.mxu0 %v227
    %293 = vmatprep.subr.bf16.mxu0 %v230
    %294 = vmatpush1.bf16.msra.mxu0 %v229
    %295 = vmatprep.subr.bf16.mxu0 %v232
    %296 = vmatpush1.bf16.msra.mxu0 %v231
    %297 = vmatprep.subr.bf16.mxu0 %v234
    %298 = vmatpush1.bf16.msra.mxu0 %v233
    %299 = vmatprep.subr.bf16.mxu0 %v236
    %300 = vmatpush1.bf16.msra.mxu0 %v235
    %301 = vmatprep.subr.bf16.mxu0 %v238
    %302 = vmatpush1.bf16.msra.mxu0 %v237
    %303 = vmatprep.subr.bf16.mxu0 %v240
    %304 = vmatpush1.bf16.msra.mxu0 %v239
    %305 = vmatprep.subr.bf16.mxu0 %v242
    %306 = vmatpush1.bf16.msra.mxu0 %v241
    %307 = vmatprep.subr.bf16.mxu0 %v244
    %308 = vmatpush1.bf16.msra.mxu0 %v243
    %309 = vmatprep.subr.bf16.mxu0 %v246
    %310 = vmatpush1.bf16.msra.mxu0 %v245
    %311 = vmatprep.mubr.bf16.mxu0 %v116
    %312 = vmatmul.mubr.bf16.gmra.mrb[0].mxu0 %v109
    %v313 = vpop.f32.mrb[0].mxu0
    %v314 = vadd.f32 %v89, %v313
    %v315 = vpop.f32.mrb[0].mxu0
    %v316 = vadd.f32 %v93, %v315
    %v317 = vpop.f32.mrb[0].mxu0
    %v318 = vpop.f32.mrb[0].mxu0
    %319 = vdwg.mxu0
    %v320 = vmax.f32 %v314, 0.0
    %v321 = vmax.f32 %v316, 0.0
    %v322 = vpack.c.bf16 %v320, %v320
    %v323 = vpack.c.bf16 %v321, %v321
    %v324 = vld [vmem:[#allocation2] sm:$0xff]
    %v325 = vld [vmem:[#allocation2 + $0x8] sm:$0xff]
    %v326 = vld [vmem:[#allocation2 + $0x10] sm:$0xff]
    %v327 = vld [vmem:[#allocation2 + $0x18] sm:$0xff]
    %v328 = vld [vmem:[#allocation2 + $0x20] sm:$0xff]
    %v329 = vld [vmem:[#allocation2 + $0x28] sm:$0xff]
    %v330 = vld [vmem:[#allocation2 + $0x30] sm:$0xff]
    %v331 = vld [vmem:[#allocation2 + $0x38] sm:$0xff]
    %v332 = vld [vmem:[#allocation2 + $0x40] sm:$0xff]
    %v333 = vld [vmem:[#allocation2 + $0x48] sm:$0xff]
    %v334 = vld [vmem:[#allocation2 + $0x50] sm:$0xff]
    %v335 = vld [vmem:[#allocation2 + $0x58] sm:$0xff]
    %v336 = vld [vmem:[#allocation2 + $0x60] sm:$0xff]
    %v337 = vld [vmem:[#allocation2 + $0x68] sm:$0xff]
    %v338 = vld [vmem:[#allocation2 + $0x70] sm:$0xff]
    %v339 = vld [vmem:[#allocation2 + $0x78] sm:$0xff]
    %v340 = vld [vmem:[#allocation2 + $0x80] sm:$0xff]
    %v341 = vld [vmem:[#allocation2 + $0x88] sm:$0xff]
    %v342 = vld [vmem:[#allocation2 + $0x90] sm:$0xff]
    %v343 = vld [vmem:[#allocation2 + $0x98] sm:$0xff]
    %v344 = vld [vmem:[#allocation2 + $0xa0] sm:$0xff]
    %v345 = vld [vmem:[#allocation2 + $0xa8] sm:$0xff]
    %v346 = vld [vmem:[#allocation2 + $0xb0] sm:$0xff]
    %v347 = vld [vmem:[#allocation2 + $0xb8] sm:$0xff]
    %v348 = vld [vmem:[#allocation2 + $0xc0] sm:$0xff]
    %v349 = vld [vmem:[#allocation2 + $0xc8] sm:$0xff]
    %v350 = vld [vmem:[#allocation2 + $0xd0] sm:$0xff]
    %v351 = vld [vmem:[#allocation2 + $0xd8] sm:$0xff]
    %v352 = vld [vmem:[#allocation2 + $0xe0] sm:$0xff]
    %v353 = vld [vmem:[#allocation2 + $0xe8] sm:$0xff]
    %v354 = vld [vmem:[#allocation2 + $0xf0] sm:$0xff]
    %v355 = vld [vmem:[#allocation2 + $0xf8] sm:$0xff]
    %v356 = vld [vmem:[%s4] sm:$0x3]
    %v357 = vunpack.c.l.bf16 %v356
    %v359 = vlaneseq
    %v360 = vshrl.u32 %v359, 7
    %v361 = vsub.s32 0, %v360
    %v362 = vrot.slane %v357, %v361
    %v363 = vlaneseq
    %v364 = vshrl.u32 %v363, 7
    %v365 = vsub.s32 2, %v364
    %v366 = vrot.slane %v357, %v365
    %v369 = vlaneseq
    %v370 = vshrl.u32 %v369, 7
    %v371 = vsub.s32 0, %v370
    %v372 = vrot.slane %v362, %v371
    %v373 = vlaneseq
    %v374 = vshrl.u32 %v373, 7
    %v375 = vsub.s32 0, %v374
    %v376 = vrot.slane %v366, %v375
    %v409 = vunpack.c.l.b16 %v324
    %v410 = vunpack.c.h.b16 %v324
    %v411 = vunpack.c.l.b16 %v325
    %v412 = vunpack.c.h.b16 %v325
    %v413 = vunpack.c.l.b16 %v326
    %v414 = vunpack.c.h.b16 %v326
    %v415 = vunpack.c.l.b16 %v327
    %v416 = vunpack.c.h.b16 %v327
    %v417 = vunpack.c.l.b16 %v328
    %v418 = vunpack.c.h.b16 %v328
    %v419 = vunpack.c.l.b16 %v329
    %v420 = vunpack.c.h.b16 %v329
    %v421 = vunpack.c.l.b16 %v330
    %v422 = vunpack.c.h.b16 %v330
    %v423 = vunpack.c.l.b16 %v331
    %v424 = vunpack.c.h.b16 %v331
    %v425 = vunpack.c.l.b16 %v332
    %v426 = vunpack.c.h.b16 %v332
    %v427 = vunpack.c.l.b16 %v333
    %v428 = vunpack.c.h.b16 %v333
    %v429 = vunpack.c.l.b16 %v334
    %v430 = vunpack.c.h.b16 %v334
    %v431 = vunpack.c.l.b16 %v335
    %v432 = vunpack.c.h.b16 %v335
    %v433 = vunpack.c.l.b16 %v336
    %v434 = vunpack.c.h.b16 %v336
    %v435 = vunpack.c.l.b16 %v337
    %v436 = vunpack.c.h.b16 %v337
    %v437 = vunpack.c.l.b16 %v338
    %v438 = vunpack.c.h.b16 %v338
    %v439 = vunpack.c.l.b16 %v339
    %v440 = vunpack.c.h.b16 %v339
    %v441 = vunpack.c.l.b16 %v340
    %v442 = vunpack.c.h.b16 %v340
    %v443 = vunpack.c.l.b16 %v341
    %v444 = vunpack.c.h.b16 %v341
    %v445 = vunpack.c.l.b16 %v342
    %v446 = vunpack.c.h.b16 %v342
    %v447 = vunpack.c.l.b16 %v343
    %v448 = vunpack.c.h.b16 %v343
    %v449 = vunpack.c.l.b16 %v344
    %v450 = vunpack.c.h.b16 %v344
    %v451 = vunpack.c.l.b16 %v345
    %v452 = vunpack.c.h.b16 %v345
    %v453 = vunpack.c.l.b16 %v346
    %v454 = vunpack.c.h.b16 %v346
    %v455 = vunpack.c.l.b16 %v347
    %v456 = vunpack.c.h.b16 %v347
    %v457 = vunpack.c.l.b16 %v348
    %v458 = vunpack.c.h.b16 %v348
    %v459 = vunpack.c.l.b16 %v349
    %v460 = vunpack.c.h.b16 %v349
    %v461 = vunpack.c.l.b16 %v350
    %v462 = vunpack.c.h.b16 %v350
    %v463 = vunpack.c.l.b16 %v351
    %v464 = vunpack.c.h.b16 %v351
    %v465 = vunpack.c.l.b16 %v352
    %v466 = vunpack.c.h.b16 %v352
    %v467 = vunpack.c.l.b16 %v353
    %v468 = vunpack.c.h.b16 %v353
    %v469 = vunpack.c.l.b16 %v354
    %v470 = vunpack.c.h.b16 %v354
    %v471 = vunpack.c.l.b16 %v355
    %v472 = vunpack.c.h.b16 %v355
    %v473 = vpack.c.b16 %v411, %v409
    %v474 = vpack.c.b16 %v412, %v410
    %v475 = vpack.c.b16 %v415, %v413
    %v476 = vpack.c.b16 %v416, %v414
    %v477 = vpack.c.b16 %v419, %v417
    %v478 = vpack.c.b16 %v420, %v418
    %v479 = vpack.c.b16 %v423, %v421
    %v480 = vpack.c.b16 %v424, %v422
    %v481 = vpack.c.b16 %v427, %v425
    %v482 = vpack.c.b16 %v428, %v426
    %v483 = vpack.c.b16 %v431, %v429
    %v484 = vpack.c.b16 %v432, %v430
    %v485 = vpack.c.b16 %v435, %v433
    %v486 = vpack.c.b16 %v436, %v434
    %v487 = vpack.c.b16 %v439, %v437
    %v488 = vpack.c.b16 %v440, %v438
    %v489 = vpack.c.b16 %v443, %v441
    %v490 = vpack.c.b16 %v444, %v442
    %v491 = vpack.c.b16 %v447, %v445
    %v492 = vpack.c.b16 %v448, %v446
    %v493 = vpack.c.b16 %v451, %v449
    %v494 = vpack.c.b16 %v452, %v450
    %v495 = vpack.c.b16 %v455, %v453
    %v496 = vpack.c.b16 %v456, %v454
    %v497 = vpack.c.b16 %v459, %v457
    %v498 = vpack.c.b16 %v460, %v458
    %v499 = vpack.c.b16 %v463, %v461
    %v500 = vpack.c.b16 %v464, %v462
    %v501 = vpack.c.b16 %v467, %v465
    %v502 = vpack.c.b16 %v468, %v466
    %v503 = vpack.c.b16 %v471, %v469
    %v504 = vpack.c.b16 %v472, %v470
    %537 = vmatprep.subr.bf16.mxu0 %v474
    %538 = vmatpush1.bf16.msra.mxu0 %v473
    %539 = vmatprep.subr.bf16.mxu0 %v476
    %540 = vmatpush1.bf16.msra.mxu0 %v475
    %541 = vmatprep.subr.bf16.mxu0 %v478
    %542 = vmatpush1.bf16.msra.mxu0 %v477
    %543 = vmatprep.subr.bf16.mxu0 %v480
    %544 = vmatpush1.bf16.msra.mxu0 %v479
    %545 = vmatprep.subr.bf16.mxu0 %v482
    %546 = vmatpush1.bf16.msra.mxu0 %v481
    %547 = vmatprep.subr.bf16.mxu0 %v484
    %548 = vmatpush1.bf16.msra.mxu0 %v483
    %549 = vmatprep.subr.bf16.mxu0 %v486
    %550 = vmatpush1.bf16.msra.mxu0 %v485
    %551 = vmatprep.subr.bf16.mxu0 %v488
    %552 = vmatpush1.bf16.msra.mxu0 %v487
    %553 = vmatprep.subr.bf16.mxu0 %v490
    %554 = vmatpush1.bf16.msra.mxu0 %v489
    %555 = vmatprep.subr.bf16.mxu0 %v492
    %556 = vmatpush1.bf16.msra.mxu0 %v491
    %557 = vmatprep.subr.bf16.mxu0 %v494
    %558 = vmatpush1.bf16.msra.mxu0 %v493
    %559 = vmatprep.subr.bf16.mxu0 %v496
    %560 = vmatpush1.bf16.msra.mxu0 %v495
    %561 = vmatprep.subr.bf16.mxu0 %v498
    %562 = vmatpush1.bf16.msra.mxu0 %v497
    %563 = vmatprep.subr.bf16.mxu0 %v500
    %564 = vmatpush1.bf16.msra.mxu0 %v499
    %565 = vmatprep.subr.bf16.mxu0 %v502
    %566 = vmatpush1.bf16.msra.mxu0 %v501
    %567 = vmatprep.subr.bf16.mxu0 %v504
    %568 = vmatpush1.bf16.msra.mxu0 %v503
    %569 = vmatprep.mubr.bf16.mxu0 %v323
    %570 = vmatmul.mubr.bf16.gmra.mrb[0].mxu0 %v322
    %v571 = vpop.f32.mrb[0].mxu0
    %v572 = vadd.f32 %v372, %v571
    %v573 = vpop.f32.mrb[0].mxu0
    %v574 = vadd.f32 %v376, %v573
    %v575 = vpop.f32.mrb[0].mxu0
    %v576 = vpop.f32.mrb[0].mxu0
    %577 = vdwg.mxu0
    %v578 = vpack.c.bf16 %v572, %v572
    %v579 = vpack.c.bf16 %v574, %v574
    %v580 = vld [vmem:[%s5] sm:$0xff]
    %v581 = vld [vmem:[%s5 + $0x8] sm:$0xff]
    %v582 = vld [vmem:[%s5 + $0x10] sm:$0xff]
    %v583 = vld [vmem:[%s5 + $0x18] sm:$0xff]
    %v584 = vld [vmem:[%s5 + $0x20] sm:$0xff]
    %v585 = vld [vmem:[%s5 + $0x28] sm:$0xff]
    %v586 = vld [vmem:[%s5 + $0x30] sm:$0xff]
    %v587 = vld [vmem:[%s5 + $0x38] sm:$0xff]
    %v588 = vld [vmem:[%s5 + $0x40] sm:$0xff]
    %v589 = vld [vmem:[%s5 + $0x48] sm:$0xff]
    %v590 = vld [vmem:[%s5 + $0x50] sm:$0xff]
    %v591 = vld [vmem:[%s5 + $0x58] sm:$0xff]
    %v592 = vld [vmem:[%s5 + $0x60] sm:$0xff]
    %v593 = vld [vmem:[%s5 + $0x68] sm:$0xff]
    %v594 = vld [vmem:[%s5 + $0x70] sm:$0xff]
    %v595 = vld [vmem:[%s5 + $0x78] sm:$0xff]
    %v596 = vld [vmem:[%s5 + $0x80] sm:$0xff]
    %v597 = vld [vmem:[%s5 + $0x88] sm:$0xff]
    %v598 = vld [vmem:[%s5 + $0x90] sm:$0xff]
    %v599 = vld [vmem:[%s5 + $0x98] sm:$0xff]
    %v600 = vld [vmem:[%s5 + $0xa0] sm:$0xff]
    %v601 = vld [vmem:[%s5 + $0xa8] sm:$0xff]
    %v602 = vld [vmem:[%s5 + $0xb0] sm:$0xff]
    %v603 = vld [vmem:[%s5 + $0xb8] sm:$0xff]
    %v604 = vld [vmem:[%s5 + $0xc0] sm:$0xff]
    %v605 = vld [vmem:[%s5 + $0xc8] sm:$0xff]
    %v606 = vld [vmem:[%s5 + $0xd0] sm:$0xff]
    %v607 = vld [vmem:[%s5 + $0xd8] sm:$0xff]
    %v608 = vld [vmem:[%s5 + $0xe0] sm:$0xff]
    %v609 = vld [vmem:[%s5 + $0xe8] sm:$0xff]
    %v610 = vld [vmem:[%s5 + $0xf0] sm:$0xff]
    %v611 = vld [vmem:[%s5 + $0xf8] sm:$0xff]
    %v612 = vld [vmem:[%s5 + $0x100] sm:$0xff]
    %v613 = vld [vmem:[%s5 + $0x108] sm:$0xff]
    %v614 = vld [vmem:[%s5 + $0x110] sm:$0xff]
    %v615 = vld [vmem:[%s5 + $0x118] sm:$0xff]
    %v616 = vld [vmem:[%s5 + $0x120] sm:$0xff]
    %v617 = vld [vmem:[%s5 + $0x128] sm:$0xff]
    %v618 = vld [vmem:[%s5 + $0x130] sm:$0xff]
    %v619 = vld [vmem:[%s5 + $0x138] sm:$0xff]
    %v620 = vld [vmem:[%s5 + $0x140] sm:$0xff]
    %v621 = vld [vmem:[%s5 + $0x148] sm:$0xff]
    %v622 = vld [vmem:[%s5 + $0x150] sm:$0xff]
    %v623 = vld [vmem:[%s5 + $0x158] sm:$0xff]
    %v624 = vld [vmem:[%s5 + $0x160] sm:$0xff]
    %v625 = vld [vmem:[%s5 + $0x168] sm:$0xff]
    %v626 = vld [vmem:[%s5 + $0x170] sm:$0xff]
    %v627 = vld [vmem:[%s5 + $0x178] sm:$0xff]
    %v628 = vld [vmem:[%s5 + $0x180] sm:$0xff]
    %v629 = vld [vmem:[%s5 + $0x188] sm:$0xff]
    %v630 = vld [vmem:[%s5 + $0x190] sm:$0xff]
    %v631 = vld [vmem:[%s5 + $0x198] sm:$0xff]
    %v632 = vld [vmem:[%s5 + $0x1a0] sm:$0xff]
    %v633 = vld [vmem:[%s5 + $0x1a8] sm:$0xff]
    %v634 = vld [vmem:[%s5 + $0x1b0] sm:$0xff]
    %v635 = vld [vmem:[%s5 + $0x1b8] sm:$0xff]
    %v636 = vld [vmem:[%s5 + $0x1c0] sm:$0xff]
    %v637 = vld [vmem:[%s5 + $0x1c8] sm:$0xff]
    %v638 = vld [vmem:[%s5 + $0x1d0] sm:$0xff]
    %v639 = vld [vmem:[%s5 + $0x1d8] sm:$0xff]
    %v640 = vld [vmem:[%s5 + $0x1e0] sm:$0xff]
    %v641 = vld [vmem:[%s5 + $0x1e8] sm:$0xff]
    %v642 = vld [vmem:[%s5 + $0x1f0] sm:$0xff]
    %v643 = vld [vmem:[%s5 + $0x1f8] sm:$0xff]
    %v644 = vld [vmem:[%s6] sm:$0xf]
    %v645 = vunpack.c.l.bf16 %v644
    %v647 = vlaneseq
    %v648 = vshrl.u32 %v647, 7
    %v649 = vsub.s32 0, %v648
    %v650 = vrot.slane %v645, %v649
    %v651 = vlaneseq
    %v652 = vshrl.u32 %v651, 7
    %v653 = vsub.s32 2, %v652
    %v654 = vrot.slane %v645, %v653
    %v655 = vlaneseq
    %v656 = vshrl.u32 %v655, 7
    %v657 = vsub.s32 4, %v656
    %v658 = vrot.slane %v645, %v657
    %v659 = vlaneseq
    %v660 = vshrl.u32 %v659, 7
    %v661 = vsub.s32 6, %v660
    %v662 = vrot.slane %v645, %v661
    %v667 = vlaneseq
    %v668 = vshrl.u32 %v667, 7
    %v669 = vsub.s32 0, %v668
    %v670 = vrot.slane %v650, %v669
    %v671 = vlaneseq
    %v672 = vshrl.u32 %v671, 7
    %v673 = vsub.s32 0, %v672
    %v674 = vrot.slane %v654, %v673
    %v675 = vlaneseq
    %v676 = vshrl.u32 %v675, 7
    %v677 = vsub.s32 0, %v676
    %v678 = vrot.slane %v658, %v677
    %v679 = vlaneseq
    %v680 = vshrl.u32 %v679, 7
    %v681 = vsub.s32 0, %v680
    %v682 = vrot.slane %v662, %v681
    %v747 = vunpack.c.l.b16 %v580
    %v748 = vunpack.c.h.b16 %v580
    %v749 = vunpack.c.l.b16 %v581
    %v750 = vunpack.c.h.b16 %v581
    %v751 = vunpack.c.l.b16 %v582
    %v752 = vunpack.c.h.b16 %v582
    %v753 = vunpack.c.l.b16 %v583
    %v754 = vunpack.c.h.b16 %v583
    %v755 = vunpack.c.l.b16 %v584
    %v756 = vunpack.c.h.b16 %v584
    %v757 = vunpack.c.l.b16 %v585
    %v758 = vunpack.c.h.b16 %v585
    %v759 = vunpack.c.l.b16 %v586
    %v760 = vunpack.c.h.b16 %v586
    %v761 = vunpack.c.l.b16 %v587
    %v762 = vunpack.c.h.b16 %v587
    %v763 = vunpack.c.l.b16 %v588
    %v764 = vunpack.c.h.b16 %v588
    %v765 = vunpack.c.l.b16 %v589
    %v766 = vunpack.c.h.b16 %v589
    %v767 = vunpack.c.l.b16 %v590
    %v768 = vunpack.c.h.b16 %v590
    %v769 = vunpack.c.l.b16 %v591
    %v770 = vunpack.c.h.b16 %v591
    %v771 = vunpack.c.l.b16 %v592
    %v772 = vunpack.c.h.b16 %v592
    %v773 = vunpack.c.l.b16 %v593
    %v774 = vunpack.c.h.b16 %v593
    %v775 = vunpack.c.l.b16 %v594
    %v776 = vunpack.c.h.b16 %v594
    %v777 = vunpack.c.l.b16 %v595
    %v778 = vunpack.c.h.b16 %v595
    %v779 = vunpack.c.l.b16 %v596
    %v780 = vunpack.c.h.b16 %v596
    %v781 = vunpack.c.l.b16 %v597
    %v782 = vunpack.c.h.b16 %v597
    %v783 = vunpack.c.l.b16 %v598
    %v784 = vunpack.c.h.b16 %v598
    %v785 = vunpack.c.l.b16 %v599
    %v786 = vunpack.c.h.b16 %v599
    %v787 = vunpack.c.l.b16 %v600
    %v788 = vunpack.c.h.b16 %v600
    %v789 = vunpack.c.l.b16 %v601
    %v790 = vunpack.c.h.b16 %v601
    %v791 = vunpack.c.l.b16 %v602
    %v792 = vunpack.c.h.b16 %v602
    %v793 = vunpack.c.l.b16 %v603
    %v794 = vunpack.c.h.b16 %v603
    %v795 = vunpack.c.l.b16 %v604
    %v796 = vunpack.c.h.b16 %v604
    %v797 = vunpack.c.l.b16 %v605
    %v798 = vunpack.c.h.b16 %v605
    %v799 = vunpack.c.l.b16 %v606
    %v800 = vunpack.c.h.b16 %v606
    %v801 = vunpack.c.l.b16 %v607
    %v802 = vunpack.c.h.b16 %v607
    %v803 = vunpack.c.l.b16 %v608
    %v804 = vunpack.c.h.b16 %v608
    %v805 = vunpack.c.l.b16 %v609
    %v806 = vunpack.c.h.b16 %v609
    %v807 = vunpack.c.l.b16 %v610
    %v808 = vunpack.c.h.b16 %v610
    %v809 = vunpack.c.l.b16 %v611
    %v810 = vunpack.c.h.b16 %v611
    %v811 = vunpack.c.l.b16 %v612
    %v812 = vunpack.c.h.b16 %v612
    %v813 = vunpack.c.l.b16 %v613
    %v814 = vunpack.c.h.b16 %v613
    %v815 = vunpack.c.l.b16 %v614
    %v816 = vunpack.c.h.b16 %v614
    %v817 = vunpack.c.l.b16 %v615
    %v818 = vunpack.c.h.b16 %v615
    %v819 = vunpack.c.l.b16 %v616
    %v820 = vunpack.c.h.b16 %v616
    %v821 = vunpack.c.l.b16 %v617
    %v822 = vunpack.c.h.b16 %v617
    %v823 = vunpack.c.l.b16 %v618
    %v824 = vunpack.c.h.b16 %v618
    %v825 = vunpack.c.l.b16 %v619
    %v826 = vunpack.c.h.b16 %v619
    %v827 = vunpack.c.l.b16 %v620
    %v828 = vunpack.c.h.b16 %v620
    %v829 = vunpack.c.l.b16 %v621
    %v830 = vunpack.c.h.b16 %v621
    %v831 = vunpack.c.l.b16 %v622
    %v832 = vunpack.c.h.b16 %v622
    %v833 = vunpack.c.l.b16 %v623
    %v834 = vunpack.c.h.b16 %v623
    %v835 = vunpack.c.l.b16 %v624
    %v836 = vunpack.c.h.b16 %v624
    %v837 = vunpack.c.l.b16 %v625
    %v838 = vunpack.c.h.b16 %v625
    %v839 = vunpack.c.l.b16 %v626
    %v840 = vunpack.c.h.b16 %v626
    %v841 = vunpack.c.l.b16 %v627
    %v842 = vunpack.c.h.b16 %v627
    %v843 = vunpack.c.l.b16 %v628
    %v844 = vunpack.c.h.b16 %v628
    %v845 = vunpack.c.l.b16 %v629
    %v846 = vunpack.c.h.b16 %v629
    %v847 = vunpack.c.l.b16 %v630
    %v848 = vunpack.c.h.b16 %v630
    %v849 = vunpack.c.l.b16 %v631
    %v850 = vunpack.c.h.b16 %v631
    %v851 = vunpack.c.l.b16 %v632
    %v852 = vunpack.c.h.b16 %v632
    %v853 = vunpack.c.l.b16 %v633
    %v854 = vunpack.c.h.b16 %v633
    %v855 = vunpack.c.l.b16 %v634
    %v856 = vunpack.c.h.b16 %v634
    %v857 = vunpack.c.l.b16 %v635
    %v858 = vunpack.c.h.b16 %v635
    %v859 = vunpack.c.l.b16 %v636
    %v860 = vunpack.c.h.b16 %v636
    %v861 = vunpack.c.l.b16 %v637
    %v862 = vunpack.c.h.b16 %v637
    %v863 = vunpack.c.l.b16 %v638
    %v864 = vunpack.c.h.b16 %v638
    %v865 = vunpack.c.l.b16 %v639
    %v866 = vunpack.c.h.b16 %v639
    %v867 = vunpack.c.l.b16 %v640
    %v868 = vunpack.c.h.b16 %v640
    %v869 = vunpack.c.l.b16 %v641
    %v870 = vunpack.c.h.b16 %v641
    %v871 = vunpack.c.l.b16 %v642
    %v872 = vunpack.c.h.b16 %v642
    %v873 = vunpack.c.l.b16 %v643
    %v874 = vunpack.c.h.b16 %v643
    %v875 = vpack.c.b16 %v751, %v747
    %v876 = vpack.c.b16 %v752, %v748
    %v877 = vpack.c.b16 %v753, %v749
    %v878 = vpack.c.b16 %v754, %v750
    %v879 = vpack.c.b16 %v759, %v755
    %v880 = vpack.c.b16 %v760, %v756
    %v881 = vpack.c.b16 %v761, %v757
    %v882 = vpack.c.b16 %v762, %v758
    %v883 = vpack.c.b16 %v767, %v763
    %v884 = vpack.c.b16 %v768, %v764
    %v885 = vpack.c.b16 %v769, %v765
    %v886 = vpack.c.b16 %v770, %v766
    %v887 = vpack.c.b16 %v775, %v771
    %v888 = vpack.c.b16 %v776, %v772
    %v889 = vpack.c.b16 %v777, %v773
    %v890 = vpack.c.b16 %v778, %v774
    %v891 = vpack.c.b16 %v783, %v779
    %v892 = vpack.c.b16 %v784, %v780
    %v893 = vpack.c.b16 %v785, %v781
    %v894 = vpack.c.b16 %v786, %v782
    %v895 = vpack.c.b16 %v791, %v787
    %v896 = vpack.c.b16 %v792, %v788
    %v897 = vpack.c.b16 %v793, %v789
    %v898 = vpack.c.b16 %v794, %v790
    %v899 = vpack.c.b16 %v799, %v795
    %v900 = vpack.c.b16 %v800, %v796
    %v901 = vpack.c.b16 %v801, %v797
    %v902 = vpack.c.b16 %v802, %v798
    %v903 = vpack.c.b16 %v807, %v803
    %v904 = vpack.c.b16 %v808, %v804
    %v905 = vpack.c.b16 %v809, %v805
    %v906 = vpack.c.b16 %v810, %v806
    %v907 = vpack.c.b16 %v815, %v811
    %v908 = vpack.c.b16 %v816, %v812
    %v909 = vpack.c.b16 %v817, %v813
    %v910 = vpack.c.b16 %v818, %v814
    %v911 = vpack.c.b16 %v823, %v819
    %v912 = vpack.c.b16 %v824, %v820
    %v913 = vpack.c.b16 %v825, %v821
    %v914 = vpack.c.b16 %v826, %v822
    %v915 = vpack.c.b16 %v831, %v827
    %v916 = vpack.c.b16 %v832, %v828
    %v917 = vpack.c.b16 %v833, %v829
    %v918 = vpack.c.b16 %v834, %v830
    %v919 = vpack.c.b16 %v839, %v835
    %v920 = vpack.c.b16 %v840, %v836
    %v921 = vpack.c.b16 %v841, %v837
    %v922 = vpack.c.b16 %v842, %v838
    %v923 = vpack.c.b16 %v847, %v843
    %v924 = vpack.c.b16 %v848, %v844
    %v925 = vpack.c.b16 %v849, %v845
    %v926 = vpack.c.b16 %v850, %v846
    %v927 = vpack.c.b16 %v855, %v851
    %v928 = vpack.c.b16 %v856, %v852
    %v929 = vpack.c.b16 %v857, %v853
    %v930 = vpack.c.b16 %v858, %v854
    %v931 = vpack.c.b16 %v863, %v859
    %v932 = vpack.c.b16 %v864, %v860
    %v933 = vpack.c.b16 %v865, %v861
    %v934 = vpack.c.b16 %v866, %v862
    %v935 = vpack.c.b16 %v871, %v867
    %v936 = vpack.c.b16 %v872, %v868
    %v937 = vpack.c.b16 %v873, %v869
    %v938 = vpack.c.b16 %v874, %v870
    %1003 = vmatprep.subr.bf16.mxu0 %v876
    %1004 = vmatpush1.bf16.msra.mxu0 %v875
    %1005 = vmatprep.subr.bf16.mxu0 %v880
    %1006 = vmatpush1.bf16.msra.mxu0 %v879
    %1007 = vmatprep.subr.bf16.mxu0 %v884
    %1008 = vmatpush1.bf16.msra.mxu0 %v883
    %1009 = vmatprep.subr.bf16.mxu0 %v888
    %1010 = vmatpush1.bf16.msra.mxu0 %v887
    %1011 = vmatprep.subr.bf16.mxu0 %v892
    %1012 = vmatpush1.bf16.msra.mxu0 %v891
    %1013 = vmatprep.subr.bf16.mxu0 %v896
    %1014 = vmatpush1.bf16.msra.mxu0 %v895
    %1015 = vmatprep.subr.bf16.mxu0 %v900
    %1016 = vmatpush1.bf16.msra.mxu0 %v899
    %1017 = vmatprep.subr.bf16.mxu0 %v904
    %1018 = vmatpush1.bf16.msra.mxu0 %v903
    %1019 = vmatprep.subr.bf16.mxu0 %v908
    %1020 = vmatpush1.bf16.msra.mxu0 %v907
    %1021 = vmatprep.subr.bf16.mxu0 %v912
    %1022 = vmatpush1.bf16.msra.mxu0 %v911
    %1023 = vmatprep.subr.bf16.mxu0 %v916
    %1024 = vmatpush1.bf16.msra.mxu0 %v915
    %1025 = vmatprep.subr.bf16.mxu0 %v920
    %1026 = vmatpush1.bf16.msra.mxu0 %v919
    %1027 = vmatprep.subr.bf16.mxu0 %v924
    %1028 = vmatpush1.bf16.msra.mxu0 %v923
    %1029 = vmatprep.subr.bf16.mxu0 %v928
    %1030 = vmatpush1.bf16.msra.mxu0 %v927
    %1031 = vmatprep.subr.bf16.mxu0 %v932
    %1032 = vmatpush1.bf16.msra.mxu0 %v931
    %1033 = vmatprep.subr.bf16.mxu0 %v936
    %1034 = vmatpush1.bf16.msra.mxu0 %v935
    %1035 = vmatprep.mubr.bf16.mxu0 %v579
    %1036 = vmatmul.mubr.bf16.gmra.mrb[0].mxu0 %v578
    %v1037 = vpop.f32.mrb[0].mxu0
    %v1038 = vadd.f32 %v670, %v1037
    %v1039 = vpop.f32.mrb[0].mxu0
    %v1040 = vadd.f32 %v674, %v1039
    %v1041 = vpop.f32.mrb[0].mxu0
    %v1042 = vpop.f32.mrb[0].mxu0
    %1043 = vdwg.mxu0
    %1044 = vmatprep.subr.bf16.mxu0 %v878
    %1045 = vmatpush1.bf16.msra.mxu0 %v877
    %1046 = vmatprep.subr.bf16.mxu0 %v882
    %1047 = vmatpush1.bf16.msra.mxu0 %v881
    %1048 = vmatprep.subr.bf16.mxu0 %v886
    %1049 = vmatpush1.bf16.msra.mxu0 %v885
    %1050 = vmatprep.subr.bf16.mxu0 %v890
    %1051 = vmatpush1.bf16.msra.mxu0 %v889
    %1052 = vmatprep.subr.bf16.mxu0 %v894
    %1053 = vmatpush1.bf16.msra.mxu0 %v893
    %1054 = vmatprep.subr.bf16.mxu0 %v898
    %1055 = vmatpush1.bf16.msra.mxu0 %v897
    %1056 = vmatprep.subr.bf16.mxu0 %v902
    %1057 = vmatpush1.bf16.msra.mxu0 %v901
    %1058 = vmatprep.subr.bf16.mxu0 %v906
    %1059 = vmatpush1.bf16.msra.mxu0 %v905
    %1060 = vmatprep.subr.bf16.mxu0 %v910
    %1061 = vmatpush1.bf16.msra.mxu0 %v909
    %1062 = vmatprep.subr.bf16.mxu0 %v914
    %1063 = vmatpush1.bf16.msra.mxu0 %v913
    %1064 = vmatprep.subr.bf16.mxu0 %v918
    %1065 = vmatpush1.bf16.msra.mxu0 %v917
    %1066 = vmatprep.subr.bf16.mxu0 %v922
    %1067 = vmatpush1.bf16.msra.mxu0 %v921
    %1068 = vmatprep.subr.bf16.mxu0 %v926
    %1069 = vmatpush1.bf16.msra.mxu0 %v925
    %1070 = vmatprep.subr.bf16.mxu0 %v930
    %1071 = vmatpush1.bf16.msra.mxu0 %v929
    %1072 = vmatprep.subr.bf16.mxu0 %v934
    %1073 = vmatpush1.bf16.msra.mxu0 %v933
    %1074 = vmatprep.subr.bf16.mxu0 %v938
    %1075 = vmatpush1.bf16.msra.mxu0 %v937
    %1076 = vmatprep.mubr.bf16.mxu0 %v579
    %1077 = vmatmul.mubr.bf16.gmra.mrb[0].mxu0 %v578
    %v1078 = vpop.f32.mrb[0].mxu0
    %v1079 = vadd.f32 %v678, %v1078
    %v1080 = vpop.f32.mrb[0].mxu0
    %v1081 = vadd.f32 %v682, %v1080
    %v1082 = vpop.f32.mrb[0].mxu0
    %v1083 = vpop.f32.mrb[0].mxu0
    %1084 = vdwg.mxu0
    %v1085 = vpack.c.bf16 %v1038, %v1038
    %v1086 = vpack.c.bf16 %v1040, %v1040
    %v1087 = vpack.c.bf16 %v1079, %v1079
    %v1088 = vpack.c.bf16 %v1081, %v1081
    %v1093 = vcombine.low %v1085, %v1086
    %v1094 = vcombine.low %v1087, %v1088
    %v1096 = vunpack.c.l.s4 1966171168
    %v1097 = vunpack.c.0.s8 %v1096
    %v1098 = vlaneseq
    %v1099 = vshrl.u32 %v1098, 7
    %v1100 = vsub.s32 %v1097, %v1099
    %v1101 = vrot.slane %v1093, %v1100
    %v1103 = vunpack.c.l.s4 1966171168
    %v1104 = vunpack.c.0.s8 %v1103
    %v1105 = vlaneseq
    %v1106 = vshrl.u32 %v1105, 7
    %v1107 = vsub.s32 %v1104, %v1106
    %v1108 = vrot.slane %v1094, %v1107
    %v1109 = vcombine.low %v1101, %v1108
    %v1111 = vunpack.c.l.s4 1966171168
    %v1112 = vunpack.c.0.s8 %v1111
    %v1113 = vlaneseq
    %v1114 = vshrl.u32 %v1113, 7
    %v1115 = vsub.s32 %v1112, %v1114
    %v1116 = vrot.slane %v1109, %v1115
    %1118 = vst [vmem:[%s7] sm:$0xf] %v1116
    // Predicated region
    $region34: #{tablenet_forward.17} parent=1 // pred_check
      _
    $region35: #{tablenet_forward.17} parent=1 // pred_check_branch
      %1120 = sbr.rel (0) target = $region37
    $region36: #{tablenet_forward.17} parent=1 // pred_region
      _
    $region37: #{tablenet_forward.17} parent=1 // pred_fallthru
      _
    // Predicated region
    $region38: #{tablenet_forward.17} parent=1 // pred_check
      _
    $region39: #{tablenet_forward.17} parent=1 // pred_check_branch
      %1122 = sbr.rel (0) target = $region41
    $region40: #{tablenet_forward.17} parent=1 // pred_region
      _
    $region41: #{tablenet_forward.17} parent=1 // pred_fallthru
      _
    %1123 = vsyncpa [#allocation3], 1

// kernel: tablenet_forward.11
$region0: #{tablenet_forward.11}
  #allocation0 [shape = 'u32[]', space=smem, size = 0x4, offset = 0x4, fixed_abs, tag = 'smem constant byte address 0x4 - core index']
  #allocation1 [shape = 'u32[144,128]{1,0:T(1,128)}', space=vmem, size = 0x12000, scoped, tag = 'internal scratch']
  %s0 = inlined_call_operand.vmem [shape: bf16[8,3], index: 0, kind: input, shape index: {}]
  %s1 = inlined_call_operand.vmem [shape: bf16[3,512], index: 1, kind: input, shape index: {}]
  %s2 = inlined_call_operand.vmem [shape: bf16[1,512], index: 2, kind: input, shape index: {}]
  %s3 = inlined_call_operand.vmem [shape: bf16[8,512], index: 3, kind: output, shape index: {}]
  %s4 = sld [smem:[#allocation0]]
  $region22: #{tablenet_forward.11} parent=0
    _
  %s6 = ssub.s32 1, %s4
  %s7 = scalar_select 0, %s6, %s4
  // Predicated region
  $region2: #{tablenet_forward.11} parent=0 // pred_check
    _
  $region3: #{tablenet_forward.11} parent=0 // pred_check_branch
    %9 = sbr.rel (0) target = $region5
  $region4: #{tablenet_forward.11} parent=0 // pred_region
    _
  $region5: #{tablenet_forward.11} parent=0 // pred_fallthru
    _
  // Predicated region
  $region6: #{tablenet_forward.11} parent=0 // pred_check
    _
  $region7: #{tablenet_forward.11} parent=0 // pred_check_branch
    %11 = sbr.rel (0) target = $region9
  $region8: #{tablenet_forward.11} parent=0 // pred_region
    _
  $region9: #{tablenet_forward.11} parent=0 // pred_fallthru
    _
  // Predicated region
  $region10: #{tablenet_forward.11} parent=0 // pred_check
    _
  $region11: #{tablenet_forward.11} parent=0 // pred_check_branch
    %13 = sbr.rel (0) target = $region13
  $region12: #{tablenet_forward.11} parent=0 // pred_region
    _
  $region13: #{tablenet_forward.11} parent=0 // pred_fallthru
    _
  %v15 = vld [vmem:[%s0] sm:$0xf]
  %v16 = vld [vmem:[%s1] sm:$0xff]
  %v17 = vld [vmem:[%s2] sm:$0xf]
  %v18 = vunpack.c.l.bf16 %v17
  %v20 = vlaneseq
  %v21 = vshrl.u32 %v20, 7
  %v22 = vsub.s32 0, %v21
  %v23 = vrot.slane %v18, %v22
  %v24 = vlaneseq
  %v25 = vshrl.u32 %v24, 7
  %v26 = vsub.s32 2, %v25
  %v27 = vrot.slane %v18, %v26
  %v28 = vlaneseq
  %v29 = vshrl.u32 %v28, 7
  %v30 = vsub.s32 4, %v29
  %v31 = vrot.slane %v18, %v30
  %v32 = vlaneseq
  %v33 = vshrl.u32 %v32, 7
  %v34 = vsub.s32 6, %v33
  %v35 = vrot.slane %v18, %v34
  %v40 = vlaneseq
  %v41 = vshrl.u32 %v40, 7
  %v42 = vsub.s32 0, %v41
  %v43 = vrot.slane %v23, %v42
  %v44 = vlaneseq
  %v45 = vshrl.u32 %v44, 7
  %v46 = vsub.s32 0, %v45
  %v47 = vrot.slane %v27, %v46
  %v48 = vlaneseq
  %v49 = vshrl.u32 %v48, 7
  %v50 = vsub.s32 0, %v49
  %v51 = vrot.slane %v31, %v50
  %v52 = vlaneseq
  %v53 = vshrl.u32 %v52, 7
  %v54 = vsub.s32 0, %v53
  %v55 = vrot.slane %v35, %v54
  %v57 = vcombine.high %v16, %v16
  %v59 = vunpack.c.l.s4 1983009808
  %v60 = vunpack.c.0.s8 %v59
  %v61 = vlaneseq
  %v62 = vshrl.u32 %v61, 7
  %v63 = vsub.s32 %v60, %v62
  %v64 = vrot.slane %v16, %v63
  %v66 = vunpack.c.l.s4 1983009808
  %v67 = vunpack.c.0.s8 %v66
  %v68 = vlaneseq
  %v69 = vshrl.u32 %v68, 7
  %v70 = vsub.s32 %v67, %v69
  %v71 = vrot.slane %v57, %v70
  %v72 = vcombine.high %v64, %v64
  %v73 = vcombine.high %v71, %v71
  %vm74 = vcmask 23552
  %v76 = vsel %vm74, %v15, 0
  %vm78 = vcmask 1040384
  %vm79 = vcmask 1041408
  %v80 = vsel %vm78, 4294967295, 65535
  %v81 = vsel %vm79, %v80, 0
  %v83 = vand.u32 %v64, %v81
  %v86 = vand.u32 %v72, %v81
  %v89 = vand.u32 %v71, %v81
  %v92 = vand.u32 %v73, %v81
  %94 = vmatprep.subr.bf16.mxu0 %v86
  %95 = vmatpush1.bf16.msra.mxu0 %v83
  %96 = vmatprep.subr.bf16.mxu0 0
  %97 = vmatpush1.bf16.msra.mxu0 0
  %98 = vmatprep.subr.bf16.mxu0 0
  %99 = vmatpush1.bf16.msra.mxu0 0
  %100 = vmatprep.subr.bf16.mxu0 0
  %101 = vmatpush1.bf16.msra.mxu0 0
  %102 = vmatprep.subr.bf16.mxu0 0
  %103 = vmatpush1.bf16.msra.mxu0 0
  %104 = vmatprep.subr.bf16.mxu0 0
  %105 = vmatpush1.bf16.msra.mxu0 0
  %106 = vmatprep.subr.bf16.mxu0 0
  %107 = vmatpush1.bf16.msra.mxu0 0
  %108 = vmatprep.subr.bf16.mxu0 0
  %109 = vmatpush1.bf16.msra.mxu0 0
  %110 = vmatprep.subr.bf16.mxu0 0
  %111 = vmatpush1.bf16.msra.mxu0 0
  %112 = vmatprep.subr.bf16.mxu0 0
  %113 = vmatpush1.bf16.msra.mxu0 0
  %114 = vmatprep.subr.bf16.mxu0 0
  %115 = vmatpush1.bf16.msra.mxu0 0
  %116 = vmatprep.subr.bf16.mxu0 0
  %117 = vmatpush1.bf16.msra.mxu0 0
  %118 = vmatprep.subr.bf16.mxu0 0
  %119 = vmatpush1.bf16.msra.mxu0 0
  %120 = vmatprep.subr.bf16.mxu0 0
  %121 = vmatpush1.bf16.msra.mxu0 0
  %122 = vmatprep.subr.bf16.mxu0 0
  %123 = vmatpush1.bf16.msra.mxu0 0
  %124 = vmatprep.subr.bf16.mxu0 0
  %125 = vmatpush1.bf16.msra.mxu0 0
  %126 = vmatprep.mubr.bf16.mxu0 0
  %127 = vmatmul.mubr.bf16.gmra.mrb[0].mxu0 %v76
  %v128 = vpop.f32.mrb[0].mxu0
  %v129 = vadd.f32 %v43, %v128
  %v130 = vpop.f32.mrb[0].mxu0
  %v131 = vadd.f32 %v47, %v130
  %v132 = vpop.f32.mrb[0].mxu0
  %v133 = vpop.f32.mrb[0].mxu0
  %134 = vdwg.mxu0
  %135 = vmatprep.subr.bf16.mxu0 %v92
  %136 = vmatpush1.bf16.msra.mxu0 %v89
  %137 = vmatprep.subr.bf16.mxu0 0
  %138 = vmatpush1.bf16.msra.mxu0 0
  %139 = vmatprep.subr.bf16.mxu0 0
  %140 = vmatpush1.bf16.msra.mxu0 0
  %141 = vmatprep.subr.bf16.mxu0 0
  %142 = vmatpush1.bf16.msra.mxu0 0
  %143 = vmatprep.subr.bf16.mxu0 0
  %144 = vmatpush1.bf16.msra.mxu0 0
  %145 = vmatprep.subr.bf16.mxu0 0
  %146 = vmatpush1.bf16.msra.mxu0 0
  %147 = vmatprep.subr.bf16.mxu0 0
  %148 = vmatpush1.bf16.msra.mxu0 0
  %149 = vmatprep.subr.bf16.mxu0 0
  %150 = vmatpush1.bf16.msra.mxu0 0
  %151 = vmatprep.subr.bf16.mxu0 0
  %152 = vmatpush1.bf16.msra.mxu0 0
  %153 = vmatprep.subr.bf16.mxu0 0
  %154 = vmatpush1.bf16.msra.mxu0 0
  %155 = vmatprep.subr.bf16.mxu0 0
  %156 = vmatpush1.bf16.msra.mxu0 0
  %157 = vmatprep.subr.bf16.mxu0 0
  %158 = vmatpush1.bf16.msra.mxu0 0
  %159 = vmatprep.subr.bf16.mxu0 0
  %160 = vmatpush1.bf16.msra.mxu0 0
  %161 = vmatprep.subr.bf16.mxu0 0
  %162 = vmatpush1.bf16.msra.mxu0 0
  %163 = vmatprep.subr.bf16.mxu0 0
  %164 = vmatpush1.bf16.msra.mxu0 0
  %165 = vmatprep.subr.bf16.mxu0 0
  %166 = vmatpush1.bf16.msra.mxu0 0
  %167 = vmatprep.mubr.bf16.mxu0 0
  %168 = vmatmul.mubr.bf16.gmra.mrb[0].mxu0 %v76
  %v169 = vpop.f32.mrb[0].mxu0
  %v170 = vadd.f32 %v51, %v169
  %v171 = vpop.f32.mrb[0].mxu0
  %v172 = vadd.f32 %v55, %v171
  %v173 = vpop.f32.mrb[0].mxu0
  %v174 = vpop.f32.mrb[0].mxu0
  %175 = vdwg.mxu0
  %v176 = vmax.f32 %v129, 0.0
  %v177 = vmax.f32 %v131, 0.0
  %v178 = vmax.f32 %v170, 0.0
  %v179 = vmax.f32 %v172, 0.0
  %v180 = vpack.c.bf16 %v176, %v176
  %v181 = vpack.c.bf16 %v177, %v177
  %v182 = vpack.c.bf16 %v178, %v178
  %v183 = vpack.c.bf16 %v179, %v179
  %v188 = vunpack.c.l.b16 %v180
  %v189 = vunpack.c.l.b16 %v181
  %v190 = vunpack.c.l.b16 %v182
  %v191 = vunpack.c.l.b16 %v183
  %v192 = vpack.c.b16 %v189, %v188
  %v193 = vpack.c.b16 %v191, %v190
  %196 = vst [vmem:[%s3] sm:$0xff] %v192
  %197 = vst [vmem:[%s3 + $0x8] sm:$0xff] %v193
  // Predicated region
  $region14: #{tablenet_forward.11} parent=0 // pred_check
    _
  $region15: #{tablenet_forward.11} parent=0 // pred_check_branch
    %199 = sbr.rel (0) target = $region17
  $region16: #{tablenet_forward.11} parent=0 // pred_region
    _
  $region17: #{tablenet_forward.11} parent=0 // pred_fallthru
    _
  // Predicated region
  $region18: #{tablenet_forward.11} parent=0 // pred_check
    _
  $region19: #{tablenet_forward.11} parent=0 // pred_check_branch
    %201 = sbr.rel (0) target = $region21
  $region20: #{tablenet_forward.11} parent=0 // pred_region
    _
  $region21: #{tablenet_forward.11} parent=0 // pred_fallthru
    _

// kernel: tablenet_forward.10
$region0: #{tablenet_forward.10}
  #allocation0 [shape = 'u32[]', space=smem, size = 0x4, offset = 0x4, fixed_abs, tag = 'smem constant byte address 0x4 - core index']
  #allocation1 [shape = 'u32[144,128]{1,0:T(1,128)}', space=vmem, size = 0x12000, scoped, tag = 'internal scratch']
  %s0 = inlined_call_operand.vmem [shape: bf16[32,3], index: 0, kind: input, shape index: {}]
  %s1 = inlined_call_operand.vmem [shape: bf16[3,256], index: 1, kind: input, shape index: {}]
  %s2 = inlined_call_operand.vmem [shape: bf16[1,256], index: 2, kind: input, shape index: {}]
  %s3 = inlined_call_operand.vmem [shape: bf16[32,256], index: 3, kind: output, shape index: {}]
  %s4 = sld [smem:[#allocation0]]
  $region22: #{tablenet_forward.10} parent=0
    _
  %s6 = ssub.s32 1, %s4
  %s7 = scalar_select 0, %s6, %s4
  // Predicated region
  $region2: #{tablenet_forward.10} parent=0 // pred_check
    _
  $region3: #{tablenet_forward.10} parent=0 // pred_check_branch
    %9 = sbr.rel (0) target = $region5
  $region4: #{tablenet_forward.10} parent=0 // pred_region
    _
  $region5: #{tablenet_forward.10} parent=0 // pred_fallthru
    _
  // Predicated region
  $region6: #{tablenet_forward.10} parent=0 // pred_check
    _
  $region7: #{tablenet_forward.10} parent=0 // pred_check_branch
    %11 = sbr.rel (0) target = $region9
  $region8: #{tablenet_forward.10} parent=0 // pred_region
    _
  $region9: #{tablenet_forward.10} parent=0 // pred_fallthru
    _
  // Predicated region
  $region10: #{tablenet_forward.10} parent=0 // pred_check
    _
  $region11: #{tablenet_forward.10} parent=0 // pred_check_branch
    %13 = sbr.rel (0) target = $region13
  $region12: #{tablenet_forward.10} parent=0 // pred_region
    _
  $region13: #{tablenet_forward.10} parent=0 // pred_fallthru
    _
  %v15 = vld [vmem:[%s0] sm:$0xf]
  %v16 = vld [vmem:[%s0 + $0x4] sm:$0xf]
  %v17 = vld [vmem:[%s0 + $0x8] sm:$0xf]
  %v18 = vld [vmem:[%s0 + $0xc] sm:$0xf]
  %v19 = vld [vmem:[%s1] sm:$0xf]
  %v20 = vld [vmem:[%s2] sm:$0x3]
  %v21 = vunpack.c.l.bf16 %v20
  %v23 = vlaneseq
  %v24 = vshrl.u32 %v23, 7
  %v25 = vsub.s32 0, %v24
  %v26 = vrot.slane %v21, %v25
  %v27 = vlaneseq
  %v28 = vshrl.u32 %v27, 7
  %v29 = vsub.s32 2, %v28
  %v30 = vrot.slane %v21, %v29
  %v33 = vlaneseq
  %v34 = vshrl.u32 %v33, 7
  %v35 = vsub.s32 0, %v34
  %v36 = vrot.slane %v26, %v35
  %v37 = vlaneseq
  %v38 = vshrl.u32 %v37, 7
  %v39 = vsub.s32 0, %v38
  %v40 = vrot.slane %v30, %v39
  %v45 = vunpack.c.l.b16 %v15
  %v46 = vunpack.c.l.b16 %v16
  %v47 = vunpack.c.l.b16 %v17
  %v48 = vunpack.c.l.b16 %v18
  %v49 = vpack.c.b16 %v46, %v45
  %v50 = vpack.c.b16 %v48, %v47
  %v53 = vunpack.c.l.s4 1983009808
  %v54 = vunpack.c.0.s8 %v53
  %v55 = vlaneseq
  %v56 = vshrl.u32 %v55, 7
  %v57 = vsub.s32 %v54, %v56
  %v58 = vrot.slane %v19, %v57
  %v59 = vcombine.high %v58, %v58
  %vm60 = vcmask 23552
  %v62 = vsel %vm60, %v49, 0
  %v65 = vsel %vm60, %v50, 0
  %vm67 = vcmask 1040384
  %vm68 = vcmask 1041408
  %v69 = vsel %vm67, 4294967295, 65535
  %v70 = vsel %vm68, %v69, 0
  %v72 = vand.u32 %v58, %v70
  %v75 = vand.u32 %v59, %v70
  %77 = vmatprep.subr.bf16.mxu0 %v75
  %78 = vmatpush1.bf16.msra.mxu0 %v72
  %79 = vmatprep.subr.bf16.mxu0 0
  %80 = vmatpush1.bf16.msra.mxu0 0
  %81 = vmatprep.subr.bf16.mxu0 0
  %82 = vmatpush1.bf16.msra.mxu0 0
  %83 = vmatprep.subr.bf16.mxu0 0
  %84 = vmatpush1.bf16.msra.mxu0 0
  %85 = vmatprep.subr.bf16.mxu0 0
  %86 = vmatpush1.bf16.msra.mxu0 0
  %87 = vmatprep.subr.bf16.mxu0 0
  %88 = vmatpush1.bf16.msra.mxu0 0
  %89 = vmatprep.subr.bf16.mxu0 0
  %90 = vmatpush1.bf16.msra.mxu0 0
  %91 = vmatprep.subr.bf16.mxu0 0
  %92 = vmatpush1.bf16.msra.mxu0 0
  %93 = vmatprep.subr.bf16.mxu0 0
  %94 = vmatpush1.bf16.msra.mxu0 0
  %95 = vmatprep.subr.bf16.mxu0 0
  %96 = vmatpush1.bf16.msra.mxu0 0
  %97 = vmatprep.subr.bf16.mxu0 0
  %98 = vmatpush1.bf16.msra.mxu0 0
  %99 = vmatprep.subr.bf16.mxu0 0
  %100 = vmatpush1.bf16.msra.mxu0 0
  %101 = vmatprep.subr.bf16.mxu0 0
  %102 = vmatpush1.bf16.msra.mxu0 0
  %103 = vmatprep.subr.bf16.mxu0 0
  %104 = vmatpush1.bf16.msra.mxu0 0
  %105 = vmatprep.subr.bf16.mxu0 0
  %106 = vmatpush1.bf16.msra.mxu0 0
  %107 = vmatprep.subr.bf16.mxu0 0
  %108 = vmatpush1.bf16.msra.mxu0 0
  %109 = vmatprep.mubr.bf16.mxu0 0
  %110 = vmatmul.mubr.bf16.gmra.mrb[0].mxu0 %v62
  %v111 = vpop.f32.mrb[0].mxu0
  %v112 = vadd.f32 %v36, %v111
  %v113 = vpop.f32.mrb[0].mxu0
  %v114 = vadd.f32 %v40, %v113
  %v115 = vpop.f32.mrb[0].mxu0
  %v116 = vadd.f32 %v36, %v115
  %v117 = vpop.f32.mrb[0].mxu0
  %v118 = vadd.f32 %v40, %v117
  %119 = vmatprep.mubr.bf16.mxu0 0
  %120 = vmatmul.mubr.bf16.gmra.mrb[0].mxu0 %v65
  %v121 = vpop.f32.mrb[0].mxu0
  %v122 = vadd.f32 %v36, %v121
  %v123 = vpop.f32.mrb[0].mxu0
  %v124 = vadd.f32 %v40, %v123
  %v125 = vpop.f32.mrb[0].mxu0
  %v126 = vadd.f32 %v36, %v125
  %v127 = vpop.f32.mrb[0].mxu0
  %v128 = vadd.f32 %v40, %v127
  %129 = vdwg.mxu0
  %v130 = vmax.f32 %v112, 0.0
  %v131 = vmax.f32 %v114, 0.0
  %v132 = vmax.f32 %v116, 0.0
  %v133 = vmax.f32 %v118, 0.0
  %v134 = vmax.f32 %v122, 0.0
  %v135 = vmax.f32 %v124, 0.0
  %v136 = vmax.f32 %v126, 0.0
  %v137 = vmax.f32 %v128, 0.0
  %v138 = vpack.c.bf16 %v132, %v130
  %v139 = vpack.c.bf16 %v133, %v131
  %v140 = vpack.c.bf16 %v136, %v134
  %v141 = vpack.c.bf16 %v137, %v135
  %v146 = vunpack.c.l.b16 %v138
  %v147 = vunpack.c.l.b16 %v139
  %v148 = vunpack.c.h.b16 %v138
  %v149 = vunpack.c.h.b16 %v139
  %v150 = vunpack.c.l.b16 %v140
  %v151 = vunpack.c.l.b16 %v141
  %v152 = vunpack.c.h.b16 %v140
  %v153 = vunpack.c.h.b16 %v141
  %v154 = vpack.c.b16 %v147, %v146
  %v155 = vpack.c.b16 %v149, %v148
  %v156 = vpack.c.b16 %v151, %v150
  %v157 = vpack.c.b16 %v153, %v152
  %162 = vst [vmem:[%s3] sm:$0xff] %v154
  %163 = vst [vmem:[%s3 + $0x8] sm:$0xff] %v155
  %164 = vst [vmem:[%s3 + $0x10] sm:$0xff] %v156
  %165 = vst [vmem:[%s3 + $0x18] sm:$0xff] %v157
  // Predicated region
  $region14: #{tablenet_forward.10} parent=0 // pred_check
    _
  $region15: #{tablenet_forward.10} parent=0 // pred_check_branch
    %167 = sbr.rel (0) target = $region17
  $region16: #{tablenet_forward.10} parent=0 // pred_region
    _
  $region17: #{tablenet_forward.10} parent=0 // pred_fallthru
    _
  // Predicated region
  $region18: #{tablenet_forward.10} parent=0 // pred_check
    _
  $region19: #{tablenet_forward.10} parent=0 // pred_check_branch
    %169 = sbr.rel (0) target = $region21
  $region20: #{tablenet_forward.10} parent=0 // pred_region
    _
  $region21: #{tablenet_forward.10} parent=0 // pred_fallthru
    _

// kernel: tablenet_forward.18
$region0: #{tablenet_forward.18}
  #allocation0 [shape = 'u32[]', space=smem, size = 0x4, offset = 0x4, fixed_abs, tag = 'smem constant byte address 0x4 - core index']
  #allocation1 [shape = 'u32[144,128]{1,0:T(1,128)}', space=vmem, size = 0x12000, scoped, tag = 'internal scratch']
  %s0 = inlined_call_operand.vmem [shape: bf16[8,128], index: 0, kind: input, shape index: {}]
  %s1 = inlined_call_operand.vmem [shape: bf16[8,512], index: 1, kind: input, shape index: {}]
  %s2 = inlined_call_operand.vmem [shape: bf16[128,1024], index: 2, kind: input, shape index: {}]
  %s3 = inlined_call_operand.vmem [shape: bf16[512,1024], index: 3, kind: input, shape index: {}]
  %s4 = inlined_call_operand.vmem [shape: bf16[1,1024], index: 4, kind: input, shape index: {}]
  %s5 = inlined_call_operand.vmem [shape: bf16[8,1024], index: 5, kind: output, shape index: {}]
  %s6 = sld [smem:[#allocation0]]
  $region30: #{tablenet_forward.18} parent=0
    _
  %s8 = ssub.s32 1, %s6
  %s9 = scalar_select 0, %s8, %s6
  // Predicated region
  $region2: #{tablenet_forward.18} parent=0 // pred_check
    _
  $region3: #{tablenet_forward.18} parent=0 // pred_check_branch
    %11 = sbr.rel (0) target = $region5
  $region4: #{tablenet_forward.18} parent=0 // pred_region
    _
  $region5: #{tablenet_forward.18} parent=0 // pred_fallthru
    _
  // Predicated region
  $region6: #{tablenet_forward.18} parent=0 // pred_check
    _
  $region7: #{tablenet_forward.18} parent=0 // pred_check_branch
    %13 = sbr.rel (0) target = $region9
  $region8: #{tablenet_forward.18} parent=0 // pred_region
    _
  $region9: #{tablenet_forward.18} parent=0 // pred_fallthru
    _
  // Predicated region
  $region10: #{tablenet_forward.18} parent=0 // pred_check
    _
  $region11: #{tablenet_forward.18} parent=0 // pred_check_branch
    %15 = sbr.rel (0) target = $region13
  $region12: #{tablenet_forward.18} parent=0 // pred_region
    _
  $region13: #{tablenet_forward.18} parent=0 // pred_fallthru
    _
  // Predicated region
  $region14: #{tablenet_forward.18} parent=0 // pred_check
    _
  $region15: #{tablenet_forward.18} parent=0 // pred_check_branch
    %17 = sbr.rel (0) target = $region17
  $region16: #{tablenet_forward.18} parent=0 // pred_region
    _
  $region17: #{tablenet_forward.18} parent=0 // pred_fallthru
    _
  // Predicated region
  $region18: #{tablenet_forward.18} parent=0 // pred_check
    _
  $region19: #{tablenet_forward.18} parent=0 // pred_check_branch
    %19 = sbr.rel (0) target = $region21
  $region20: #{tablenet_forward.18} parent=0 // pred_region
    _
  $region21: #{tablenet_forward.18} parent=0 // pred_fallthru
    _
  %v21 = vld [vmem:[%s0] sm:$0xf]
  %v22 = vld [vmem:[%s2] sm:$0xff]
  %v23 = vld [vmem:[%s2 + $0x8] sm:$0xff]
  %v24 = vld [vmem:[%s2 + $0x10] sm:$0xff]
  %v25 = vld [vmem:[%s2 + $0x18] sm:$0xff]
  %v26 = vld [vmem:[%s2 + $0x20] sm:$0xff]
  %v27 = vld [vmem:[%s2 + $0x28] sm:$0xff]
  %v28 = vld [vmem:[%s2 + $0x30] sm:$0xff]
  %v29 = vld [vmem:[%s2 + $0x38] sm:$0xff]
  %v30 = vld [vmem:[%s2 + $0x40] sm:$0xff]
  %v31 = vld [vmem:[%s2 + $0x48] sm:$0xff]
  %v32 = vld [vmem:[%s2 + $0x50] sm:$0xff]
  %v33 = vld [vmem:[%s2 + $0x58] sm:$0xff]
  %v34 = vld [vmem:[%s2 + $0x60] sm:$0xff]
  %v35 = vld [vmem:[%s2 + $0x68] sm:$0xff]
  %v36 = vld [vmem:[%s2 + $0x70] sm:$0xff]
  %v37 = vld [vmem:[%s2 + $0x78] sm:$0xff]
  %v38 = vld [vmem:[%s2 + $0x80] sm:$0xff]
  %v39 = vld [vmem:[%s2 + $0x88] sm:$0xff]
  %v40 = vld [vmem:[%s2 + $0x90] sm:$0xff]
  %v41 = vld [vmem:[%s2 + $0x98] sm:$0xff]
  %v42 = vld [vmem:[%s2 + $0xa0] sm:$0xff]
  %v43 = vld [vmem:[%s2 + $0xa8] sm:$0xff]
  %v44 = vld [vmem:[%s2 + $0xb0] sm:$0xff]
  %v45 = vld [vmem:[%s2 + $0xb8] sm:$0xff]
  %v46 = vld [vmem:[%s2 + $0xc0] sm:$0xff]
  %v47 = vld [vmem:[%s2 + $0xc8] sm:$0xff]
  %v48 = vld [vmem:[%s2 + $0xd0] sm:$0xff]
  %v49 = vld [vmem:[%s2 + $0xd8] sm:$0xff]
  %v50 = vld [vmem:[%s2 + $0xe0] sm:$0xff]
  %v51 = vld [vmem:[%s2 + $0xe8] sm:$0xff]
  %v52 = vld [vmem:[%s2 + $0xf0] sm:$0xff]
  %v53 = vld [vmem:[%s2 + $0xf8] sm:$0xff]
  %v54 = vld [vmem:[%s2 + $0x100] sm:$0xff]
  %v55 = vld [vmem:[%s2 + $0x108] sm:$0xff]
  %v56 = vld [vmem:[%s2 + $0x110] sm:$0xff]
  %v57 = vld [vmem:[%s2 + $0x118] sm:$0xff]
  %v58 = vld [vmem:[%s2 + $0x120] sm:$0xff]
  %v59 = vld [vmem:[%s2 + $0x128] sm:$0xff]
  %v60 = vld [vmem:[%s2 + $0x130] sm:$0xff]
  %v61 = vld [vmem:[%s2 + $0x138] sm:$0xff]
  %v62 = vld [vmem:[%s2 + $0x140] sm:$0xff]
  %v63 = vld [vmem:[%s2 + $0x148] sm:$0xff]
  %v64 = vld [vmem:[%s2 + $0x150] sm:$0xff]
  %v65 = vld [vmem:[%s2 + $0x158] sm:$0xff]
  %v66 = vld [vmem:[%s2 + $0x160] sm:$0xff]
  %v67 = vld [vmem:[%s2 + $0x168] sm:$0xff]
  %v68 = vld [vmem:[%s2 + $0x170] sm:$0xff]
  %v69 = vld [vmem:[%s2 + $0x178] sm:$0xff]
  %v70 = vld [vmem:[%s2 + $0x180] sm:$0xff]
  %v71 = vld [vmem:[%s2 + $0x188] sm:$0xff]
  %v72 = vld [vmem:[%s2 + $0x190] sm:$0xff]
  %v73 = vld [vmem:[%s2 + $0x198] sm:$0xff]
  %v74 = vld [vmem:[%s2 + $0x1a0] sm:$0xff]
  %v75 = vld [vmem:[%s2 + $0x1a8] sm:$0xff]
  %v76 = vld [vmem:[%s2 + $0x1b0] sm:$0xff]
  %v77 = vld [vmem:[%s2 + $0x1b8] sm:$0xff]
  %v78 = vld [vmem:[%s2 + $0x1c0] sm:$0xff]
  %v79 = vld [vmem:[%s2 + $0x1c8] sm:$0xff]
  %v80 = vld [vmem:[%s2 + $0x1d0] sm:$0xff]
  %v81 = vld [vmem:[%s2 + $0x1d8] sm:$0xff]
  %v82 = vld [vmem:[%s2 + $0x1e0] sm:$0xff]
  %v83 = vld [vmem:[%s2 + $0x1e8] sm:$0xff]
  %v84 = vld [vmem:[%s2 + $0x1f0] sm:$0xff]
  %v85 = vld [vmem:[%s2 + $0x1f8] sm:$0xff]
  %v86 = vld [vmem:[%s1] sm:$0xff]
  %v87 = vld [vmem:[%s1 + $0x8] sm:$0xff]
  %v88 = vld [vmem:[%s3] sm:$0xff]
  %v89 = vld [vmem:[%s3 + $0x8] sm:$0xff]
  %v90 = vld [vmem:[%s3 + $0x10] sm:$0xff]
  %v91 = vld [vmem:[%s3 + $0x18] sm:$0xff]
  %v92 = vld [vmem:[%s3 + $0x20] sm:$0xff]
  %v93 = vld [vmem:[%s3 + $0x28] sm:$0xff]
  %v94 = vld [vmem:[%s3 + $0x30] sm:$0xff]
  %v95 = vld [vmem:[%s3 + $0x38] sm:$0xff]
  %v96 = vld [vmem:[%s3 + $0x40] sm:$0xff]
  %v97 = vld [vmem:[%s3 + $0x48] sm:$0xff]
  %v98 = vld [vmem:[%s3 + $0x50] sm:$0xff]
  %v99 = vld [vmem:[%s3 + $0x58] sm:$0xff]
  %v100 = vld [vmem:[%s3 + $0x60] sm:$0xff]
  %v101 = vld [vmem:[%s3 + $0x68] sm:$0xff]
  %v102 = vld [vmem:[%s3 + $0x70] sm:$0xff]
  %v103 = vld [vmem:[%s3 + $0x78] sm:$0xff]
  %v104 = vld [vmem:[%s3 + $0x80] sm:$0xff]
  %v105 = vld [vmem:[%s3 + $0x88] sm:$0xff]
  %v106 = vld [vmem:[%s3 + $0x90] sm:$0xff]
  %v107 = vld [vmem:[%s3 + $0x98] sm:$0xff]
  %v108 = vld [vmem:[%s3 + $0xa0] sm:$0xff]
  %v109 = vld [vmem:[%s3 + $0xa8] sm:$0xff]
  %v110 = vld [vmem:[%s3 + $0xb0] sm:$0xff]
  %v111 = vld [vmem:[%s3 + $0xb8] sm:$0xff]
  %v112 = vld [vmem:[%s3 + $0xc0] sm:$0xff]
  %v113 = vld [vmem:[%s3 + $0xc8] sm:$0xff]
  %v114 = vld [vmem:[%s3 + $0xd0] sm:$0xff]
  %v115 = vld [vmem:[%s3 + $0xd8] sm:$0xff]
  %v116 = vld [vmem:[%s3 + $0xe0] sm:$0xff]
  %v117 = vld [vmem:[%s3 + $0xe8] sm:$0xff]
  %v118 = vld [vmem:[%s3 + $0xf0] sm:$0xff]
  %v119 = vld [vmem:[%s3 + $0xf8] sm:$0xff]
  %v120 = vld [vmem:[%s3 + $0x100] sm:$0xff]
  %v121 = vld [vmem:[%s3 + $0x108] sm:$0xff]
  %v122 = vld [vmem:[%s3 + $0x110] sm:$0xff]
  %v123 = vld [vmem:[%s3 + $0x118] sm:$0xff]
  %v124 = vld [vmem:[%s3 + $0x120] sm:$0xff]
  %v125 = vld [vmem:[%s3 + $0x128] sm:$0xff]
  %v126 = vld [vmem:[%s3 + $0x130] sm:$0xff]
  %v127 = vld [vmem:[%s3 + $0x138] sm:$0xff]
  %v128 = vld [vmem:[%s3 + $0x140] sm:$0xff]
  %v129 = vld [vmem:[%s3 + $0x148] sm:$0xff]
  %v130 = vld [vmem:[%s3 + $0x150] sm:$0xff]
  %v131 = vld [vmem:[%s3 + $0x158] sm:$0xff]
  %v132 = vld [vmem:[%s3 + $0x160] sm:$0xff]
  %v133 = vld [vmem:[%s3 + $0x168] sm:$0xff]
  %v134 = vld [vmem:[%s3 + $0x170] sm:$0xff]
  %v135 = vld [vmem:[%s3 + $0x178] sm:$0xff]
  %v136 = vld [vmem:[%s3 + $0x180] sm:$0xff]
  %v137 = vld [vmem:[%s3 + $0x188] sm:$0xff]
  %v138 = vld [vmem:[%s3 + $0x190] sm:$0xff]
  %v139 = vld [vmem:[%s3 + $0x198] sm:$0xff]
  %v140 = vld [vmem:[%s3 + $0x1a0] sm:$0xff]
  %v141 = vld [vmem:[%s3 + $0x1a8] sm:$0xff]
  %v142 = vld [vmem:[%s3 + $0x1b0] sm:$0xff]
  %v143 = vld [vmem:[%s3 + $0x1b8] sm:$0xff]
  %v144 = vld [vmem:[%s3 + $0x1c0] sm:$0xff]
  %v145 = vld [vmem:[%s3 + $0x1c8] sm:$0xff]
  %v146 = vld [vmem:[%s3 + $0x1d0] sm:$0xff]
  %v147 = vld [vmem:[%s3 + $0x1d8] sm:$0xff]
  %v148 = vld [vmem:[%s3 + $0x1e0] sm:$0xff]
  %v149 = vld [vmem:[%s3 + $0x1e8] sm:$0xff]
  %v150 = vld [vmem:[%s3 + $0x1f0] sm:$0xff]
  %v151 = vld [vmem:[%s3 + $0x1f8] sm:$0xff]
  %v152 = vld [vmem:[%s3 + $0x200] sm:$0xff]
  %v153 = vld [vmem:[%s3 + $0x208] sm:$0xff]
  %v154 = vld [vmem:[%s3 + $0x210] sm:$0xff]
  %v155 = vld [vmem:[%s3 + $0x218] sm:$0xff]
  %v156 = vld [vmem:[%s3 + $0x220] sm:$0xff]
  %v157 = vld [vmem:[%s3 + $0x228] sm:$0xff]
  %v158 = vld [vmem:[%s3 + $0x230] sm:$0xff]
  %v159 = vld [vmem:[%s3 + $0x238] sm:$0xff]
  %v160 = vld [vmem:[%s3 + $0x240] sm:$0xff]
  %v161 = vld [vmem:[%s3 + $0x248] sm:$0xff]
  %v162 = vld [vmem:[%s3 + $0x250] sm:$0xff]
  %v163 = vld [vmem:[%s3 + $0x258] sm:$0xff]
  %v164 = vld [vmem:[%s3 + $0x260] sm:$0xff]
  %v165 = vld [vmem:[%s3 + $0x268] sm:$0xff]
  %v166 = vld [vmem:[%s3 + $0x270] sm:$0xff]
  %v167 = vld [vmem:[%s3 + $0x278] sm:$0xff]
  %v168 = vld [vmem:[%s3 + $0x280] sm:$0xff]
  %v169 = vld [vmem:[%s3 + $0x288] sm:$0xff]
  %v170 = vld [vmem:[%s3 + $0x290] sm:$0xff]
  %v171 = vld [vmem:[%s3 + $0x298] sm:$0xff]
  %v172 = vld [vmem:[%s3 + $0x2a0] sm:$0xff]
  %v173 = vld [vmem:[%s3 + $0x2a8] sm:$0xff]
  %v174 = vld [vmem:[%s3 + $0x2b0] sm:$0xff]
  %v175 = vld [vmem:[%s3 + $0x2b8] sm:$0xff]
  %v176 = vld [vmem:[%s3 + $0x2c0] sm:$0xff]
  %v177 = vld [vmem:[%s3 + $0x2c8] sm:$0xff]
  %v178 = vld [vmem:[%s3 + $0x2d0] sm:$0xff]
  %v179 = vld [vmem:[%s3 + $0x2d8] sm:$0xff]
  %v180 = vld [vmem:[%s3 + $0x2e0] sm:$0xff]
  %v181 = vld [vmem:[%s3 + $0x2e8] sm:$0xff]
  %v182 = vld [vmem:[%s3 + $0x2f0] sm:$0xff]
  %v183 = vld [vmem:[%s3 + $0x2f8] sm:$0xff]
  %v184 = vld [vmem:[%s3 + $0x300] sm:$0xff]
  %v185 = vld [vmem:[%s3 + $0x308] sm:$0xff]
  %v186 = vld [vmem:[%s3 + $0x310] sm:$0xff]
  %v187 = vld [vmem:[%s3 + $0x318] sm:$0xff]
  %v188 = vld [vmem:[%s3 + $0x320] sm:$0xff]
  %v189 = vld [vmem:[%s3 + $0x328] sm:$0xff]
  %v190 = vld [vmem:[%s3 + $0x330] sm:$0xff]
  %v191 = vld [vmem:[%s3 + $0x338] sm:$0xff]
  %v192 = vld [vmem:[%s3 + $0x340] sm:$0xff]
  %v193 = vld [vmem:[%s3 + $0x348] sm:$0xff]
  %v194 = vld [vmem:[%s3 + $0x350] sm:$0xff]
  %v195 = vld [vmem:[%s3 + $0x358] sm:$0xff]
  %v196 = vld [vmem:[%s3 + $0x360] sm:$0xff]
  %v197 = vld [vmem:[%s3 + $0x368] sm:$0xff]
  %v198 = vld [vmem:[%s3 + $0x370] sm:$0xff]
  %v199 = vld [vmem:[%s3 + $0x378] sm:$0xff]
  %v200 = vld [vmem:[%s3 + $0x380] sm:$0xff]
  %v201 = vld [vmem:[%s3 + $0x388] sm:$0xff]
  %v202 = vld [vmem:[%s3 + $0x390] sm:$0xff]
  %v203 = vld [vmem:[%s3 + $0x398] sm:$0xff]
  %v204 = vld [vmem:[%s3 + $0x3a0] sm:$0xff]
  %v205 = vld [vmem:[%s3 + $0x3a8] sm:$0xff]
  %v206 = vld [vmem:[%s3 + $0x3b0] sm:$0xff]
  %v207 = vld [vmem:[%s3 + $0x3b8] sm:$0xff]
  %v208 = vld [vmem:[%s3 + $0x3c0] sm:$0xff]
  %v209 = vld [vmem:[%s3 + $0x3c8] sm:$0xff]
  %v210 = vld [vmem:[%s3 + $0x3d0] sm:$0xff]
  %v211 = vld [vmem:[%s3 + $0x3d8] sm:$0xff]
  %v212 = vld [vmem:[%s3 + $0x3e0] sm:$0xff]
  %v213 = vld [vmem:[%s3 + $0x3e8] sm:$0xff]
  %v214 = vld [vmem:[%s3 + $0x3f0] sm:$0xff]
  %v215 = vld [vmem:[%s3 + $0x3f8] sm:$0xff]
  %v216 = vld [vmem:[%s3 + $0x400] sm:$0xff]
  %v217 = vld [vmem:[%s3 + $0x408] sm:$0xff]
  %v218 = vld [vmem:[%s3 + $0x410] sm:$0xff]
  %v219 = vld [vmem:[%s3 + $0x418] sm:$0xff]
  %v220 = vld [vmem:[%s3 + $0x420] sm:$0xff]
  %v221 = vld [vmem:[%s3 + $0x428] sm:$0xff]
  %v222 = vld [vmem:[%s3 + $0x430] sm:$0xff]
  %v223 = vld [vmem:[%s3 + $0x438] sm:$0xff]
  %v224 = vld [vmem:[%s3 + $0x440] sm:$0xff]
  %v225 = vld [vmem:[%s3 + $0x448] sm:$0xff]
  %v226 = vld [vmem:[%s3 + $0x450] sm:$0xff]
  %v227 = vld [vmem:[%s3 + $0x458] sm:$0xff]
  %v228 = vld [vmem:[%s3 + $0x460] sm:$0xff]
  %v229 = vld [vmem:[%s3 + $0x468] sm:$0xff]
  %v230 = vld [vmem:[%s3 + $0x470] sm:$0xff]
  %v231 = vld [vmem:[%s3 + $0x478] sm:$0xff]
  %v232 = vld [vmem:[%s3 + $0x480] sm:$0xff]
  %v233 = vld [vmem:[%s3 + $0x488] sm:$0xff]
  %v234 = vld [vmem:[%s3 + $0x490] sm:$0xff]
  %v235 = vld [vmem:[%s3 + $0x498] sm:$0xff]
  %v236 = vld [vmem:[%s3 + $0x4a0] sm:$0xff]
  %v237 = vld [vmem:[%s3 + $0x4a8] sm:$0xff]
  %v238 = vld [vmem:[%s3 + $0x4b0] sm:$0xff]
  %v239 = vld [vmem:[%s3 + $0x4b8] sm:$0xff]
  %v240 = vld [vmem:[%s3 + $0x4c0] sm:$0xff]
  %v241 = vld [vmem:[%s3 + $0x4c8] sm:$0xff]
  %v242 = vld [vmem:[%s3 + $0x4d0] sm:$0xff]
  %v243 = vld [vmem:[%s3 + $0x4d8] sm:$0xff]
  %v244 = vld [vmem:[%s3 + $0x4e0] sm:$0xff]
  %v245 = vld [vmem:[%s3 + $0x4e8] sm:$0xff]
  %v246 = vld [vmem:[%s3 + $0x4f0] sm:$0xff]
  %v247 = vld [vmem:[%s3 + $0x4f8] sm:$0xff]
  %v248 = vld [vmem:[%s3 + $0x500] sm:$0xff]
  %v249 = vld [vmem:[%s3 + $0x508] sm:$0xff]
  %v250 = vld [vmem:[%s3 + $0x510] sm:$0xff]
  %v251 = vld [vmem:[%s3 + $0x518] sm:$0xff]
  %v252 = vld [vmem:[%s3 + $0x520] sm:$0xff]
  %v253 = vld [vmem:[%s3 + $0x528] sm:$0xff]
  %v254 = vld [vmem:[%s3 + $0x530] sm:$0xff]
  %v255 = vld [vmem:[%s3 + $0x538] sm:$0xff]
  %v256 = vld [vmem:[%s3 + $0x540] sm:$0xff]
  %v257 = vld [vmem:[%s3 + $0x548] sm:$0xff]
  %v258 = vld [vmem:[%s3 + $0x550] sm:$0xff]
  %v259 = vld [vmem:[%s3 + $0x558] sm:$0xff]
  %v260 = vld [vmem:[%s3 + $0x560] sm:$0xff]
  %v261 = vld [vmem:[%s3 + $0x568] sm:$0xff]
  %v262 = vld [vmem:[%s3 + $0x570] sm:$0xff]
  %v263 = vld [vmem:[%s3 + $0x578] sm:$0xff]
  %v264 = vld [vmem:[%s3 + $0x580] sm:$0xff]
  %v265 = vld [vmem:[%s3 + $0x588] sm:$0xff]
  %v266 = vld [vmem:[%s3 + $0x590] sm:$0xff]
  %v267 = vld [vmem:[%s3 + $0x598] sm:$0xff]
  %v268 = vld [vmem:[%s3 + $0x5a0] sm:$0xff]
  %v269 = vld [vmem:[%s3 + $0x5a8] sm:$0xff]
  %v270 = vld [vmem:[%s3 + $0x5b0] sm:$0xff]
  %v271 = vld [vmem:[%s3 + $0x5b8] sm:$0xff]
  %v272 = vld [vmem:[%s3 + $0x5c0] sm:$0xff]
  %v273 = vld [vmem:[%s3 + $0x5c8] sm:$0xff]
  %v274 = vld [vmem:[%s3 + $0x5d0] sm:$0xff]
  %v275 = vld [vmem:[%s3 + $0x5d8] sm:$0xff]
  %v276 = vld [vmem:[%s3 + $0x5e0] sm:$0xff]
  %v277 = vld [vmem:[%s3 + $0x5e8] sm:$0xff]
  %v278 = vld [vmem:[%s3 + $0x5f0] sm:$0xff]
  %v279 = vld [vmem:[%s3 + $0x5f8] sm:$0xff]
  %v280 = vld [vmem:[%s3 + $0x600] sm:$0xff]
  %v281 = vld [vmem:[%s3 + $0x608] sm:$0xff]
  %v282 = vld [vmem:[%s3 + $0x610] sm:$0xff]
  %v283 = vld [vmem:[%s3 + $0x618] sm:$0xff]
  %v284 = vld [vmem:[%s3 + $0x620] sm:$0xff]
  %v285 = vld [vmem:[%s3 + $0x628] sm:$0xff]
  %v286 = vld [vmem:[%s3 + $0x630] sm:$0xff]
  %v287 = vld [vmem:[%s3 + $0x638] sm:$0xff]
  %v288 = vld [vmem:[%s3 + $0x640] sm:$0xff]
  %v289 = vld [vmem:[%s3 + $0x648] sm:$0xff]
  %v290 = vld [vmem:[%s3 + $0x650] sm:$0xff]
  %v291 = vld [vmem:[%s3 + $0x658] sm:$0xff]
  %v292 = vld [vmem:[%s3 + $0x660] sm:$0xff]
  %v293 = vld [vmem:[%s3 + $0x668] sm:$0xff]
  %v294 = vld [vmem:[%s3 + $0x670] sm:$0xff]
  %v295 = vld [vmem:[%s3 + $0x678] sm:$0xff]
  %v296 = vld [vmem:[%s3 + $0x680] sm:$0xff]
  %v297 = vld [vmem:[%s3 + $0x688] sm:$0xff]
  %v298 = vld [vmem:[%s3 + $0x690] sm:$0xff]
  %v299 = vld [vmem:[%s3 + $0x698] sm:$0xff]
  %v300 = vld [vmem:[%s3 + $0x6a0] sm:$0xff]
  %v301 = vld [vmem:[%s3 + $0x6a8] sm:$0xff]
  %v302 = vld [vmem:[%s3 + $0x6b0] sm:$0xff]
  %v303 = vld [vmem:[%s3 + $0x6b8] sm:$0xff]
  %v304 = vld [vmem:[%s3 + $0x6c0] sm:$0xff]
  %v305 = vld [vmem:[%s3 + $0x6c8] sm:$0xff]
  %v306 = vld [vmem:[%s3 + $0x6d0] sm:$0xff]
  %v307 = vld [vmem:[%s3 + $0x6d8] sm:$0xff]
  %v308 = vld [vmem:[%s3 + $0x6e0] sm:$0xff]
  %v309 = vld [vmem:[%s3 + $0x6e8] sm:$0xff]
  %v310 = vld [vmem:[%s3 + $0x6f0] sm:$0xff]
  %v311 = vld [vmem:[%s3 + $0x6f8] sm:$0xff]
  %v312 = vld [vmem:[%s3 + $0x700] sm:$0xff]
  %v313 = vld [vmem:[%s3 + $0x708] sm:$0xff]
  %v314 = vld [vmem:[%s3 + $0x710] sm:$0xff]
  %v315 = vld [vmem:[%s3 + $0x718] sm:$0xff]
  %v316 = vld [vmem:[%s3 + $0x720] sm:$0xff]
  %v317 = vld [vmem:[%s3 + $0x728] sm:$0xff]
  %v318 = vld [vmem:[%s3 + $0x730] sm:$0xff]
  %v319 = vld [vmem:[%s3 + $0x738] sm:$0xff]
  %v320 = vld [vmem:[%s3 + $0x740] sm:$0xff]
  %v321 = vld [vmem:[%s3 + $0x748] sm:$0xff]
  %v322 = vld [vmem:[%s3 + $0x750] sm:$0xff]
  %v323 = vld [vmem:[%s3 + $0x758] sm:$0xff]
  %v324 = vld [vmem:[%s3 + $0x760] sm:$0xff]
  %v325 = vld [vmem:[%s3 + $0x768] sm:$0xff]
  %v326 = vld [vmem:[%s3 + $0x770] sm:$0xff]
  %v327 = vld [vmem:[%s3 + $0x778] sm:$0xff]
  %v328 = vld [vmem:[%s3 + $0x780] sm:$0xff]
  %v329 = vld [vmem:[%s3 + $0x788] sm:$0xff]
  %v330 = vld [vmem:[%s3 + $0x790] sm:$0xff]
  %v331 = vld [vmem:[%s3 + $0x798] sm:$0xff]
  %v332 = vld [vmem:[%s3 + $0x7a0] sm:$0xff]
  %v333 = vld [vmem:[%s3 + $0x7a8] sm:$0xff]
  %v334 = vld [vmem:[%s3 + $0x7b0] sm:$0xff]
  %v335 = vld [vmem:[%s3 + $0x7b8] sm:$0xff]
  %v336 = vld [vmem:[%s3 + $0x7c0] sm:$0xff]
  %v337 = vld [vmem:[%s3 + $0x7c8] sm:$0xff]
  %v338 = vld [vmem:[%s3 + $0x7d0] sm:$0xff]
  %v339 = vld [vmem:[%s3 + $0x7d8] sm:$0xff]
  %v340 = vld [vmem:[%s3 + $0x7e0] sm:$0xff]
  %v341 = vld [vmem:[%s3 + $0x7e8] sm:$0xff]
  %v342 = vld [vmem:[%s3 + $0x7f0] sm:$0xff]
  %v343 = vld [vmem:[%s3 + $0x7f8] sm:$0xff]
  %v346 = vunpack.c.l.b16 %v86
  %v347 = vunpack.c.h.b16 %v86
  %v348 = vunpack.c.l.b16 %v87
  %v349 = vunpack.c.h.b16 %v87
  %v350 = vpack.c.b16 %v346, %v346
  %v351 = vpack.c.b16 %v347, %v347
  %v352 = vpack.c.b16 %v348, %v348
  %v353 = vpack.c.b16 %v349, %v349
  %v614 = vunpack.c.l.b16 %v88
  %v615 = vunpack.c.h.b16 %v88
  %v616 = vunpack.c.l.b16 %v89
  %v617 = vunpack.c.h.b16 %v89
  %v618 = vunpack.c.l.b16 %v90
  %v619 = vunpack.c.h.b16 %v90
  %v620 = vunpack.c.l.b16 %v91
  %v621 = vunpack.c.h.b16 %v91
  %v622 = vunpack.c.l.b16 %v92
  %v623 = vunpack.c.h.b16 %v92
  %v624 = vunpack.c.l.b16 %v93
  %v625 = vunpack.c.h.b16 %v93
  %v626 = vunpack.c.l.b16 %v94
  %v627 = vunpack.c.h.b16 %v94
  %v628 = vunpack.c.l.b16 %v95
  %v629 = vunpack.c.h.b16 %v95
  %v630 = vunpack.c.l.b16 %v96
  %v631 = vunpack.c.h.b16 %v96
  %v632 = vunpack.c.l.b16 %v97
  %v633 = vunpack.c.h.b16 %v97
  %v634 = vunpack.c.l.b16 %v98
  %v635 = vunpack.c.h.b16 %v98
  %v636 = vunpack.c.l.b16 %v99
  %v637 = vunpack.c.h.b16 %v99
  %v638 = vunpack.c.l.b16 %v100
  %v639 = vunpack.c.h.b16 %v100
  %v640 = vunpack.c.l.b16 %v101
  %v641 = vunpack.c.h.b16 %v101
  %v642 = vunpack.c.l.b16 %v102
  %v643 = vunpack.c.h.b16 %v102
  %v644 = vunpack.c.l.b16 %v103
  %v645 = vunpack.c.h.b16 %v103
  %v646 = vunpack.c.l.b16 %v104
  %v647 = vunpack.c.h.b16 %v104
  %v648 = vunpack.c.l.b16 %v105
  %v649 = vunpack.c.h.b16 %v105
  %v650 = vunpack.c.l.b16 %v106
  %v651 = vunpack.c.h.b16 %v106
  %v652 = vunpack.c.l.b16 %v107
  %v653 = vunpack.c.h.b16 %v107
  %v654 = vunpack.c.l.b16 %v108
  %v655 = vunpack.c.h.b16 %v108
  %v656 = vunpack.c.l.b16 %v109
  %v657 = vunpack.c.h.b16 %v109
  %v658 = vunpack.c.l.b16 %v110
  %v659 = vunpack.c.h.b16 %v110
  %v660 = vunpack.c.l.b16 %v111
  %v661 = vunpack.c.h.b16 %v111
  %v662 = vunpack.c.l.b16 %v112
  %v663 = vunpack.c.h.b16 %v112
  %v664 = vunpack.c.l.b16 %v113
  %v665 = vunpack.c.h.b16 %v113
  %v666 = vunpack.c.l.b16 %v114
  %v667 = vunpack.c.h.b16 %v114
  %v668 = vunpack.c.l.b16 %v115
  %v669 = vunpack.c.h.b16 %v115
  %v670 = vunpack.c.l.b16 %v116
  %v671 = vunpack.c.h.b16 %v116
  %v672 = vunpack.c.l.b16 %v117
  %v673 = vunpack.c.h.b16 %v117
  %v674 = vunpack.c.l.b16 %v118
  %v675 = vunpack.c.h.b16 %v118
  %v676 = vunpack.c.l.b16 %v119
  %v677 = vunpack.c.h.b16 %v119
  %v678 = vunpack.c.l.b16 %v120
  %v679 = vunpack.c.h.b16 %v120
  %v680 = vunpack.c.l.b16 %v121
  %v681 = vunpack.c.h.b16 %v121
  %v682 = vunpack.c.l.b16 %v122
  %v683 = vunpack.c.h.b16 %v122
  %v684 = vunpack.c.l.b16 %v123
  %v685 = vunpack.c.h.b16 %v123
  %v686 = vunpack.c.l.b16 %v124
  %v687 = vunpack.c.h.b16 %v124
  %v688 = vunpack.c.l.b16 %v125
  %v689 = vunpack.c.h.b16 %v125
  %v690 = vunpack.c.l.b16 %v126
  %v691 = vunpack.c.h.b16 %v126
  %v692 = vunpack.c.l.b16 %v127
  %v693 = vunpack.c.h.b16 %v127
  %v694 = vunpack.c.l.b16 %v128
  %v695 = vunpack.c.h.b16 %v128
  %v696 = vunpack.c.l.b16 %v129
  %v697 = vunpack.c.h.b16 %v129
  %v698 = vunpack.c.l.b16 %v130
  %v699 = vunpack.c.h.b16 %v130
  %v700 = vunpack.c.l.b16 %v131
  %v701 = vunpack.c.h.b16 %v131
  %v702 = vunpack.c.l.b16 %v132
  %v703 = vunpack.c.h.b16 %v132
  %v704 = vunpack.c.l.b16 %v133
  %v705 = vunpack.c.h.b16 %v133
  %v706 = vunpack.c.l.b16 %v134
  %v707 = vunpack.c.h.b16 %v134
  %v708 = vunpack.c.l.b16 %v135
  %v709 = vunpack.c.h.b16 %v135
  %v710 = vunpack.c.l.b16 %v136
  %v711 = vunpack.c.h.b16 %v136
  %v712 = vunpack.c.l.b16 %v137
  %v713 = vunpack.c.h.b16 %v137
  %v714 = vunpack.c.l.b16 %v138
  %v715 = vunpack.c.h.b16 %v138
  %v716 = vunpack.c.l.b16 %v139
  %v717 = vunpack.c.h.b16 %v139
  %v718 = vunpack.c.l.b16 %v140
  %v719 = vunpack.c.h.b16 %v140
  %v720 = vunpack.c.l.b16 %v141
  %v721 = vunpack.c.h.b16 %v141
  %v722 = vunpack.c.l.b16 %v142
  %v723 = vunpack.c.h.b16 %v142
  %v724 = vunpack.c.l.b16 %v143
  %v725 = vunpack.c.h.b16 %v143
  %v726 = vunpack.c.l.b16 %v144
  %v727 = vunpack.c.h.b16 %v144
  %v728 = vunpack.c.l.b16 %v145
  %v729 = vunpack.c.h.b16 %v145
  %v730 = vunpack.c.l.b16 %v146
  %v731 = vunpack.c.h.b16 %v146
  %v732 = vunpack.c.l.b16 %v147
  %v733 = vunpack.c.h.b16 %v147
  %v734 = vunpack.c.l.b16 %v148
  %v735 = vunpack.c.h.b16 %v148
  %v736 = vunpack.c.l.b16 %v149
  %v737 = vunpack.c.h.b16 %v149
  %v738 = vunpack.c.l.b16 %v150
  %v739 = vunpack.c.h.b16 %v150
  %v740 = vunpack.c.l.b16 %v151
  %v741 = vunpack.c.h.b16 %v151
  %v742 = vunpack.c.l.b16 %v152
  %v743 = vunpack.c.h.b16 %v152
  %v744 = vunpack.c.l.b16 %v153
  %v745 = vunpack.c.h.b16 %v153
  %v746 = vunpack.c.l.b16 %v154
  %v747 = vunpack.c.h.b16 %v154
  %v748 = vunpack.c.l.b16 %v155
  %v749 = vunpack.c.h.b16 %v155
  %v750 = vunpack.c.l.b16 %v156
  %v751 = vunpack.c.h.b16 %v156
  %v752 = vunpack.c.l.b16 %v157
  %v753 = vunpack.c.h.b16 %v157
  %v754 = vunpack.c.l.b16 %v158
  %v755 = vunpack.c.h.b16 %v158
  %v756 = vunpack.c.l.b16 %v159
  %v757 = vunpack.c.h.b16 %v159
  %v758 = vunpack.c.l.b16 %v160
  %v759 = vunpack.c.h.b16 %v160
  %v760 = vunpack.c.l.b16 %v161
  %v761 = vunpack.c.h.b16 %v161
  %v762 = vunpack.c.l.b16 %v162
  %v763 = vunpack.c.h.b16 %v162
  %v764 = vunpack.c.l.b16 %v163
  %v765 = vunpack.c.h.b16 %v163
  %v766 = vunpack.c.l.b16 %v164
  %v767 = vunpack.c.h.b16 %v164
  %v768 = vunpack.c.l.b16 %v165
  %v769 = vunpack.c.h.b16 %v165
  %v770 = vunpack.c.l.b16 %v166
  %v771 = vunpack.c.h.b16 %v166
  %v772 = vunpack.c.l.b16 %v167
  %v773 = vunpack.c.h.b16 %v167
  %v774 = vunpack.c.l.b16 %v168
  %v775 = vunpack.c.h.b16 %v168
  %v776 = vunpack.c.l.b16 %v169
  %v777 = vunpack.c.h.b16 %v169
  %v778 = vunpack.c.l.b16 %v170
  %v779 = vunpack.c.h.b16 %v170
  %v780 = vunpack.c.l.b16 %v171
  %v781 = vunpack.c.h.b16 %v171
  %v782 = vunpack.c.l.b16 %v172
  %v783 = vunpack.c.h.b16 %v172
  %v784 = vunpack.c.l.b16 %v173
  %v785 = vunpack.c.h.b16 %v173
  %v786 = vunpack.c.l.b16 %v174
  %v787 = vunpack.c.h.b16 %v174
  %v788 = vunpack.c.l.b16 %v175
  %v789 = vunpack.c.h.b16 %v175
  %v790 = vunpack.c.l.b16 %v176
  %v791 = vunpack.c.h.b16 %v176
  %v792 = vunpack.c.l.b16 %v177
  %v793 = vunpack.c.h.b16 %v177
  %v794 = vunpack.c.l.b16 %v178
  %v795 = vunpack.c.h.b16 %v178
  %v796 = vunpack.c.l.b16 %v179
  %v797 = vunpack.c.h.b16 %v179
  %v798 = vunpack.c.l.b16 %v180
  %v799 = vunpack.c.h.b16 %v180
  %v800 = vunpack.c.l.b16 %v181
  %v801 = vunpack.c.h.b16 %v181
  %v802 = vunpack.c.l.b16 %v182
  %v803 = vunpack.c.h.b16 %v182
  %v804 = vunpack.c.l.b16 %v183
  %v805 = vunpack.c.h.b16 %v183
  %v806 = vunpack.c.l.b16 %v184
  %v807 = vunpack.c.h.b16 %v184
  %v808 = vunpack.c.l.b16 %v185
  %v809 = vunpack.c.h.b16 %v185
  %v810 = vunpack.c.l.b16 %v186
  %v811 = vunpack.c.h.b16 %v186
  %v812 = vunpack.c.l.b16 %v187
  %v813 = vunpack.c.h.b16 %v187
  %v814 = vunpack.c.l.b16 %v188
  %v815 = vunpack.c.h.b16 %v188
  %v816 = vunpack.c.l.b16 %v189
  %v817 = vunpack.c.h.b16 %v189
  %v818 = vunpack.c.l.b16 %v190
  %v819 = vunpack.c.h.b16 %v190
  %v820 = vunpack.c.l.b16 %v191
  %v821 = vunpack.c.h.b16 %v191
  %v822 = vunpack.c.l.b16 %v192
  %v823 = vunpack.c.h.b16 %v192
  %v824 = vunpack.c.l.b16 %v193
  %v825 = vunpack.c.h.b16 %v193
  %v826 = vunpack.c.l.b16 %v194
  %v827 = vunpack.c.h.b16 %v194
  %v828 = vunpack.c.l.b16 %v195
  %v829 = vunpack.c.h.b16 %v195
  %v830 = vunpack.c.l.b16 %v196
  %v831 = vunpack.c.h.b16 %v196
  %v832 = vunpack.c.l.b16 %v197
  %v833 = vunpack.c.h.b16 %v197
  %v834 = vunpack.c.l.b16 %v198
  %v835 = vunpack.c.h.b16 %v198
  %v836 = vunpack.c.l.b16 %v199
  %v837 = vunpack.c.h.b16 %v199
  %v838 = vunpack.c.l.b16 %v200
  %v839 = vunpack.c.h.b16 %v200
  %v840 = vunpack.c.l.b16 %v201
  %v841 = vunpack.c.h.b16 %v201
  %v842 = vunpack.c.l.b16 %v202
  %v843 = vunpack.c.h.b16 %v202
  %v844 = vunpack.c.l.b16 %v203
  %v845 = vunpack.c.h.b16 %v203
  %v846 = vunpack.c.l.b16 %v204
  %v847 = vunpack.c.h.b16 %v204
  %v848 = vunpack.c.l.b16 %v205
  %v849 = vunpack.c.h.b16 %v205
  %v850 = vunpack.c.l.b16 %v206
  %v851 = vunpack.c.h.b16 %v206
  %v852 = vunpack.c.l.b16 %v207
  %v853 = vunpack.c.h.b16 %v207
  %v854 = vunpack.c.l.b16 %v208
  %v855 = vunpack.c.h.b16 %v208
  %v856 = vunpack.c.l.b16 %v209
  %v857 = vunpack.c.h.b16 %v209
  %v858 = vunpack.c.l.b16 %v210
  %v859 = vunpack.c.h.b16 %v210
  %v860 = vunpack.c.l.b16 %v211
  %v861 = vunpack.c.h.b16 %v211
  %v862 = vunpack.c.l.b16 %v212
  %v863 = vunpack.c.h.b16 %v212
  %v864 = vunpack.c.l.b16 %v213
  %v865 = vunpack.c.h.b16 %v213
  %v866 = vunpack.c.l.b16 %v214
  %v867 = vunpack.c.h.b16 %v214
  %v868 = vunpack.c.l.b16 %v215
  %v869 = vunpack.c.h.b16 %v215
  %v870 = vunpack.c.l.b16 %v216
  %v871 = vunpack.c.h.b16 %v216
  %v872 = vunpack.c.l.b16 %v217
  %v873 = vunpack.c.h.b16 %v217
  %v874 = vunpack.c.l.b16 %v218
  %v875 = vunpack.c.h.b16 %v218
  %v876 = vunpack.c.l.b16 %v219
  %v877 = vunpack.c.h.b16 %v219
  %v878 = vunpack.c.l.b16 %v220
  %v879 = vunpack.c.h.b16 %v220
  %v880 = vunpack.c.l.b16 %v221
  %v881 = vunpack.c.h.b16 %v221
  %v882 = vunpack.c.l.b16 %v222
  %v883 = vunpack.c.h.b16 %v222
  %v884 = vunpack.c.l.b16 %v223
  %v885 = vunpack.c.h.b16 %v223
  %v886 = vunpack.c.l.b16 %v224
  %v887 = vunpack.c.h.b16 %v224
  %v888 = vunpack.c.l.b16 %v225
  %v889 = vunpack.c.h.b16 %v225
  %v890 = vunpack.c.l.b16 %v226
  %v891 = vunpack.c.h.b16 %v226
  %v892 = vunpack.c.l.b16 %v227
  %v893 = vunpack.c.h.b16 %v227
  %v894 = vunpack.c.l.b16 %v228
  %v895 = vunpack.c.h.b16 %v228
  %v896 = vunpack.c.l.b16 %v229
  %v897 = vunpack.c.h.b16 %v229
  %v898 = vunpack.c.l.b16 %v230
  %v899 = vunpack.c.h.b16 %v230
  %v900 = vunpack.c.l.b16 %v231
  %v901 = vunpack.c.h.b16 %v231
  %v902 = vunpack.c.l.b16 %v232
  %v903 = vunpack.c.h.b16 %v232
  %v904 = vunpack.c.l.b16 %v233
  %v905 = vunpack.c.h.b16 %v233
  %v906 = vunpack.c.l.b16 %v234
  %v907 = vunpack.c.h.b16 %v234
  %v908 = vunpack.c.l.b16 %v235
  %v909 = vunpack.c.h.b16 %v235
  %v910 = vunpack.c.l.b16 %v236
  %v911 = vunpack.c.h.b16 %v236
  %v912 = vunpack.c.l.b16 %v237
  %v913 = vunpack.c.h.b16 %v237
  %v914 = vunpack.c.l.b16 %v238
  %v915 = vunpack.c.h.b16 %v238
  %v916 = vunpack.c.l.b16 %v239
  %v917 = vunpack.c.h.b16 %v239
  %v918 = vunpack.c.l.b16 %v240
  %v919 = vunpack.c.h.b16 %v240
  %v920 = vunpack.c.l.b16 %v241
  %v921 = vunpack.c.h.b16 %v241
  %v922 = vunpack.c.l.b16 %v242
  %v923 = vunpack.c.h.b16 %v242
  %v924 = vunpack.c.l.b16 %v243
  %v925 = vunpack.c.h.b16 %v243
  %v926 = vunpack.c.l.b16 %v244
  %v927 = vunpack.c.h.b16 %v244
  %v928 = vunpack.c.l.b16 %v245
  %v929 = vunpack.c.h.b16 %v245
  %v930 = vunpack.c.l.b16 %v246
  %v931 = vunpack.c.h.b16 %v246
  %v932 = vunpack.c.l.b16 %v247
  %v933 = vunpack.c.h.b16 %v247
  %v934 = vunpack.c.l.b16 %v248
  %v935 = vunpack.c.h.b16 %v248
  %v936 = vunpack.c.l.b16 %v249
  %v937 = vunpack.c.h.b16 %v249
  %v938 = vunpack.c.l.b16 %v250
  %v939 = vunpack.c.h.b16 %v250
  %v940 = vunpack.c.l.b16 %v251
  %v941 = vunpack.c.h.b16 %v251
  %v942 = vunpack.c.l.b16 %v252
  %v943 = vunpack.c.h.b16 %v252
  %v944 = vunpack.c.l.b16 %v253
  %v945 = vunpack.c.h.b16 %v253
  %v946 = vunpack.c.l.b16 %v254
  %v947 = vunpack.c.h.b16 %v254
  %v948 = vunpack.c.l.b16 %v255
  %v949 = vunpack.c.h.b16 %v255
  %v950 = vunpack.c.l.b16 %v256
  %v951 = vunpack.c.h.b16 %v256
  %v952 = vunpack.c.l.b16 %v257
  %v953 = vunpack.c.h.b16 %v257
  %v954 = vunpack.c.l.b16 %v258
  %v955 = vunpack.c.h.b16 %v258
  %v956 = vunpack.c.l.b16 %v259
  %v957 = vunpack.c.h.b16 %v259
  %v958 = vunpack.c.l.b16 %v260
  %v959 = vunpack.c.h.b16 %v260
  %v960 = vunpack.c.l.b16 %v261
  %v961 = vunpack.c.h.b16 %v261
  %v962 = vunpack.c.l.b16 %v262
  %v963 = vunpack.c.h.b16 %v262
  %v964 = vunpack.c.l.b16 %v263
  %v965 = vunpack.c.h.b16 %v263
  %v966 = vunpack.c.l.b16 %v264
  %v967 = vunpack.c.h.b16 %v264
  %v968 = vunpack.c.l.b16 %v265
  %v969 = vunpack.c.h.b16 %v265
  %v970 = vunpack.c.l.b16 %v266
  %v971 = vunpack.c.h.b16 %v266
  %v972 = vunpack.c.l.b16 %v267
  %v973 = vunpack.c.h.b16 %v267
  %v974 = vunpack.c.l.b16 %v268
  %v975 = vunpack.c.h.b16 %v268
  %v976 = vunpack.c.l.b16 %v269
  %v977 = vunpack.c.h.b16 %v269
  %v978 = vunpack.c.l.b16 %v270
  %v979 = vunpack.c.h.b16 %v270
  %v980 = vunpack.c.l.b16 %v271
  %v981 = vunpack.c.h.b16 %v271
  %v982 = vunpack.c.l.b16 %v272
  %v983 = vunpack.c.h.b16 %v272
  %v984 = vunpack.c.l.b16 %v273
  %v985 = vunpack.c.h.b16 %v273
  %v986 = vunpack.c.l.b16 %v274
  %v987 = vunpack.c.h.b16 %v274
  %v988 = vunpack.c.l.b16 %v275
  %v989 = vunpack.c.h.b16 %v275
  %v990 = vunpack.c.l.b16 %v276
  %v991 = vunpack.c.h.b16 %v276
  %v992 = vunpack.c.l.b16 %v277
  %v993 = vunpack.c.h.b16 %v277
  %v994 = vunpack.c.l.b16 %v278
  %v995 = vunpack.c.h.b16 %v278
  %v996 = vunpack.c.l.b16 %v279
  %v997 = vunpack.c.h.b16 %v279
  %v998 = vunpack.c.l.b16 %v280
  %v999 = vunpack.c.h.b16 %v280
  %v1000 = vunpack.c.l.b16 %v281
  %v1001 = vunpack.c.h.b16 %v281
  %v1002 = vunpack.c.l.b16 %v282
  %v1003 = vunpack.c.h.b16 %v282
  %v1004 = vunpack.c.l.b16 %v283
  %v1005 = vunpack.c.h.b16 %v283
  %v1006 = vunpack.c.l.b16 %v284
  %v1007 = vunpack.c.h.b16 %v284
  %v1008 = vunpack.c.l.b16 %v285
  %v1009 = vunpack.c.h.b16 %v285
  %v1010 = vunpack.c.l.b16 %v286
  %v1011 = vunpack.c.h.b16 %v286
  %v1012 = vunpack.c.l.b16 %v287
  %v1013 = vunpack.c.h.b16 %v287
  %v1014 = vunpack.c.l.b16 %v288
  %v1015 = vunpack.c.h.b16 %v288
  %v1016 = vunpack.c.l.b16 %v289
  %v1017 = vunpack.c.h.b16 %v289
  %v1018 = vunpack.c.l.b16 %v290
  %v1019 = vunpack.c.h.b16 %v290
  %v1020 = vunpack.c.l.b16 %v291
  %v1021 = vunpack.c.h.b16 %v291
  %v1022 = vunpack.c.l.b16 %v292
  %v1023 = vunpack.c.h.b16 %v292
  %v1024 = vunpack.c.l.b16 %v293
  %v1025 = vunpack.c.h.b16 %v293
  %v1026 = vunpack.c.l.b16 %v294
  %v1027 = vunpack.c.h.b16 %v294
  %v1028 = vunpack.c.l.b16 %v295
  %v1029 = vunpack.c.h.b16 %v295
  %v1030 = vunpack.c.l.b16 %v296
  %v1031 = vunpack.c.h.b16 %v296
  %v1032 = vunpack.c.l.b16 %v297
  %v1033 = vunpack.c.h.b16 %v297
  %v1034 = vunpack.c.l.b16 %v298
  %v1035 = vunpack.c.h.b16 %v298
  %v1036 = vunpack.c.l.b16 %v299
  %v1037 = vunpack.c.h.b16 %v299
  %v1038 = vunpack.c.l.b16 %v300
  %v1039 = vunpack.c.h.b16 %v300
  %v1040 = vunpack.c.l.b16 %v301
  %v1041 = vunpack.c.h.b16 %v301
  %v1042 = vunpack.c.l.b16 %v302
  %v1043 = vunpack.c.h.b16 %v302
  %v1044 = vunpack.c.l.b16 %v303
  %v1045 = vunpack.c.h.b16 %v303
  %v1046 = vunpack.c.l.b16 %v304
  %v1047 = vunpack.c.h.b16 %v304
  %v1048 = vunpack.c.l.b16 %v305
  %v1049 = vunpack.c.h.b16 %v305
  %v1050 = vunpack.c.l.b16 %v306
  %v1051 = vunpack.c.h.b16 %v306
  %v1052 = vunpack.c.l.b16 %v307
  %v1053 = vunpack.c.h.b16 %v307
  %v1054 = vunpack.c.l.b16 %v308
  %v1055 = vunpack.c.h.b16 %v308
  %v1056 = vunpack.c.l.b16 %v309
  %v1057 = vunpack.c.h.b16 %v309
  %v1058 = vunpack.c.l.b16 %v310
  %v1059 = vunpack.c.h.b16 %v310
  %v1060 = vunpack.c.l.b16 %v311
  %v1061 = vunpack.c.h.b16 %v311
  %v1062 = vunpack.c.l.b16 %v312
  %v1063 = vunpack.c.h.b16 %v312
  %v1064 = vunpack.c.l.b16 %v313
  %v1065 = vunpack.c.h.b16 %v313
  %v1066 = vunpack.c.l.b16 %v314
  %v1067 = vunpack.c.h.b16 %v314
  %v1068 = vunpack.c.l.b16 %v315
  %v1069 = vunpack.c.h.b16 %v315
  %v1070 = vunpack.c.l.b16 %v316
  %v1071 = vunpack.c.h.b16 %v316
  %v1072 = vunpack.c.l.b16 %v317
  %v1073 = vunpack.c.h.b16 %v317
  %v1074 = vunpack.c.l.b16 %v318
  %v1075 = vunpack.c.h.b16 %v318
  %v1076 = vunpack.c.l.b16 %v319
  %v1077 = vunpack.c.h.b16 %v319
  %v1078 = vunpack.c.l.b16 %v320
  %v1079 = vunpack.c.h.b16 %v320
  %v1080 = vunpack.c.l.b16 %v321
  %v1081 = vunpack.c.h.b16 %v321
  %v1082 = vunpack.c.l.b16 %v322
  %v1083 = vunpack.c.h.b16 %v322
  %v1084 = vunpack.c.l.b16 %v323
  %v1085 = vunpack.c.h.b16 %v323
  %v1086 = vunpack.c.l.b16 %v324
  %v1087 = vunpack.c.h.b16 %v324
  %v1088 = vunpack.c.l.b16 %v325
  %v1089 = vunpack.c.h.b16 %v325
  %v1090 = vunpack.c.l.b16 %v326
  %v1091 = vunpack.c.h.b16 %v326
  %v1092 = vunpack.c.l.b16 %v327
  %v1093 = vunpack.c.h.b16 %v327
  %v1094 = vunpack.c.l.b16 %v328
  %v1095 = vunpack.c.h.b16 %v328
  %v1096 = vunpack.c.l.b16 %v329
  %v1097 = vunpack.c.h.b16 %v329
  %v1098 = vunpack.c.l.b16 %v330
  %v1099 = vunpack.c.h.b16 %v330
  %v1100 = vunpack.c.l.b16 %v331
  %v1101 = vunpack.c.h.b16 %v331
  %v1102 = vunpack.c.l.b16 %v332
  %v1103 = vunpack.c.h.b16 %v332
  %v1104 = vunpack.c.l.b16 %v333
  %v1105 = vunpack.c.h.b16 %v333
  %v1106 = vunpack.c.l.b16 %v334
  %v1107 = vunpack.c.h.b16 %v334
  %v1108 = vunpack.c.l.b16 %v335
  %v1109 = vunpack.c.h.b16 %v335
  %v1110 = vunpack.c.l.b16 %v336
  %v1111 = vunpack.c.h.b16 %v336
  %v1112 = vunpack.c.l.b16 %v337
  %v1113 = vunpack.c.h.b16 %v337
  %v1114 = vunpack.c.l.b16 %v338
  %v1115 = vunpack.c.h.b16 %v338
  %v1116 = vunpack.c.l.b16 %v339
  %v1117 = vunpack.c.h.b16 %v339
  %v1118 = vunpack.c.l.b16 %v340
  %v1119 = vunpack.c.h.b16 %v340
  %v1120 = vunpack.c.l.b16 %v341
  %v1121 = vunpack.c.h.b16 %v341
  %v1122 = vunpack.c.l.b16 %v342
  %v1123 = vunpack.c.h.b16 %v342
  %v1124 = vunpack.c.l.b16 %v343
  %v1125 = vunpack.c.h.b16 %v343
  %v1126 = vpack.c.b16 %v622, %v614
  %v1127 = vpack.c.b16 %v623, %v615
  %v1128 = vpack.c.b16 %v624, %v616
  %v1129 = vpack.c.b16 %v625, %v617
  %v1130 = vpack.c.b16 %v626, %v618
  %v1131 = vpack.c.b16 %v627, %v619
  %v1132 = vpack.c.b16 %v628, %v620
  %v1133 = vpack.c.b16 %v629, %v621
  %v1134 = vpack.c.b16 %v638, %v630
  %v1135 = vpack.c.b16 %v639, %v631
  %v1136 = vpack.c.b16 %v640, %v632
  %v1137 = vpack.c.b16 %v641, %v633
  %v1138 = vpack.c.b16 %v642, %v634
  %v1139 = vpack.c.b16 %v643, %v635
  %v1140 = vpack.c.b16 %v644, %v636
  %v1141 = vpack.c.b16 %v645, %v637
  %v1142 = vpack.c.b16 %v654, %v646
  %v1143 = vpack.c.b16 %v655, %v647
  %v1144 = vpack.c.b16 %v656, %v648
  %v1145 = vpack.c.b16 %v657, %v649
  %v1146 = vpack.c.b16 %v658, %v650
  %v1147 = vpack.c.b16 %v659, %v651
  %v1148 = vpack.c.b16 %v660, %v652
  %v1149 = vpack.c.b16 %v661, %v653
  %v1150 = vpack.c.b16 %v670, %v662
  %v1151 = vpack.c.b16 %v671, %v663
  %v1152 = vpack.c.b16 %v672, %v664
  %v1153 = vpack.c.b16 %v673, %v665
  %v1154 = vpack.c.b16 %v674, %v666
  %v1155 = vpack.c.b16 %v675, %v667
  %v1156 = vpack.c.b16 %v676, %v668
  %v1157 = vpack.c.b16 %v677, %v669
  %v1158 = vpack.c.b16 %v686, %v678
  %v1159 = vpack.c.b16 %v687, %v679
  %v1160 = vpack.c.b16 %v688, %v680
  %v1161 = vpack.c.b16 %v689, %v681
  %v1162 = vpack.c.b16 %v690, %v682
  %v1163 = vpack.c.b16 %v691, %v683
  %v1164 = vpack.c.b16 %v692, %v684
  %v1165 = vpack.c.b16 %v693, %v685
  %v1166 = vpack.c.b16 %v702, %v694
  %v1167 = vpack.c.b16 %v703, %v695
  %v1168 = vpack.c.b16 %v704, %v696
  %v1169 = vpack.c.b16 %v705, %v697
  %v1170 = vpack.c.b16 %v706, %v698
  %v1171 = vpack.c.b16 %v707, %v699
  %v1172 = vpack.c.b16 %v708, %v700
  %v1173 = vpack.c.b16 %v709, %v701
  %v1174 = vpack.c.b16 %v718, %v710
  %v1175 = vpack.c.b16 %v719, %v711
  %v1176 = vpack.c.b16 %v720, %v712
  %v1177 = vpack.c.b16 %v721, %v713
  %v1178 = vpack.c.b16 %v722, %v714
  %v1179 = vpack.c.b16 %v723, %v715
  %v1180 = vpack.c.b16 %v724, %v716
  %v1181 = vpack.c.b16 %v725, %v717
  %v1182 = vpack.c.b16 %v734, %v726
  %v1183 = vpack.c.b16 %v735, %v727
  %v1184 = vpack.c.b16 %v736, %v728
  %v1185 = vpack.c.b16 %v737, %v729
  %v1186 = vpack.c.b16 %v738, %v730
  %v1187 = vpack.c.b16 %v739, %v731
  %v1188 = vpack.c.b16 %v740, %v732
  %v1189 = vpack.c.b16 %v741, %v733
  %v1190 = vpack.c.b16 %v750, %v742
  %v1191 = vpack.c.b16 %v751, %v743
  %v1192 = vpack.c.b16 %v752, %v744
  %v1193 = vpack.c.b16 %v753, %v745
  %v1194 = vpack.c.b16 %v754, %v746
  %v1195 = vpack.c.b16 %v755, %v747
  %v1196 = vpack.c.b16 %v756, %v748
  %v1197 = vpack.c.b16 %v757, %v749
  %v1198 = vpack.c.b16 %v766, %v758
  %v1199 = vpack.c.b16 %v767, %v759
  %v1200 = vpack.c.b16 %v768, %v760
  %v1201 = vpack.c.b16 %v769, %v761
  %v1202 = vpack.c.b16 %v770, %v762
  %v1203 = vpack.c.b16 %v771, %v763
  %v1204 = vpack.c.b16 %v772, %v764
  %v1205 = vpack.c.b16 %v773, %v765
  %v1206 = vpack.c.b16 %v782, %v774
  %v1207 = vpack.c.b16 %v783, %v775
  %v1208 = vpack.c.b16 %v784, %v776
  %v1209 = vpack.c.b16 %v785, %v777
  %v1210 = vpack.c.b16 %v786, %v778
  %v1211 = vpack.c.b16 %v787, %v779
  %v1212 = vpack.c.b16 %v788, %v780
  %v1213 = vpack.c.b16 %v789, %v781
  %v1214 = vpack.c.b16 %v798, %v790
  %v1215 = vpack.c.b16 %v799, %v791
  %v1216 = vpack.c.b16 %v800, %v792
  %v1217 = vpack.c.b16 %v801, %v793
  %v1218 = vpack.c.b16 %v802, %v794
  %v1219 = vpack.c.b16 %v803, %v795
  %v1220 = vpack.c.b16 %v804, %v796
  %v1221 = vpack.c.b16 %v805, %v797
  %v1222 = vpack.c.b16 %v814, %v806
  %v1223 = vpack.c.b16 %v815, %v807
  %v1224 = vpack.c.b16 %v816, %v808
  %v1225 = vpack.c.b16 %v817, %v809
  %v1226 = vpack.c.b16 %v818, %v810
  %v1227 = vpack.c.b16 %v819, %v811
  %v1228 = vpack.c.b16 %v820, %v812
  %v1229 = vpack.c.b16 %v821, %v813
  %v1230 = vpack.c.b16 %v830, %v822
  %v1231 = vpack.c.b16 %v831, %v823
  %v1232 = vpack.c.b16 %v832, %v824
  %v1233 = vpack.c.b16 %v833, %v825
  %v1234 = vpack.c.b16 %v834, %v826
  %v1235 = vpack.c.b16 %v835, %v827
  %v1236 = vpack.c.b16 %v836, %v828
  %v1237 = vpack.c.b16 %v837, %v829
  %v1238 = vpack.c.b16 %v846, %v838
  %v1239 = vpack.c.b16 %v847, %v839
  %v1240 = vpack.c.b16 %v848, %v840
  %v1241 = vpack.c.b16 %v849, %v841
  %v1242 = vpack.c.b16 %v850, %v842
  %v1243 = vpack.c.b16 %v851, %v843
  %v1244 = vpack.c.b16 %v852, %v844
  %v1245 = vpack.c.b16 %v853, %v845
  %v1246 = vpack.c.b16 %v862, %v854
  %v1247 = vpack.c.b16 %v863, %v855
  %v1248 = vpack.c.b16 %v864, %v856
  %v1249 = vpack.c.b16 %v865, %v857
  %v1250 = vpack.c.b16 %v866, %v858
  %v1251 = vpack.c.b16 %v867, %v859
  %v1252 = vpack.c.b16 %v868, %v860
  %v1253 = vpack.c.b16 %v869, %v861
  %v1254 = vpack.c.b16 %v878, %v870
  %v1255 = vpack.c.b16 %v879, %v871
  %v1256 = vpack.c.b16 %v880, %v872
  %v1257 = vpack.c.b16 %v881, %v873
  %v1258 = vpack.c.b16 %v882, %v874
  %v1259 = vpack.c.b16 %v883, %v875
  %v1260 = vpack.c.b16 %v884, %v876
  %v1261 = vpack.c.b16 %v885, %v877
  %v1262 = vpack.c.b16 %v894, %v886
  %v1263 = vpack.c.b16 %v895, %v887
  %v1264 = vpack.c.b16 %v896, %v888
  %v1265 = vpack.c.b16 %v897, %v889
  %v1266 = vpack.c.b16 %v898, %v890
  %v1267 = vpack.c.b16 %v899, %v891
  %v1268 = vpack.c.b16 %v900, %v892
  %v1269 = vpack.c.b16 %v901, %v893
  %v1270 = vpack.c.b16 %v910, %v902
  %v1271 = vpack.c.b16 %v911, %v903
  %v1272 = vpack.c.b16 %v912, %v904
  %v1273 = vpack.c.b16 %v913, %v905
  %v1274 = vpack.c.b16 %v914, %v906
  %v1275 = vpack.c.b16 %v915, %v907
  %v1276 = vpack.c.b16 %v916, %v908
  %v1277 = vpack.c.b16 %v917, %v909
  %v1278 = vpack.c.b16 %v926, %v918
  %v1279 = vpack.c.b16 %v927, %v919
  %v1280 = vpack.c.b16 %v928, %v920
  %v1281 = vpack.c.b16 %v929, %v921
  %v1282 = vpack.c.b16 %v930, %v922
  %v1283 = vpack.c.b16 %v931, %v923
  %v1284 = vpack.c.b16 %v932, %v924
  %v1285 = vpack.c.b16 %v933, %v925
  %v1286 = vpack.c.b16 %v942, %v934
  %v1287 = vpack.c.b16 %v943, %v935
  %v1288 = vpack.c.b16 %v944, %v936
  %v1289 = vpack.c.b16 %v945, %v937
  %v1290 = vpack.c.b16 %v946, %v938
  %v1291 = vpack.c.b16 %v947, %v939
  %v1292 = vpack.c.b16 %v948, %v940
  %v1293 = vpack.c.b16 %v949, %v941
  %v1294 = vpack.c.b16 %v958, %v950
  %v1295 = vpack.c.b16 %v959, %v951
  %v1296 = vpack.c.b16 %v960, %v952
  %v1297 = vpack.c.b16 %v961, %v953
  %v1298 = vpack.c.b16 %v962, %v954
  %v1299 = vpack.c.b16 %v963, %v955
  %v1300 = vpack.c.b16 %v964, %v956
  %v1301 = vpack.c.b16 %v965, %v957
  %v1302 = vpack.c.b16 %v974, %v966
  %v1303 = vpack.c.b16 %v975, %v967
  %v1304 = vpack.c.b16 %v976, %v968
  %v1305 = vpack.c.b16 %v977, %v969
  %v1306 = vpack.c.b16 %v978, %v970
  %v1307 = vpack.c.b16 %v979, %v971
  %v1308 = vpack.c.b16 %v980, %v972
  %v1309 = vpack.c.b16 %v981, %v973
  %v1310 = vpack.c.b16 %v990, %v982
  %v1311 = vpack.c.b16 %v991, %v983
  %v1312 = vpack.c.b16 %v992, %v984
  %v1313 = vpack.c.b16 %v993, %v985
  %v1314 = vpack.c.b16 %v994, %v986
  %v1315 = vpack.c.b16 %v995, %v987
  %v1316 = vpack.c.b16 %v996, %v988
  %v1317 = vpack.c.b16 %v997, %v989
  %v1318 = vpack.c.b16 %v1006, %v998
  %v1319 = vpack.c.b16 %v1007, %v999
  %v1320 = vpack.c.b16 %v1008, %v1000
  %v1321 = vpack.c.b16 %v1009, %v1001
  %v1322 = vpack.c.b16 %v1010, %v1002
  %v1323 = vpack.c.b16 %v1011, %v1003
  %v1324 = vpack.c.b16 %v1012, %v1004
  %v1325 = vpack.c.b16 %v1013, %v1005
  %v1326 = vpack.c.b16 %v1022, %v1014
  %v1327 = vpack.c.b16 %v1023, %v1015
  %v1328 = vpack.c.b16 %v1024, %v1016
  %v1329 = vpack.c.b16 %v1025, %v1017
  %v1330 = vpack.c.b16 %v1026, %v1018
  %v1331 = vpack.c.b16 %v1027, %v1019
  %v1332 = vpack.c.b16 %v1028, %v1020
  %v1333 = vpack.c.b16 %v1029, %v1021
  %v1334 = vpack.c.b16 %v1038, %v1030
  %v1335 = vpack.c.b16 %v1039, %v1031
  %v1336 = vpack.c.b16 %v1040, %v1032
  %v1337 = vpack.c.b16 %v1041, %v1033
  %v1338 = vpack.c.b16 %v1042, %v1034
  %v1339 = vpack.c.b16 %v1043, %v1035
  %v1340 = vpack.c.b16 %v1044, %v1036
  %v1341 = vpack.c.b16 %v1045, %v1037
  %v1342 = vpack.c.b16 %v1054, %v1046
  %v1343 = vpack.c.b16 %v1055, %v1047
  %v1344 = vpack.c.b16 %v1056, %v1048
  %v1345 = vpack.c.b16 %v1057, %v1049
  %v1346 = vpack.c.b16 %v1058, %v1050
  %v1347 = vpack.c.b16 %v1059, %v1051
  %v1348 = vpack.c.b16 %v1060, %v1052
  %v1349 = vpack.c.b16 %v1061, %v1053
  %v1350 = vpack.c.b16 %v1070, %v1062
  %v1351 = vpack.c.b16 %v1071, %v1063
  %v1352 = vpack.c.b16 %v1072, %v1064
  %v1353 = vpack.c.b16 %v1073, %v1065
  %v1354 = vpack.c.b16 %v1074, %v1066
  %v1355 = vpack.c.b16 %v1075, %v1067
  %v1356 = vpack.c.b16 %v1076, %v1068
  %v1357 = vpack.c.b16 %v1077, %v1069
  %v1358 = vpack.c.b16 %v1086, %v1078
  %v1359 = vpack.c.b16 %v1087, %v1079
  %v1360 = vpack.c.b16 %v1088, %v1080
  %v1361 = vpack.c.b16 %v1089, %v1081
  %v1362 = vpack.c.b16 %v1090, %v1082
  %v1363 = vpack.c.b16 %v1091, %v1083
  %v1364 = vpack.c.b16 %v1092, %v1084
  %v1365 = vpack.c.b16 %v1093, %v1085
  %v1366 = vpack.c.b16 %v1102, %v1094
  %v1367 = vpack.c.b16 %v1103, %v1095
  %v1368 = vpack.c.b16 %v1104, %v1096
  %v1369 = vpack.c.b16 %v1105, %v1097
  %v1370 = vpack.c.b16 %v1106, %v1098
  %v1371 = vpack.c.b16 %v1107, %v1099
  %v1372 = vpack.c.b16 %v1108, %v1100
  %v1373 = vpack.c.b16 %v1109, %v1101
  %v1374 = vpack.c.b16 %v1118, %v1110
  %v1375 = vpack.c.b16 %v1119, %v1111
  %v1376 = vpack.c.b16 %v1120, %v1112
  %v1377 = vpack.c.b16 %v1121, %v1113
  %v1378 = vpack.c.b16 %v1122, %v1114
  %v1379 = vpack.c.b16 %v1123, %v1115
  %v1380 = vpack.c.b16 %v1124, %v1116
  %v1381 = vpack.c.b16 %v1125, %v1117
  %1638 = vmatprep.subr.bf16.mxu0 %v1127
  %1639 = vmatpush1.bf16.msra.mxu0 %v1126
  %1640 = vmatprep.subr.bf16.mxu0 %v1135
  %1641 = vmatpush1.bf16.msra.mxu0 %v1134
  %1642 = vmatprep.subr.bf16.mxu0 %v1143
  %1643 = vmatpush1.bf16.msra.mxu0 %v1142
  %1644 = vmatprep.subr.bf16.mxu0 %v1151
  %1645 = vmatpush1.bf16.msra.mxu0 %v1150
  %1646 = vmatprep.subr.bf16.mxu0 %v1159
  %1647 = vmatpush1.bf16.msra.mxu0 %v1158
  %1648 = vmatprep.subr.bf16.mxu0 %v1167
  %1649 = vmatpush1.bf16.msra.mxu0 %v1166
  %1650 = vmatprep.subr.bf16.mxu0 %v1175
  %1651 = vmatpush1.bf16.msra.mxu0 %v1174
  %1652 = vmatprep.subr.bf16.mxu0 %v1183
  %1653 = vmatpush1.bf16.msra.mxu0 %v1182
  %1654 = vmatprep.subr.bf16.mxu0 %v1191
  %1655 = vmatpush1.bf16.msra.mxu0 %v1190
  %1656 = vmatprep.subr.bf16.mxu0 %v1199
  %1657 = vmatpush1.bf16.msra.mxu0 %v1198
  %1658 = vmatprep.subr.bf16.mxu0 %v1207
  %1659 = vmatpush1.bf16.msra.mxu0 %v1206
  %1660 = vmatprep.subr.bf16.mxu0 %v1215
  %1661 = vmatpush1.bf16.msra.mxu0 %v1214
  %1662 = vmatprep.subr.bf16.mxu0 %v1223
  %1663 = vmatpush1.bf16.msra.mxu0 %v1222
  %1664 = vmatprep.subr.bf16.mxu0 %v1231
  %1665 = vmatpush1.bf16.msra.mxu0 %v1230
  %1666 = vmatprep.subr.bf16.mxu0 %v1239
  %1667 = vmatpush1.bf16.msra.mxu0 %v1238
  %1668 = vmatprep.subr.bf16.mxu0 %v1247
  %1669 = vmatpush1.bf16.msra.mxu0 %v1246
  %1670 = vmatprep.mubr.bf16.mxu0 %v351
  %1671 = vmatmul.mubr.bf16.gmra.mrb[0].mxu0 %v350
  %v1672 = vpop.f32.mrb[0].mxu0
  %v1673 = vadd.f32 0.0, %v1672
  %v1674 = vpop.f32.mrb[0].mxu0
  %v1675 = vadd.f32 0.0, %v1674
  %v1676 = vpop.f32.mrb[0].mxu0
  %v1677 = vpop.f32.mrb[0].mxu0
  %1678 = vdwg.mxu0
  %1679 = vmatprep.subr.bf16.mxu0 %v1255
  %1680 = vmatpush1.bf16.msra.mxu0 %v1254
  %1681 = vmatprep.subr.bf16.mxu0 %v1263
  %1682 = vmatpush1.bf16.msra.mxu0 %v1262
  %1683 = vmatprep.subr.bf16.mxu0 %v1271
  %1684 = vmatpush1.bf16.msra.mxu0 %v1270
  %1685 = vmatprep.subr.bf16.mxu0 %v1279
  %1686 = vmatpush1.bf16.msra.mxu0 %v1278
  %1687 = vmatprep.subr.bf16.mxu0 %v1287
  %1688 = vmatpush1.bf16.msra.mxu0 %v1286
  %1689 = vmatprep.subr.bf16.mxu0 %v1295
  %1690 = vmatpush1.bf16.msra.mxu0 %v1294
  %1691 = vmatprep.subr.bf16.mxu0 %v1303
  %1692 = vmatpush1.bf16.msra.mxu0 %v1302
  %1693 = vmatprep.subr.bf16.mxu0 %v1311
  %1694 = vmatpush1.bf16.msra.mxu0 %v1310
  %1695 = vmatprep.subr.bf16.mxu0 %v1319
  %1696 = vmatpush1.bf16.msra.mxu0 %v1318
  %1697 = vmatprep.subr.bf16.mxu0 %v1327
  %1698 = vmatpush1.bf16.msra.mxu0 %v1326
  %1699 = vmatprep.subr.bf16.mxu0 %v1335
  %1700 = vmatpush1.bf16.msra.mxu0 %v1334
  %1701 = vmatprep.subr.bf16.mxu0 %v1343
  %1702 = vmatpush1.bf16.msra.mxu0 %v1342
  %1703 = vmatprep.subr.bf16.mxu0 %v1351
  %1704 = vmatpush1.bf16.msra.mxu0 %v1350
  %1705 = vmatprep.subr.bf16.mxu0 %v1359
  %1706 = vmatpush1.bf16.msra.mxu0 %v1358
  %1707 = vmatprep.subr.bf16.mxu0 %v1367
  %1708 = vmatpush1.bf16.msra.mxu0 %v1366
  %1709 = vmatprep.subr.bf16.mxu0 %v1375
  %1710 = vmatpush1.bf16.msra.mxu0 %v1374
  %1711 = vmatprep.mubr.bf16.mxu0 %v353
  %1712 = vmatmul.mubr.bf16.gmra.mrb[0].mxu0 %v352
  %v1713 = vpop.f32.mrb[0].mxu0
  %v1714 = vadd.f32 %v1673, %v1713
  %v1715 = vpop.f32.mrb[0].mxu0
  %v1716 = vadd.f32 %v1675, %v1715
  %v1717 = vpop.f32.mrb[0].mxu0
  %v1718 = vpop.f32.mrb[0].mxu0
  %1719 = vdwg.mxu0
  %1720 = vmatprep.subr.bf16.mxu0 %v1129
  %1721 = vmatpush1.bf16.msra.mxu0 %v1128
  %1722 = vmatprep.subr.bf16.mxu0 %v1137
  %1723 = vmatpush1.bf16.msra.mxu0 %v1136
  %1724 = vmatprep.subr.bf16.mxu0 %v1145
  %1725 = vmatpush1.bf16.msra.mxu0 %v1144
  %1726 = vmatprep.subr.bf16.mxu0 %v1153
  %1727 = vmatpush1.bf16.msra.mxu0 %v1152
  %1728 = vmatprep.subr.bf16.mxu0 %v1161
  %1729 = vmatpush1.bf16.msra.mxu0 %v1160
  %1730 = vmatprep.subr.bf16.mxu0 %v1169
  %1731 = vmatpush1.bf16.msra.mxu0 %v1168
  %1732 = vmatprep.subr.bf16.mxu0 %v1177
  %1733 = vmatpush1.bf16.msra.mxu0 %v1176
  %1734 = vmatprep.subr.bf16.mxu0 %v1185
  %1735 = vmatpush1.bf16.msra.mxu0 %v1184
  %1736 = vmatprep.subr.bf16.mxu0 %v1193
  %1737 = vmatpush1.bf16.msra.mxu0 %v1192
  %1738 = vmatprep.subr.bf16.mxu0 %v1201
  %1739 = vmatpush1.bf16.msra.mxu0 %v1200
  %1740 = vmatprep.subr.bf16.mxu0 %v1209
  %1741 = vmatpush1.bf16.msra.mxu0 %v1208
  %1742 = vmatprep.subr.bf16.mxu0 %v1217
  %1743 = vmatpush1.bf16.msra.mxu0 %v1216
  %1744 = vmatprep.subr.bf16.mxu0 %v1225
  %1745 = vmatpush1.bf16.msra.mxu0 %v1224
  %1746 = vmatprep.subr.bf16.mxu0 %v1233
  %1747 = vmatpush1.bf16.msra.mxu0 %v1232
  %1748 = vmatprep.subr.bf16.mxu0 %v1241
  %1749 = vmatpush1.bf16.msra.mxu0 %v1240
  %1750 = vmatprep.subr.bf16.mxu0 %v1249
  %1751 = vmatpush1.bf16.msra.mxu0 %v1248
  %1752 = vmatprep.mubr.bf16.mxu0 %v351
  %1753 = vmatmul.mubr.bf16.gmra.mrb[0].mxu0 %v350
  %v1754 = vpop.f32.mrb[0].mxu0
  %v1755 = vadd.f32 0.0, %v1754
  %v1756 = vpop.f32.mrb[0].mxu0
  %v1757 = vadd.f32 0.0, %v1756
  %v1758 = vpop.f32.mrb[0].mxu0
  %v1759 = vpop.f32.mrb[0].mxu0
  %1760 = vdwg.mxu0
  %1761 = vmatprep.subr.bf16.mxu0 %v1257
  %1762 = vmatpush1.bf16.msra.mxu0 %v1256
  %1763 = vmatprep.subr.bf16.mxu0 %v1265
  %1764 = vmatpush1.bf16.msra.mxu0 %v1264
  %1765 = vmatprep.subr.bf16.mxu0 %v1273
  %1766 = vmatpush1.bf16.msra.mxu0 %v1272
  %1767 = vmatprep.subr.bf16.mxu0 %v1281
  %1768 = vmatpush1.bf16.msra.mxu0 %v1280
  %1769 = vmatprep.subr.bf16.mxu0 %v1289
  %1770 = vmatpush1.bf16.msra.mxu0 %v1288
  %1771 = vmatprep.subr.bf16.mxu0 %v1297
  %1772 = vmatpush1.bf16.msra.mxu0 %v1296
  %1773 = vmatprep.subr.bf16.mxu0 %v1305
  %1774 = vmatpush1.bf16.msra.mxu0 %v1304
  %1775 = vmatprep.subr.bf16.mxu0 %v1313
  %1776 = vmatpush1.bf16.msra.mxu0 %v1312
  %1777 = vmatprep.subr.bf16.mxu0 %v1321
  %1778 = vmatpush1.bf16.msra.mxu0 %v1320
  %1779 = vmatprep.subr.bf16.mxu0 %v1329
  %1780 = vmatpush1.bf16.msra.mxu0 %v1328
  %1781 = vmatprep.subr.bf16.mxu0 %v1337
  %1782 = vmatpush1.bf16.msra.mxu0 %v1336
  %1783 = vmatprep.subr.bf16.mxu0 %v1345
  %1784 = vmatpush1.bf16.msra.mxu0 %v1344
  %1785 = vmatprep.subr.bf16.mxu0 %v1353
  %1786 = vmatpush1.bf16.msra.mxu0 %v1352
  %1787 = vmatprep.subr.bf16.mxu0 %v1361
  %1788 = vmatpush1.bf16.msra.mxu0 %v1360
  %1789 = vmatprep.subr.bf16.mxu0 %v1369
  %1790 = vmatpush1.bf16.msra.mxu0 %v1368
  %1791 = vmatprep.subr.bf16.mxu0 %v1377
  %1792 = vmatpush1.bf16.msra.mxu0 %v1376
  %1793 = vmatprep.mubr.bf16.mxu0 %v353
  %1794 = vmatmul.mubr.bf16.gmra.mrb[0].mxu0 %v352
  %v1795 = vpop.f32.mrb[0].mxu0
  %v1796 = vadd.f32 %v1755, %v1795
  %v1797 = vpop.f32.mrb[0].mxu0
  %v1798 = vadd.f32 %v1757, %v1797
  %v1799 = vpop.f32.mrb[0].mxu0
  %v1800 = vpop.f32.mrb[0].mxu0
  %1801 = vdwg.mxu0
  %1802 = vmatprep.subr.bf16.mxu0 %v1131
  %1803 = vmatpush1.bf16.msra.mxu0 %v1130
  %1804 = vmatprep.subr.bf16.mxu0 %v1139
  %1805 = vmatpush1.bf16.msra.mxu0 %v1138
  %1806 = vmatprep.subr.bf16.mxu0 %v1147
  %1807 = vmatpush1.bf16.msra.mxu0 %v1146
  %1808 = vmatprep.subr.bf16.mxu0 %v1155
  %1809 = vmatpush1.bf16.msra.mxu0 %v1154
  %1810 = vmatprep.subr.bf16.mxu0 %v1163
  %1811 = vmatpush1.bf16.msra.mxu0 %v1162
  %1812 = vmatprep.subr.bf16.mxu0 %v1171
  %1813 = vmatpush1.bf16.msra.mxu0 %v1170
  %1814 = vmatprep.subr.bf16.mxu0 %v1179
  %1815 = vmatpush1.bf16.msra.mxu0 %v1178
  %1816 = vmatprep.subr.bf16.mxu0 %v1187
  %1817 = vmatpush1.bf16.msra.mxu0 %v1186
  %1818 = vmatprep.subr.bf16.mxu0 %v1195
  %1819 = vmatpush1.bf16.msra.mxu0 %v1194
  %1820 = vmatprep.subr.bf16.mxu0 %v1203
  %1821 = vmatpush1.bf16.msra.mxu0 %v1202
  %1822 = vmatprep.subr.bf16.mxu0 %v1211
  %1823 = vmatpush1.bf16.msra.mxu0 %v1210
  %1824 = vmatprep.subr.bf16.mxu0 %v1219
  %1825 = vmatpush1.bf16.msra.mxu0 %v1218
  %1826 = vmatprep.subr.bf16.mxu0 %v1227
  %1827 = vmatpush1.bf16.msra.mxu0 %v1226
  %1828 = vmatprep.subr.bf16.mxu0 %v1235
  %1829 = vmatpush1.bf16.msra.mxu0 %v1234
  %1830 = vmatprep.subr.bf16.mxu0 %v1243
  %1831 = vmatpush1.bf16.msra.mxu0 %v1242
  %1832 = vmatprep.subr.bf16.mxu0 %v1251
  %1833 = vmatpush1.bf16.msra.mxu0 %v1250
  %1834 = vmatprep.mubr.bf16.mxu0 %v351
  %1835 = vmatmul.mubr.bf16.gmra.mrb[0].mxu0 %v350
  %v1836 = vpop.f32.mrb[0].mxu0
  %v1837 = vadd.f32 0.0, %v1836
  %v1838 = vpop.f32.mrb[0].mxu0
  %v1839 = vadd.f32 0.0, %v1838
  %v1840 = vpop.f32.mrb[0].mxu0
  %v1841 = vpop.f32.mrb[0].mxu0
  %1842 = vdwg.mxu0
  %1843 = vmatprep.subr.bf16.mxu0 %v1259
  %1844 = vmatpush1.bf16.msra.mxu0 %v1258
  %1845 = vmatprep.subr.bf16.mxu0 %v1267
  %1846 = vmatpush1.bf16.msra.mxu0 %v1266
  %1847 = vmatprep.subr.bf16.mxu0 %v1275
  %1848 = vmatpush1.bf16.msra.mxu0 %v1274
  %1849 = vmatprep.subr.bf16.mxu0 %v1283
  %1850 = vmatpush1.bf16.msra.mxu0 %v1282
  %1851 = vmatprep.subr.bf16.mxu0 %v1291
  %1852 = vmatpush1.bf16.msra.mxu0 %v1290
  %1853 = vmatprep.subr.bf16.mxu0 %v1299
  %1854 = vmatpush1.bf16.msra.mxu0 %v1298
  %1855 = vmatprep.subr.bf16.mxu0 %v1307
  %1856 = vmatpush1.bf16.msra.mxu0 %v1306
  %1857 = vmatprep.subr.bf16.mxu0 %v1315
  %1858 = vmatpush1.bf16.msra.mxu0 %v1314
  %1859 = vmatprep.subr.bf16.mxu0 %v1323
  %1860 = vmatpush1.bf16.msra.mxu0 %v1322
  %1861 = vmatprep.subr.bf16.mxu0 %v1331
  %1862 = vmatpush1.bf16.msra.mxu0 %v1330
  %1863 = vmatprep.subr.bf16.mxu0 %v1339
  %1864 = vmatpush1.bf16.msra.mxu0 %v1338
  %1865 = vmatprep.subr.bf16.mxu0 %v1347
  %1866 = vmatpush1.bf16.msra.mxu0 %v1346
  %1867 = vmatprep.subr.bf16.mxu0 %v1355
  %1868 = vmatpush1.bf16.msra.mxu0 %v1354
  %1869 = vmatprep.subr.bf16.mxu0 %v1363
  %1870 = vmatpush1.bf16.msra.mxu0 %v1362
  %1871 = vmatprep.subr.bf16.mxu0 %v1371
  %1872 = vmatpush1.bf16.msra.mxu0 %v1370
  %1873 = vmatprep.subr.bf16.mxu0 %v1379
  %1874 = vmatpush1.bf16.msra.mxu0 %v1378
  %1875 = vmatprep.mubr.bf16.mxu0 %v353
  %1876 = vmatmul.mubr.bf16.gmra.mrb[0].mxu0 %v352
  %v1877 = vpop.f32.mrb[0].mxu0
  %v1878 = vadd.f32 %v1837, %v1877
  %v1879 = vpop.f32.mrb[0].mxu0
  %v1880 = vadd.f32 %v1839, %v1879
  %v1881 = vpop.f32.mrb[0].mxu0
  %v1882 = vpop.f32.mrb[0].mxu0
  %1883 = vdwg.mxu0
  %1884 = vmatprep.subr.bf16.mxu0 %v1133
  %1885 = vmatpush1.bf16.msra.mxu0 %v1132
  %1886 = vmatprep.subr.bf16.mxu0 %v1141
  %1887 = vmatpush1.bf16.msra.mxu0 %v1140
  %1888 = vmatprep.subr.bf16.mxu0 %v1149
  %1889 = vmatpush1.bf16.msra.mxu0 %v1148
  %1890 = vmatprep.subr.bf16.mxu0 %v1157
  %1891 = vmatpush1.bf16.msra.mxu0 %v1156
  %1892 = vmatprep.subr.bf16.mxu0 %v1165
  %1893 = vmatpush1.bf16.msra.mxu0 %v1164
  %1894 = vmatprep.subr.bf16.mxu0 %v1173
  %1895 = vmatpush1.bf16.msra.mxu0 %v1172
  %1896 = vmatprep.subr.bf16.mxu0 %v1181
  %1897 = vmatpush1.bf16.msra.mxu0 %v1180
  %1898 = vmatprep.subr.bf16.mxu0 %v1189
  %1899 = vmatpush1.bf16.msra.mxu0 %v1188
  %1900 = vmatprep.subr.bf16.mxu0 %v1197
  %1901 = vmatpush1.bf16.msra.mxu0 %v1196
  %1902 = vmatprep.subr.bf16.mxu0 %v1205
  %1903 = vmatpush1.bf16.msra.mxu0 %v1204
  %1904 = vmatprep.subr.bf16.mxu0 %v1213
  %1905 = vmatpush1.bf16.msra.mxu0 %v1212
  %1906 = vmatprep.subr.bf16.mxu0 %v1221
  %1907 = vmatpush1.bf16.msra.mxu0 %v1220
  %1908 = vmatprep.subr.bf16.mxu0 %v1229
  %1909 = vmatpush1.bf16.msra.mxu0 %v1228
  %1910 = vmatprep.subr.bf16.mxu0 %v1237
  %1911 = vmatpush1.bf16.msra.mxu0 %v1236
  %1912 = vmatprep.subr.bf16.mxu0 %v1245
  %1913 = vmatpush1.bf16.msra.mxu0 %v1244
  %1914 = vmatprep.subr.bf16.mxu0 %v1253
  %1915 = vmatpush1.bf16.msra.mxu0 %v1252
  %1916 = vmatprep.mubr.bf16.mxu0 %v351
  %1917 = vmatmul.mubr.bf16.gmra.mrb[0].mxu0 %v350
  %v1918 = vpop.f32.mrb[0].mxu0
  %v1919 = vadd.f32 0.0, %v1918
  %v1920 = vpop.f32.mrb[0].mxu0
  %v1921 = vadd.f32 0.0, %v1920
  %v1922 = vpop.f32.mrb[0].mxu0
  %v1923 = vpop.f32.mrb[0].mxu0
  %1924 = vdwg.mxu0
  %1925 = vmatprep.subr.bf16.mxu0 %v1261
  %1926 = vmatpush1.bf16.msra.mxu0 %v1260
  %1927 = vmatprep.subr.bf16.mxu0 %v1269
  %1928 = vmatpush1.bf16.msra.mxu0 %v1268
  %1929 = vmatprep.subr.bf16.mxu0 %v1277
  %1930 = vmatpush1.bf16.msra.mxu0 %v1276
  %1931 = vmatprep.subr.bf16.mxu0 %v1285
  %1932 = vmatpush1.bf16.msra.mxu0 %v1284
  %1933 = vmatprep.subr.bf16.mxu0 %v1293
  %1934 = vmatpush1.bf16.msra.mxu0 %v1292
  %1935 = vmatprep.subr.bf16.mxu0 %v1301
  %1936 = vmatpush1.bf16.msra.mxu0 %v1300
  %1937 = vmatprep.subr.bf16.mxu0 %v1309
  %1938 = vmatpush1.bf16.msra.mxu0 %v1308
  %1939 = vmatprep.subr.bf16.mxu0 %v1317
  %1940 = vmatpush1.bf16.msra.mxu0 %v1316
  %1941 = vmatprep.subr.bf16.mxu0 %v1325
  %1942 = vmatpush1.bf16.msra.mxu0 %v1324
  %1943 = vmatprep.subr.bf16.mxu0 %v1333
  %1944 = vmatpush1.bf16.msra.mxu0 %v1332
  %1945 = vmatprep.subr.bf16.mxu0 %v1341
  %1946 = vmatpush1.bf16.msra.mxu0 %v1340
  %1947 = vmatprep.subr.bf16.mxu0 %v1349
  %1948 = vmatpush1.bf16.msra.mxu0 %v1348
  %1949 = vmatprep.subr.bf16.mxu0 %v1357
  %1950 = vmatpush1.bf16.msra.mxu0 %v1356
  %1951 = vmatprep.subr.bf16.mxu0 %v1365
  %1952 = vmatpush1.bf16.msra.mxu0 %v1364
  %1953 = vmatprep.subr.bf16.mxu0 %v1373
  %1954 = vmatpush1.bf16.msra.mxu0 %v1372
  %1955 = vmatprep.subr.bf16.mxu0 %v1381
  %1956 = vmatpush1.bf16.msra.mxu0 %v1380
  %1957 = vmatprep.mubr.bf16.mxu0 %v353
  %1958 = vmatmul.mubr.bf16.gmra.mrb[0].mxu0 %v352
  %v1959 = vpop.f32.mrb[0].mxu0
  %v1960 = vadd.f32 %v1919, %v1959
  %v1961 = vpop.f32.mrb[0].mxu0
  %v1962 = vadd.f32 %v1921, %v1961
  %v1963 = vpop.f32.mrb[0].mxu0
  %v1964 = vpop.f32.mrb[0].mxu0
  %1965 = vdwg.mxu0
  %v2030 = vunpack.c.l.b16 %v22
  %v2031 = vunpack.c.h.b16 %v22
  %v2032 = vunpack.c.l.b16 %v23
  %v2033 = vunpack.c.h.b16 %v23
  %v2034 = vunpack.c.l.b16 %v24
  %v2035 = vunpack.c.h.b16 %v24
  %v2036 = vunpack.c.l.b16 %v25
  %v2037 = vunpack.c.h.b16 %v25
  %v2038 = vunpack.c.l.b16 %v26
  %v2039 = vunpack.c.h.b16 %v26
  %v2040 = vunpack.c.l.b16 %v27
  %v2041 = vunpack.c.h.b16 %v27
  %v2042 = vunpack.c.l.b16 %v28
  %v2043 = vunpack.c.h.b16 %v28
  %v2044 = vunpack.c.l.b16 %v29
  %v2045 = vunpack.c.h.b16 %v29
  %v2046 = vunpack.c.l.b16 %v30
  %v2047 = vunpack.c.h.b16 %v30
  %v2048 = vunpack.c.l.b16 %v31
  %v2049 = vunpack.c.h.b16 %v31
  %v2050 = vunpack.c.l.b16 %v32
  %v2051 = vunpack.c.h.b16 %v32
  %v2052 = vunpack.c.l.b16 %v33
  %v2053 = vunpack.c.h.b16 %v33
  %v2054 = vunpack.c.l.b16 %v34
  %v2055 = vunpack.c.h.b16 %v34
  %v2056 = vunpack.c.l.b16 %v35
  %v2057 = vunpack.c.h.b16 %v35
  %v2058 = vunpack.c.l.b16 %v36
  %v2059 = vunpack.c.h.b16 %v36
  %v2060 = vunpack.c.l.b16 %v37
  %v2061 = vunpack.c.h.b16 %v37
  %v2062 = vunpack.c.l.b16 %v38
  %v2063 = vunpack.c.h.b16 %v38
  %v2064 = vunpack.c.l.b16 %v39
  %v2065 = vunpack.c.h.b16 %v39
  %v2066 = vunpack.c.l.b16 %v40
  %v2067 = vunpack.c.h.b16 %v40
  %v2068 = vunpack.c.l.b16 %v41
  %v2069 = vunpack.c.h.b16 %v41
  %v2070 = vunpack.c.l.b16 %v42
  %v2071 = vunpack.c.h.b16 %v42
  %v2072 = vunpack.c.l.b16 %v43
  %v2073 = vunpack.c.h.b16 %v43
  %v2074 = vunpack.c.l.b16 %v44
  %v2075 = vunpack.c.h.b16 %v44
  %v2076 = vunpack.c.l.b16 %v45
  %v2077 = vunpack.c.h.b16 %v45
  %v2078 = vunpack.c.l.b16 %v46
  %v2079 = vunpack.c.h.b16 %v46
  %v2080 = vunpack.c.l.b16 %v47
  %v2081 = vunpack.c.h.b16 %v47
  %v2082 = vunpack.c.l.b16 %v48
  %v2083 = vunpack.c.h.b16 %v48
  %v2084 = vunpack.c.l.b16 %v49
  %v2085 = vunpack.c.h.b16 %v49
  %v2086 = vunpack.c.l.b16 %v50
  %v2087 = vunpack.c.h.b16 %v50
  %v2088 = vunpack.c.l.b16 %v51
  %v2089 = vunpack.c.h.b16 %v51
  %v2090 = vunpack.c.l.b16 %v52
  %v2091 = vunpack.c.h.b16 %v52
  %v2092 = vunpack.c.l.b16 %v53
  %v2093 = vunpack.c.h.b16 %v53
  %v2094 = vunpack.c.l.b16 %v54
  %v2095 = vunpack.c.h.b16 %v54
  %v2096 = vunpack.c.l.b16 %v55
  %v2097 = vunpack.c.h.b16 %v55
  %v2098 = vunpack.c.l.b16 %v56
  %v2099 = vunpack.c.h.b16 %v56
  %v2100 = vunpack.c.l.b16 %v57
  %v2101 = vunpack.c.h.b16 %v57
  %v2102 = vunpack.c.l.b16 %v58
  %v2103 = vunpack.c.h.b16 %v58
  %v2104 = vunpack.c.l.b16 %v59
  %v2105 = vunpack.c.h.b16 %v59
  %v2106 = vunpack.c.l.b16 %v60
  %v2107 = vunpack.c.h.b16 %v60
  %v2108 = vunpack.c.l.b16 %v61
  %v2109 = vunpack.c.h.b16 %v61
  %v2110 = vunpack.c.l.b16 %v62
  %v2111 = vunpack.c.h.b16 %v62
  %v2112 = vunpack.c.l.b16 %v63
  %v2113 = vunpack.c.h.b16 %v63
  %v2114 = vunpack.c.l.b16 %v64
  %v2115 = vunpack.c.h.b16 %v64
  %v2116 = vunpack.c.l.b16 %v65
  %v2117 = vunpack.c.h.b16 %v65
  %v2118 = vunpack.c.l.b16 %v66
  %v2119 = vunpack.c.h.b16 %v66
  %v2120 = vunpack.c.l.b16 %v67
  %v2121 = vunpack.c.h.b16 %v67
  %v2122 = vunpack.c.l.b16 %v68
  %v2123 = vunpack.c.h.b16 %v68
  %v2124 = vunpack.c.l.b16 %v69
  %v2125 = vunpack.c.h.b16 %v69
  %v2126 = vunpack.c.l.b16 %v70
  %v2127 = vunpack.c.h.b16 %v70
  %v2128 = vunpack.c.l.b16 %v71
  %v2129 = vunpack.c.h.b16 %v71
  %v2130 = vunpack.c.l.b16 %v72
  %v2131 = vunpack.c.h.b16 %v72
  %v2132 = vunpack.c.l.b16 %v73
  %v2133 = vunpack.c.h.b16 %v73
  %v2134 = vunpack.c.l.b16 %v74
  %v2135 = vunpack.c.h.b16 %v74
  %v2136 = vunpack.c.l.b16 %v75
  %v2137 = vunpack.c.h.b16 %v75
  %v2138 = vunpack.c.l.b16 %v76
  %v2139 = vunpack.c.h.b16 %v76
  %v2140 = vunpack.c.l.b16 %v77
  %v2141 = vunpack.c.h.b16 %v77
  %v2142 = vunpack.c.l.b16 %v78
  %v2143 = vunpack.c.h.b16 %v78
  %v2144 = vunpack.c.l.b16 %v79
  %v2145 = vunpack.c.h.b16 %v79
  %v2146 = vunpack.c.l.b16 %v80
  %v2147 = vunpack.c.h.b16 %v80
  %v2148 = vunpack.c.l.b16 %v81
  %v2149 = vunpack.c.h.b16 %v81
  %v2150 = vunpack.c.l.b16 %v82
  %v2151 = vunpack.c.h.b16 %v82
  %v2152 = vunpack.c.l.b16 %v83
  %v2153 = vunpack.c.h.b16 %v83
  %v2154 = vunpack.c.l.b16 %v84
  %v2155 = vunpack.c.h.b16 %v84
  %v2156 = vunpack.c.l.b16 %v85
  %v2157 = vunpack.c.h.b16 %v85
  %v2158 = vpack.c.b16 %v2038, %v2030
  %v2159 = vpack.c.b16 %v2039, %v2031
  %v2160 = vpack.c.b16 %v2040, %v2032
  %v2161 = vpack.c.b16 %v2041, %v2033
  %v2162 = vpack.c.b16 %v2042, %v2034
  %v2163 = vpack.c.b16 %v2043, %v2035
  %v2164 = vpack.c.b16 %v2044, %v2036
  %v2165 = vpack.c.b16 %v2045, %v2037
  %v2166 = vpack.c.b16 %v2054, %v2046
  %v2167 = vpack.c.b16 %v2055, %v2047
  %v2168 = vpack.c.b16 %v2056, %v2048
  %v2169 = vpack.c.b16 %v2057, %v2049
  %v2170 = vpack.c.b16 %v2058, %v2050
  %v2171 = vpack.c.b16 %v2059, %v2051
  %v2172 = vpack.c.b16 %v2060, %v2052
  %v2173 = vpack.c.b16 %v2061, %v2053
  %v2174 = vpack.c.b16 %v2070, %v2062
  %v2175 = vpack.c.b16 %v2071, %v2063
  %v2176 = vpack.c.b16 %v2072, %v2064
  %v2177 = vpack.c.b16 %v2073, %v2065
  %v2178 = vpack.c.b16 %v2074, %v2066
  %v2179 = vpack.c.b16 %v2075, %v2067
  %v2180 = vpack.c.b16 %v2076, %v2068
  %v2181 = vpack.c.b16 %v2077, %v2069
  %v2182 = vpack.c.b16 %v2086, %v2078
  %v2183 = vpack.c.b16 %v2087, %v2079
  %v2184 = vpack.c.b16 %v2088, %v2080
  %v2185 = vpack.c.b16 %v2089, %v2081
  %v2186 = vpack.c.b16 %v2090, %v2082
  %v2187 = vpack.c.b16 %v2091, %v2083
  %v2188 = vpack.c.b16 %v2092, %v2084
  %v2189 = vpack.c.b16 %v2093, %v2085
  %v2190 = vpack.c.b16 %v2102, %v2094
  %v2191 = vpack.c.b16 %v2103, %v2095
  %v2192 = vpack.c.b16 %v2104, %v2096
  %v2193 = vpack.c.b16 %v2105, %v2097
  %v2194 = vpack.c.b16 %v2106, %v2098
  %v2195 = vpack.c.b16 %v2107, %v2099
  %v2196 = vpack.c.b16 %v2108, %v2100
  %v2197 = vpack.c.b16 %v2109, %v2101
  %v2198 = vpack.c.b16 %v2118, %v2110
  %v2199 = vpack.c.b16 %v2119, %v2111
  %v2200 = vpack.c.b16 %v2120, %v2112
  %v2201 = vpack.c.b16 %v2121, %v2113
  %v2202 = vpack.c.b16 %v2122, %v2114
  %v2203 = vpack.c.b16 %v2123, %v2115
  %v2204 = vpack.c.b16 %v2124, %v2116
  %v2205 = vpack.c.b16 %v2125, %v2117
  %v2206 = vpack.c.b16 %v2134, %v2126
  %v2207 = vpack.c.b16 %v2135, %v2127
  %v2208 = vpack.c.b16 %v2136, %v2128
  %v2209 = vpack.c.b16 %v2137, %v2129
  %v2210 = vpack.c.b16 %v2138, %v2130
  %v2211 = vpack.c.b16 %v2139, %v2131
  %v2212 = vpack.c.b16 %v2140, %v2132
  %v2213 = vpack.c.b16 %v2141, %v2133
  %v2214 = vpack.c.b16 %v2150, %v2142
  %v2215 = vpack.c.b16 %v2151, %v2143
  %v2216 = vpack.c.b16 %v2152, %v2144
  %v2217 = vpack.c.b16 %v2153, %v2145
  %v2218 = vpack.c.b16 %v2154, %v2146
  %v2219 = vpack.c.b16 %v2155, %v2147
  %v2220 = vpack.c.b16 %v2156, %v2148
  %v2221 = vpack.c.b16 %v2157, %v2149
  %2286 = vmatprep.subr.bf16.mxu0 %v2159
  %2287 = vmatpush1.bf16.msra.mxu0 %v2158
  %2288 = vmatprep.subr.bf16.mxu0 %v2167
  %2289 = vmatpush1.bf16.msra.mxu0 %v2166
  %2290 = vmatprep.subr.bf16.mxu0 %v2175
  %2291 = vmatpush1.bf16.msra.mxu0 %v2174
  %2292 = vmatprep.subr.bf16.mxu0 %v2183
  %2293 = vmatpush1.bf16.msra.mxu0 %v2182
  %2294 = vmatprep.subr.bf16.mxu0 %v2191
  %2295 = vmatpush1.bf16.msra.mxu0 %v2190
  %2296 = vmatprep.subr.bf16.mxu0 %v2199
  %2297 = vmatpush1.bf16.msra.mxu0 %v2198
  %2298 = vmatprep.subr.bf16.mxu0 %v2207
  %2299 = vmatpush1.bf16.msra.mxu0 %v2206
  %2300 = vmatprep.subr.bf16.mxu0 %v2215
  %2301 = vmatpush1.bf16.msra.mxu0 %v2214
  %2302 = vmatprep.subr.bf16.mxu0 0
  %2303 = vmatpush1.bf16.msra.mxu0 0
  %2304 = vmatprep.subr.bf16.mxu0 0
  %2305 = vmatpush1.bf16.msra.mxu0 0
  %2306 = vmatprep.subr.bf16.mxu0 0
  %2307 = vmatpush1.bf16.msra.mxu0 0
  %2308 = vmatprep.subr.bf16.mxu0 0
  %2309 = vmatpush1.bf16.msra.mxu0 0
  %2310 = vmatprep.subr.bf16.mxu0 0
  %2311 = vmatpush1.bf16.msra.mxu0 0
  %2312 = vmatprep.subr.bf16.mxu0 0
  %2313 = vmatpush1.bf16.msra.mxu0 0
  %2314 = vmatprep.subr.bf16.mxu0 0
  %2315 = vmatpush1.bf16.msra.mxu0 0
  %2316 = vmatprep.subr.bf16.mxu0 0
  %2317 = vmatpush1.bf16.msra.mxu0 0
  %2318 = vmatprep.mubr.bf16.mxu0 0
  %2319 = vmatmul.mubr.bf16.gmra.mrb[0].mxu0 %v21
  %v2320 = vpop.f32.mrb[0].mxu0
  %v2321 = vadd.f32 %v1714, %v2320
  %v2322 = vpop.f32.mrb[0].mxu0
  %v2323 = vadd.f32 %v1716, %v2322
  %v2324 = vpop.f32.mrb[0].mxu0
  %v2325 = vpop.f32.mrb[0].mxu0
  %2326 = vdwg.mxu0
  %2327 = vmatprep.subr.bf16.mxu0 %v2161
  %2328 = vmatpush1.bf16.msra.mxu0 %v2160
  %2329 = vmatprep.subr.bf16.mxu0 %v2169
  %2330 = vmatpush1.bf16.msra.mxu0 %v2168
  %2331 = vmatprep.subr.bf16.mxu0 %v2177
  %2332 = vmatpush1.bf16.msra.mxu0 %v2176
  %2333 = vmatprep.subr.bf16.mxu0 %v2185
  %2334 = vmatpush1.bf16.msra.mxu0 %v2184
  %2335 = vmatprep.subr.bf16.mxu0 %v2193
  %2336 = vmatpush1.bf16.msra.mxu0 %v2192
  %2337 = vmatprep.subr.bf16.mxu0 %v2201
  %2338 = vmatpush1.bf16.msra.mxu0 %v2200
  %2339 = vmatprep.subr.bf16.mxu0 %v2209
  %2340 = vmatpush1.bf16.msra.mxu0 %v2208
  %2341 = vmatprep.subr.bf16.mxu0 %v2217
  %2342 = vmatpush1.bf16.msra.mxu0 %v2216
  %2343 = vmatprep.subr.bf16.mxu0 0
  %2344 = vmatpush1.bf16.msra.mxu0 0
  %2345 = vmatprep.subr.bf16.mxu0 0
  %2346 = vmatpush1.bf16.msra.mxu0 0
  %2347 = vmatprep.subr.bf16.mxu0 0
  %2348 = vmatpush1.bf16.msra.mxu0 0
  %2349 = vmatprep.subr.bf16.mxu0 0
  %2350 = vmatpush1.bf16.msra.mxu0 0
  %2351 = vmatprep.subr.bf16.mxu0 0
  %2352 = vmatpush1.bf16.msra.mxu0 0
  %2353 = vmatprep.subr.bf16.mxu0 0
  %2354 = vmatpush1.bf16.msra.mxu0 0
  %2355 = vmatprep.subr.bf16.mxu0 0
  %2356 = vmatpush1.bf16.msra.mxu0 0
  %2357 = vmatprep.subr.bf16.mxu0 0
  %2358 = vmatpush1.bf16.msra.mxu0 0
  %2359 = vmatprep.mubr.bf16.mxu0 0
  %2360 = vmatmul.mubr.bf16.gmra.mrb[0].mxu0 %v21
  %v2361 = vpop.f32.mrb[0].mxu0
  %v2362 = vadd.f32 %v1796, %v2361
  %v2363 = vpop.f32.mrb[0].mxu0
  %v2364 = vadd.f32 %v1798, %v2363
  %v2365 = vpop.f32.mrb[0].mxu0
  %v2366 = vpop.f32.mrb[0].mxu0
  %2367 = vdwg.mxu0
  %2368 = vmatprep.subr.bf16.mxu0 %v2163
  %2369 = vmatpush1.bf16.msra.mxu0 %v2162
  %2370 = vmatprep.subr.bf16.mxu0 %v2171
  %2371 = vmatpush1.bf16.msra.mxu0 %v2170
  %2372 = vmatprep.subr.bf16.mxu0 %v2179
  %2373 = vmatpush1.bf16.msra.mxu0 %v2178
  %2374 = vmatprep.subr.bf16.mxu0 %v2187
  %2375 = vmatpush1.bf16.msra.mxu0 %v2186
  %2376 = vmatprep.subr.bf16.mxu0 %v2195
  %2377 = vmatpush1.bf16.msra.mxu0 %v2194
  %2378 = vmatprep.subr.bf16.mxu0 %v2203
  %2379 = vmatpush1.bf16.msra.mxu0 %v2202
  %2380 = vmatprep.subr.bf16.mxu0 %v2211
  %2381 = vmatpush1.bf16.msra.mxu0 %v2210
  %2382 = vmatprep.subr.bf16.mxu0 %v2219
  %2383 = vmatpush1.bf16.msra.mxu0 %v2218
  %2384 = vmatprep.subr.bf16.mxu0 0
  %2385 = vmatpush1.bf16.msra.mxu0 0
  %2386 = vmatprep.subr.bf16.mxu0 0
  %2387 = vmatpush1.bf16.msra.mxu0 0
  %2388 = vmatprep.subr.bf16.mxu0 0
  %2389 = vmatpush1.bf16.msra.mxu0 0
  %2390 = vmatprep.subr.bf16.mxu0 0
  %2391 = vmatpush1.bf16.msra.mxu0 0
  %2392 = vmatprep.subr.bf16.mxu0 0
  %2393 = vmatpush1.bf16.msra.mxu0 0
  %2394 = vmatprep.subr.bf16.mxu0 0
  %2395 = vmatpush1.bf16.msra.mxu0 0
  %2396 = vmatprep.subr.bf16.mxu0 0
  %2397 = vmatpush1.bf16.msra.mxu0 0
  %2398 = vmatprep.subr.bf16.mxu0 0
  %2399 = vmatpush1.bf16.msra.mxu0 0
  %2400 = vmatprep.mubr.bf16.mxu0 0
  %2401 = vmatmul.mubr.bf16.gmra.mrb[0].mxu0 %v21
  %v2402 = vpop.f32.mrb[0].mxu0
  %v2403 = vadd.f32 %v1878, %v2402
  %v2404 = vpop.f32.mrb[0].mxu0
  %v2405 = vadd.f32 %v1880, %v2404
  %v2406 = vpop.f32.mrb[0].mxu0
  %v2407 = vpop.f32.mrb[0].mxu0
  %2408 = vdwg.mxu0
  %2409 = vmatprep.subr.bf16.mxu0 %v2165
  %2410 = vmatpush1.bf16.msra.mxu0 %v2164
  %2411 = vmatprep.subr.bf16.mxu0 %v2173
  %2412 = vmatpush1.bf16.msra.mxu0 %v2172
  %2413 = vmatprep.subr.bf16.mxu0 %v2181
  %2414 = vmatpush1.bf16.msra.mxu0 %v2180
  %2415 = vmatprep.subr.bf16.mxu0 %v2189
  %2416 = vmatpush1.bf16.msra.mxu0 %v2188
  %2417 = vmatprep.subr.bf16.mxu0 %v2197
  %2418 = vmatpush1.bf16.msra.mxu0 %v2196
  %2419 = vmatprep.subr.bf16.mxu0 %v2205
  %2420 = vmatpush1.bf16.msra.mxu0 %v2204
  %2421 = vmatprep.subr.bf16.mxu0 %v2213
  %2422 = vmatpush1.bf16.msra.mxu0 %v2212
  %2423 = vmatprep.subr.bf16.mxu0 %v2221
  %2424 = vmatpush1.bf16.msra.mxu0 %v2220
  %2425 = vmatprep.subr.bf16.mxu0 0
  %2426 = vmatpush1.bf16.msra.mxu0 0
  %2427 = vmatprep.subr.bf16.mxu0 0
  %2428 = vmatpush1.bf16.msra.mxu0 0
  %2429 = vmatprep.subr.bf16.mxu0 0
  %2430 = vmatpush1.bf16.msra.mxu0 0
  %2431 = vmatprep.subr.bf16.mxu0 0
  %2432 = vmatpush1.bf16.msra.mxu0 0
  %2433 = vmatprep.subr.bf16.mxu0 0
  %2434 = vmatpush1.bf16.msra.mxu0 0
  %2435 = vmatprep.subr.bf16.mxu0 0
  %2436 = vmatpush1.bf16.msra.mxu0 0
  %2437 = vmatprep.subr.bf16.mxu0 0
  %2438 = vmatpush1.bf16.msra.mxu0 0
  %2439 = vmatprep.subr.bf16.mxu0 0
  %2440 = vmatpush1.bf16.msra.mxu0 0
  %2441 = vmatprep.mubr.bf16.mxu0 0
  %2442 = vmatmul.mubr.bf16.gmra.mrb[0].mxu0 %v21
  %v2443 = vpop.f32.mrb[0].mxu0
  %v2444 = vadd.f32 %v1960, %v2443
  %v2445 = vpop.f32.mrb[0].mxu0
  %v2446 = vadd.f32 %v1962, %v2445
  %v2447 = vpop.f32.mrb[0].mxu0
  %v2448 = vpop.f32.mrb[0].mxu0
  %2449 = vdwg.mxu0
  %v2450 = vld [vmem:[%s4] sm:$0xff]
  %v2451 = vunpack.c.l.bf16 %v2450
  %v2452 = vunpack.c.h.bf16 %v2450
  %v2455 = vlaneseq
  %v2456 = vshrl.u32 %v2455, 7
  %v2457 = vsub.s32 0, %v2456
  %v2458 = vrot.slane %v2451, %v2457
  %v2459 = vlaneseq
  %v2460 = vshrl.u32 %v2459, 7
  %v2461 = vsub.s32 2, %v2460
  %v2462 = vrot.slane %v2451, %v2461
  %v2463 = vlaneseq
  %v2464 = vshrl.u32 %v2463, 7
  %v2465 = vsub.s32 4, %v2464
  %v2466 = vrot.slane %v2451, %v2465
  %v2467 = vlaneseq
  %v2468 = vshrl.u32 %v2467, 7
  %v2469 = vsub.s32 6, %v2468
  %v2470 = vrot.slane %v2451, %v2469
  %v2471 = vlaneseq
  %v2472 = vshrl.u32 %v2471, 7
  %v2473 = vsub.s32 0, %v2472
  %v2474 = vrot.slane %v2452, %v2473
  %v2475 = vlaneseq
  %v2476 = vshrl.u32 %v2475, 7
  %v2477 = vsub.s32 2, %v2476
  %v2478 = vrot.slane %v2452, %v2477
  %v2479 = vlaneseq
  %v2480 = vshrl.u32 %v2479, 7
  %v2481 = vsub.s32 4, %v2480
  %v2482 = vrot.slane %v2452, %v2481
  %v2483 = vlaneseq
  %v2484 = vshrl.u32 %v2483, 7
  %v2485 = vsub.s32 6, %v2484
  %v2486 = vrot.slane %v2452, %v2485
  %v2495 = vlaneseq
  %v2496 = vshrl.u32 %v2495, 7
  %v2497 = vsub.s32 0, %v2496
  %v2498 = vrot.slane %v2458, %v2497
  %v2499 = vlaneseq
  %v2500 = vshrl.u32 %v2499, 7
  %v2501 = vsub.s32 0, %v2500
  %v2502 = vrot.slane %v2462, %v2501
  %v2503 = vlaneseq
  %v2504 = vshrl.u32 %v2503, 7
  %v2505 = vsub.s32 0, %v2504
  %v2506 = vrot.slane %v2466, %v2505
  %v2507 = vlaneseq
  %v2508 = vshrl.u32 %v2507, 7
  %v2509 = vsub.s32 0, %v2508
  %v2510 = vrot.slane %v2470, %v2509
  %v2511 = vlaneseq
  %v2512 = vshrl.u32 %v2511, 7
  %v2513 = vsub.s32 0, %v2512
  %v2514 = vrot.slane %v2474, %v2513
  %v2515 = vlaneseq
  %v2516 = vshrl.u32 %v2515, 7
  %v2517 = vsub.s32 0, %v2516
  %v2518 = vrot.slane %v2478, %v2517
  %v2519 = vlaneseq
  %v2520 = vshrl.u32 %v2519, 7
  %v2521 = vsub.s32 0, %v2520
  %v2522 = vrot.slane %v2482, %v2521
  %v2523 = vlaneseq
  %v2524 = vshrl.u32 %v2523, 7
  %v2525 = vsub.s32 0, %v2524
  %v2526 = vrot.slane %v2486, %v2525
  %v2527 = vadd.f32 %v2321, %v2498
  %v2528 = vadd.f32 %v2323, %v2502
  %v2529 = vadd.f32 %v2362, %v2506
  %v2530 = vadd.f32 %v2364, %v2510
  %v2531 = vadd.f32 %v2403, %v2514
  %v2532 = vadd.f32 %v2405, %v2518
  %v2533 = vadd.f32 %v2444, %v2522
  %v2534 = vadd.f32 %v2446, %v2526
  %v2535 = vpack.c.bf16 %v2527, %v2527
  %v2536 = vpack.c.bf16 %v2528, %v2528
  %v2537 = vpack.c.bf16 %v2529, %v2529
  %v2538 = vpack.c.bf16 %v2530, %v2530
  %v2539 = vpack.c.bf16 %v2531, %v2531
  %v2540 = vpack.c.bf16 %v2532, %v2532
  %v2541 = vpack.c.bf16 %v2533, %v2533
  %v2542 = vpack.c.bf16 %v2534, %v2534
  %v2551 = vunpack.c.l.b16 %v2535
  %v2552 = vunpack.c.l.b16 %v2536
  %v2553 = vunpack.c.l.b16 %v2537
  %v2554 = vunpack.c.l.b16 %v2538
  %v2555 = vunpack.c.l.b16 %v2539
  %v2556 = vunpack.c.l.b16 %v2540
  %v2557 = vunpack.c.l.b16 %v2541
  %v2558 = vunpack.c.l.b16 %v2542
  %v2559 = vpack.c.b16 %v2552, %v2551
  %v2560 = vpack.c.b16 %v2554, %v2553
  %v2561 = vpack.c.b16 %v2556, %v2555
  %v2562 = vpack.c.b16 %v2558, %v2557
  %2567 = vst [vmem:[%s5] sm:$0xff] %v2559
  %2568 = vst [vmem:[%s5 + $0x8] sm:$0xff] %v2560
  %2569 = vst [vmem:[%s5 + $0x10] sm:$0xff] %v2561
  %2570 = vst [vmem:[%s5 + $0x18] sm:$0xff] %v2562
  // Predicated region
  $region22: #{tablenet_forward.18} parent=0 // pred_check
    _
  $region23: #{tablenet_forward.18} parent=0 // pred_check_branch
    %2572 = sbr.rel (0) target = $region25
  $region24: #{tablenet_forward.18} parent=0 // pred_region
    _
  $region25: #{tablenet_forward.18} parent=0 // pred_fallthru
    _
  // Predicated region
  $region26: #{tablenet_forward.18} parent=0 // pred_check
    _
  $region27: #{tablenet_forward.18} parent=0 // pred_check_branch
    %2574 = sbr.rel (0) target = $region29
  $region28: #{tablenet_forward.18} parent=0 // pred_region
    _
  $region29: #{tablenet_forward.18} parent=0 // pred_fallthru
    _

// kernel: tablenet_forward.16
$region0: #{tablenet_forward.16}
  #allocation0 [shape = 'u32[]', space=smem, size = 0x4, offset = 0x4, fixed_abs, tag = 'smem constant byte address 0x4 - core index']
  #allocation1 [shape = 'u32[144,128]{1,0:T(1,128)}', space=vmem, size = 0x12000, scoped, tag = 'internal scratch']
  %s0 = inlined_call_operand.vmem [shape: bf16[32,256], index: 0, kind: input, shape index: {}]
  %s1 = inlined_call_operand.vmem [shape: bf16[32,256], index: 1, kind: input, shape index: {}]
  %s2 = inlined_call_operand.vmem [shape: bf16[256,128], index: 2, kind: input, shape index: {}]
  %s3 = inlined_call_operand.vmem [shape: bf16[256,128], index: 3, kind: input, shape index: {}]
  %s4 = inlined_call_operand.vmem [shape: bf16[1,128], index: 4, kind: input, shape index: {}]
  %s5 = inlined_call_operand.vmem [shape: f32[32,128], index: 5, kind: output, shape index: {}]
  %s6 = sld [smem:[#allocation0]]
  $region30: #{tablenet_forward.16} parent=0
    _
  %s8 = ssub.s32 1, %s6
  %s9 = scalar_select 0, %s8, %s6
  // Predicated region
  $region2: #{tablenet_forward.16} parent=0 // pred_check
    _
  $region3: #{tablenet_forward.16} parent=0 // pred_check_branch
    %11 = sbr.rel (0) target = $region5
  $region4: #{tablenet_forward.16} parent=0 // pred_region
    _
  $region5: #{tablenet_forward.16} parent=0 // pred_fallthru
    _
  // Predicated region
  $region6: #{tablenet_forward.16} parent=0 // pred_check
    _
  $region7: #{tablenet_forward.16} parent=0 // pred_check_branch
    %13 = sbr.rel (0) target = $region9
  $region8: #{tablenet_forward.16} parent=0 // pred_region
    _
  $region9: #{tablenet_forward.16} parent=0 // pred_fallthru
    _
  // Predicated region
  $region10: #{tablenet_forward.16} parent=0 // pred_check
    _
  $region11: #{tablenet_forward.16} parent=0 // pred_check_branch
    %15 = sbr.rel (0) target = $region13
  $region12: #{tablenet_forward.16} parent=0 // pred_region
    _
  $region13: #{tablenet_forward.16} parent=0 // pred_fallthru
    _
  // Predicated region
  $region14: #{tablenet_forward.16} parent=0 // pred_check
    _
  $region15: #{tablenet_forward.16} parent=0 // pred_check_branch
    %17 = sbr.rel (0) target = $region17
  $region16: #{tablenet_forward.16} parent=0 // pred_region
    _
  $region17: #{tablenet_forward.16} parent=0 // pred_fallthru
    _
  // Predicated region
  $region18: #{tablenet_forward.16} parent=0 // pred_check
    _
  $region19: #{tablenet_forward.16} parent=0 // pred_check_branch
    %19 = sbr.rel (0) target = $region21
  $region20: #{tablenet_forward.16} parent=0 // pred_region
    _
  $region21: #{tablenet_forward.16} parent=0 // pred_fallthru
    _
  %v21 = vld [vmem:[%s0] sm:$0xff]
  %v22 = vld [vmem:[%s0 + $0x8] sm:$0xff]
  %v23 = vld [vmem:[%s0 + $0x10] sm:$0xff]
  %v24 = vld [vmem:[%s0 + $0x18] sm:$0xff]
  %v25 = vld [vmem:[%s2] sm:$0xf]
  %v26 = vld [vmem:[%s2 + $0x4] sm:$0xf]
  %v27 = vld [vmem:[%s2 + $0x8] sm:$0xf]
  %v28 = vld [vmem:[%s2 + $0xc] sm:$0xf]
  %v29 = vld [vmem:[%s2 + $0x10] sm:$0xf]
  %v30 = vld [vmem:[%s2 + $0x14] sm:$0xf]
  %v31 = vld [vmem:[%s2 + $0x18] sm:$0xf]
  %v32 = vld [vmem:[%s2 + $0x1c] sm:$0xf]
  %v33 = vld [vmem:[%s2 + $0x20] sm:$0xf]
  %v34 = vld [vmem:[%s2 + $0x24] sm:$0xf]
  %v35 = vld [vmem:[%s2 + $0x28] sm:$0xf]
  %v36 = vld [vmem:[%s2 + $0x2c] sm:$0xf]
  %v37 = vld [vmem:[%s2 + $0x30] sm:$0xf]
  %v38 = vld [vmem:[%s2 + $0x34] sm:$0xf]
  %v39 = vld [vmem:[%s2 + $0x38] sm:$0xf]
  %v40 = vld [vmem:[%s2 + $0x3c] sm:$0xf]
  %v41 = vld [vmem:[%s2 + $0x40] sm:$0xf]
  %v42 = vld [vmem:[%s2 + $0x44] sm:$0xf]
  %v43 = vld [vmem:[%s2 + $0x48] sm:$0xf]
  %v44 = vld [vmem:[%s2 + $0x4c] sm:$0xf]
  %v45 = vld [vmem:[%s2 + $0x50] sm:$0xf]
  %v46 = vld [vmem:[%s2 + $0x54] sm:$0xf]
  %v47 = vld [vmem:[%s2 + $0x58] sm:$0xf]
  %v48 = vld [vmem:[%s2 + $0x5c] sm:$0xf]
  %v49 = vld [vmem:[%s2 + $0x60] sm:$0xf]
  %v50 = vld [vmem:[%s2 + $0x64] sm:$0xf]
  %v51 = vld [vmem:[%s2 + $0x68] sm:$0xf]
  %v52 = vld [vmem:[%s2 + $0x6c] sm:$0xf]
  %v53 = vld [vmem:[%s2 + $0x70] sm:$0xf]
  %v54 = vld [vmem:[%s2 + $0x74] sm:$0xf]
  %v55 = vld [vmem:[%s2 + $0x78] sm:$0xf]
  %v56 = vld [vmem:[%s2 + $0x7c] sm:$0xf]
  %v57 = vld [vmem:[%s1] sm:$0xff]
  %v58 = vld [vmem:[%s1 + $0x8] sm:$0xff]
  %v59 = vld [vmem:[%s1 + $0x10] sm:$0xff]
  %v60 = vld [vmem:[%s1 + $0x18] sm:$0xff]
  %v61 = vld [vmem:[%s3] sm:$0xf]
  %v62 = vld [vmem:[%s3 + $0x4] sm:$0xf]
  %v63 = vld [vmem:[%s3 + $0x8] sm:$0xf]
  %v64 = vld [vmem:[%s3 + $0xc] sm:$0xf]
  %v65 = vld [vmem:[%s3 + $0x10] sm:$0xf]
  %v66 = vld [vmem:[%s3 + $0x14] sm:$0xf]
  %v67 = vld [vmem:[%s3 + $0x18] sm:$0xf]
  %v68 = vld [vmem:[%s3 + $0x1c] sm:$0xf]
  %v69 = vld [vmem:[%s3 + $0x20] sm:$0xf]
  %v70 = vld [vmem:[%s3 + $0x24] sm:$0xf]
  %v71 = vld [vmem:[%s3 + $0x28] sm:$0xf]
  %v72 = vld [vmem:[%s3 + $0x2c] sm:$0xf]
  %v73 = vld [vmem:[%s3 + $0x30] sm:$0xf]
  %v74 = vld [vmem:[%s3 + $0x34] sm:$0xf]
  %v75 = vld [vmem:[%s3 + $0x38] sm:$0xf]
  %v76 = vld [vmem:[%s3 + $0x3c] sm:$0xf]
  %v77 = vld [vmem:[%s3 + $0x40] sm:$0xf]
  %v78 = vld [vmem:[%s3 + $0x44] sm:$0xf]
  %v79 = vld [vmem:[%s3 + $0x48] sm:$0xf]
  %v80 = vld [vmem:[%s3 + $0x4c] sm:$0xf]
  %v81 = vld [vmem:[%s3 + $0x50] sm:$0xf]
  %v82 = vld [vmem:[%s3 + $0x54] sm:$0xf]
  %v83 = vld [vmem:[%s3 + $0x58] sm:$0xf]
  %v84 = vld [vmem:[%s3 + $0x5c] sm:$0xf]
  %v85 = vld [vmem:[%s3 + $0x60] sm:$0xf]
  %v86 = vld [vmem:[%s3 + $0x64] sm:$0xf]
  %v87 = vld [vmem:[%s3 + $0x68] sm:$0xf]
  %v88 = vld [vmem:[%s3 + $0x6c] sm:$0xf]
  %v89 = vld [vmem:[%s3 + $0x70] sm:$0xf]
  %v90 = vld [vmem:[%s3 + $0x74] sm:$0xf]
  %v91 = vld [vmem:[%s3 + $0x78] sm:$0xf]
  %v92 = vld [vmem:[%s3 + $0x7c] sm:$0xf]
  %v97 = vunpack.c.l.b16 %v57
  %v98 = vunpack.c.h.b16 %v57
  %v99 = vunpack.c.l.b16 %v58
  %v100 = vunpack.c.h.b16 %v58
  %v101 = vunpack.c.l.b16 %v59
  %v102 = vunpack.c.h.b16 %v59
  %v103 = vunpack.c.l.b16 %v60
  %v104 = vunpack.c.h.b16 %v60
  %v105 = vpack.c.b16 %v99, %v97
  %v106 = vpack.c.b16 %v100, %v98
  %v107 = vpack.c.b16 %v103, %v101
  %v108 = vpack.c.b16 %v104, %v102
  %v145 = vunpack.c.l.b16 %v61
  %v146 = vunpack.c.l.b16 %v62
  %v147 = vunpack.c.l.b16 %v63
  %v148 = vunpack.c.l.b16 %v64
  %v149 = vunpack.c.l.b16 %v65
  %v150 = vunpack.c.l.b16 %v66
  %v151 = vunpack.c.l.b16 %v67
  %v152 = vunpack.c.l.b16 %v68
  %v153 = vunpack.c.l.b16 %v69
  %v154 = vunpack.c.l.b16 %v70
  %v155 = vunpack.c.l.b16 %v71
  %v156 = vunpack.c.l.b16 %v72
  %v157 = vunpack.c.l.b16 %v73
  %v158 = vunpack.c.l.b16 %v74
  %v159 = vunpack.c.l.b16 %v75
  %v160 = vunpack.c.l.b16 %v76
  %v161 = vunpack.c.l.b16 %v77
  %v162 = vunpack.c.l.b16 %v78
  %v163 = vunpack.c.l.b16 %v79
  %v164 = vunpack.c.l.b16 %v80
  %v165 = vunpack.c.l.b16 %v81
  %v166 = vunpack.c.l.b16 %v82
  %v167 = vunpack.c.l.b16 %v83
  %v168 = vunpack.c.l.b16 %v84
  %v169 = vunpack.c.l.b16 %v85
  %v170 = vunpack.c.l.b16 %v86
  %v171 = vunpack.c.l.b16 %v87
  %v172 = vunpack.c.l.b16 %v88
  %v173 = vunpack.c.l.b16 %v89
  %v174 = vunpack.c.l.b16 %v90
  %v175 = vunpack.c.l.b16 %v91
  %v176 = vunpack.c.l.b16 %v92
  %v177 = vpack.c.b16 %v146, %v145
  %v178 = vpack.c.b16 %v148, %v147
  %v179 = vpack.c.b16 %v150, %v149
  %v180 = vpack.c.b16 %v152, %v151
  %v181 = vpack.c.b16 %v154, %v153
  %v182 = vpack.c.b16 %v156, %v155
  %v183 = vpack.c.b16 %v158, %v157
  %v184 = vpack.c.b16 %v160, %v159
  %v185 = vpack.c.b16 %v162, %v161
  %v186 = vpack.c.b16 %v164, %v163
  %v187 = vpack.c.b16 %v166, %v165
  %v188 = vpack.c.b16 %v168, %v167
  %v189 = vpack.c.b16 %v170, %v169
  %v190 = vpack.c.b16 %v172, %v171
  %v191 = vpack.c.b16 %v174, %v173
  %v192 = vpack.c.b16 %v176, %v175
  %209 = vmatprep.subr.bf16.mxu0 0
  %210 = vmatpush1.bf16.msra.mxu0 %v177
  %211 = vmatprep.subr.bf16.mxu0 0
  %212 = vmatpush1.bf16.msra.mxu0 %v178
  %213 = vmatprep.subr.bf16.mxu0 0
  %214 = vmatpush1.bf16.msra.mxu0 %v179
  %215 = vmatprep.subr.bf16.mxu0 0
  %216 = vmatpush1.bf16.msra.mxu0 %v180
  %217 = vmatprep.subr.bf16.mxu0 0
  %218 = vmatpush1.bf16.msra.mxu0 %v181
  %219 = vmatprep.subr.bf16.mxu0 0
  %220 = vmatpush1.bf16.msra.mxu0 %v182
  %221 = vmatprep.subr.bf16.mxu0 0
  %222 = vmatpush1.bf16.msra.mxu0 %v183
  %223 = vmatprep.subr.bf16.mxu0 0
  %224 = vmatpush1.bf16.msra.mxu0 %v184
  %225 = vmatprep.subr.bf16.mxu0 0
  %226 = vmatpush1.bf16.msra.mxu0 %v185
  %227 = vmatprep.subr.bf16.mxu0 0
  %228 = vmatpush1.bf16.msra.mxu0 %v186
  %229 = vmatprep.subr.bf16.mxu0 0
  %230 = vmatpush1.bf16.msra.mxu0 %v187
  %231 = vmatprep.subr.bf16.mxu0 0
  %232 = vmatpush1.bf16.msra.mxu0 %v188
  %233 = vmatprep.subr.bf16.mxu0 0
  %234 = vmatpush1.bf16.msra.mxu0 %v189
  %235 = vmatprep.subr.bf16.mxu0 0
  %236 = vmatpush1.bf16.msra.mxu0 %v190
  %237 = vmatprep.subr.bf16.mxu0 0
  %238 = vmatpush1.bf16.msra.mxu0 %v191
  %239 = vmatprep.subr.bf16.mxu0 0
  %240 = vmatpush1.bf16.msra.mxu0 %v192
  %241 = vmatprep.mubr.bf16.mxu0 %v106
  %242 = vmatmul.mubr.bf16.gmra.mrb[0].mxu0 %v105
  %v243 = vpop.f32.mrb[0].mxu0
  %v244 = vadd.f32 0.0, %v243
  %v245 = vpop.f32.mrb[0].mxu0
  %v246 = vpop.f32.mrb[0].mxu0
  %v247 = vadd.f32 0.0, %v246
  %v248 = vpop.f32.mrb[0].mxu0
  %249 = vmatprep.mubr.bf16.mxu0 %v108
  %250 = vmatmul.mubr.bf16.gmra.mrb[0].mxu0 %v107
  %v251 = vpop.f32.mrb[0].mxu0
  %v252 = vadd.f32 0.0, %v251
  %v253 = vpop.f32.mrb[0].mxu0
  %v254 = vpop.f32.mrb[0].mxu0
  %v255 = vadd.f32 0.0, %v254
  %v256 = vpop.f32.mrb[0].mxu0
  %257 = vdwg.mxu0
  %v262 = vunpack.c.l.b16 %v21
  %v263 = vunpack.c.h.b16 %v21
  %v264 = vunpack.c.l.b16 %v22
  %v265 = vunpack.c.h.b16 %v22
  %v266 = vunpack.c.l.b16 %v23
  %v267 = vunpack.c.h.b16 %v23
  %v268 = vunpack.c.l.b16 %v24
  %v269 = vunpack.c.h.b16 %v24
  %v270 = vpack.c.b16 %v264, %v262
  %v271 = vpack.c.b16 %v265, %v263
  %v272 = vpack.c.b16 %v268, %v266
  %v273 = vpack.c.b16 %v269, %v267
  %v310 = vunpack.c.l.b16 %v25
  %v311 = vunpack.c.l.b16 %v26
  %v312 = vunpack.c.l.b16 %v27
  %v313 = vunpack.c.l.b16 %v28
  %v314 = vunpack.c.l.b16 %v29
  %v315 = vunpack.c.l.b16 %v30
  %v316 = vunpack.c.l.b16 %v31
  %v317 = vunpack.c.l.b16 %v32
  %v318 = vunpack.c.l.b16 %v33
  %v319 = vunpack.c.l.b16 %v34
  %v320 = vunpack.c.l.b16 %v35
  %v321 = vunpack.c.l.b16 %v36
  %v322 = vunpack.c.l.b16 %v37
  %v323 = vunpack.c.l.b16 %v38
  %v324 = vunpack.c.l.b16 %v39
  %v325 = vunpack.c.l.b16 %v40
  %v326 = vunpack.c.l.b16 %v41
  %v327 = vunpack.c.l.b16 %v42
  %v328 = vunpack.c.l.b16 %v43
  %v329 = vunpack.c.l.b16 %v44
  %v330 = vunpack.c.l.b16 %v45
  %v331 = vunpack.c.l.b16 %v46
  %v332 = vunpack.c.l.b16 %v47
  %v333 = vunpack.c.l.b16 %v48
  %v334 = vunpack.c.l.b16 %v49
  %v335 = vunpack.c.l.b16 %v50
  %v336 = vunpack.c.l.b16 %v51
  %v337 = vunpack.c.l.b16 %v52
  %v338 = vunpack.c.l.b16 %v53
  %v339 = vunpack.c.l.b16 %v54
  %v340 = vunpack.c.l.b16 %v55
  %v341 = vunpack.c.l.b16 %v56
  %v342 = vpack.c.b16 %v311, %v310
  %v343 = vpack.c.b16 %v313, %v312
  %v344 = vpack.c.b16 %v315, %v314
  %v345 = vpack.c.b16 %v317, %v316
  %v346 = vpack.c.b16 %v319, %v318
  %v347 = vpack.c.b16 %v321, %v320
  %v348 = vpack.c.b16 %v323, %v322
  %v349 = vpack.c.b16 %v325, %v324
  %v350 = vpack.c.b16 %v327, %v326
  %v351 = vpack.c.b16 %v329, %v328
  %v352 = vpack.c.b16 %v331, %v330
  %v353 = vpack.c.b16 %v333, %v332
  %v354 = vpack.c.b16 %v335, %v334
  %v355 = vpack.c.b16 %v337, %v336
  %v356 = vpack.c.b16 %v339, %v338
  %v357 = vpack.c.b16 %v341, %v340
  %374 = vmatprep.subr.bf16.mxu0 0
  %375 = vmatpush1.bf16.msra.mxu0 %v342
  %376 = vmatprep.subr.bf16.mxu0 0
  %377 = vmatpush1.bf16.msra.mxu0 %v343
  %378 = vmatprep.subr.bf16.mxu0 0
  %379 = vmatpush1.bf16.msra.mxu0 %v344
  %380 = vmatprep.subr.bf16.mxu0 0
  %381 = vmatpush1.bf16.msra.mxu0 %v345
  %382 = vmatprep.subr.bf16.mxu0 0
  %383 = vmatpush1.bf16.msra.mxu0 %v346
  %384 = vmatprep.subr.bf16.mxu0 0
  %385 = vmatpush1.bf16.msra.mxu0 %v347
  %386 = vmatprep.subr.bf16.mxu0 0
  %387 = vmatpush1.bf16.msra.mxu0 %v348
  %388 = vmatprep.subr.bf16.mxu0 0
  %389 = vmatpush1.bf16.msra.mxu0 %v349
  %390 = vmatprep.subr.bf16.mxu0 0
  %391 = vmatpush1.bf16.msra.mxu0 %v350
  %392 = vmatprep.subr.bf16.mxu0 0
  %393 = vmatpush1.bf16.msra.mxu0 %v351
  %394 = vmatprep.subr.bf16.mxu0 0
  %395 = vmatpush1.bf16.msra.mxu0 %v352
  %396 = vmatprep.subr.bf16.mxu0 0
  %397 = vmatpush1.bf16.msra.mxu0 %v353
  %398 = vmatprep.subr.bf16.mxu0 0
  %399 = vmatpush1.bf16.msra.mxu0 %v354
  %400 = vmatprep.subr.bf16.mxu0 0
  %401 = vmatpush1.bf16.msra.mxu0 %v355
  %402 = vmatprep.subr.bf16.mxu0 0
  %403 = vmatpush1.bf16.msra.mxu0 %v356
  %404 = vmatprep.subr.bf16.mxu0 0
  %405 = vmatpush1.bf16.msra.mxu0 %v357
  %406 = vmatprep.mubr.bf16.mxu0 %v271
  %407 = vmatmul.mubr.bf16.gmra.mrb[0].mxu0 %v270
  %v408 = vpop.f32.mrb[0].mxu0
  %v409 = vadd.f32 %v244, %v408
  %v410 = vpop.f32.mrb[0].mxu0
  %v411 = vpop.f32.mrb[0].mxu0
  %v412 = vadd.f32 %v247, %v411
  %v413 = vpop.f32.mrb[0].mxu0
  %414 = vmatprep.mubr.bf16.mxu0 %v273
  %415 = vmatmul.mubr.bf16.gmra.mrb[0].mxu0 %v272
  %v416 = vpop.f32.mrb[0].mxu0
  %v417 = vadd.f32 %v252, %v416
  %v418 = vpop.f32.mrb[0].mxu0
  %v419 = vpop.f32.mrb[0].mxu0
  %v420 = vadd.f32 %v255, %v419
  %v421 = vpop.f32.mrb[0].mxu0
  %422 = vdwg.mxu0
  %v423 = vld [vmem:[%s4] sm:$0x1]
  %v424 = vunpack.c.l.bf16 %v423
  %v425 = vlaneseq
  %v426 = vshrl.u32 %v425, 7
  %v427 = vsub.s32 0, %v426
  %v428 = vrot.slane %v424, %v427
  %v429 = vadd.f32 %v409, %v428
  %v430 = vadd.f32 %v412, %v428
  %v431 = vadd.f32 %v417, %v428
  %v432 = vadd.f32 %v420, %v428
  %433 = vst [vmem:[%s5] sm:$0xff] %v429
  %434 = vst [vmem:[%s5 + $0x8] sm:$0xff] %v430
  %435 = vst [vmem:[%s5 + $0x10] sm:$0xff] %v431
  %436 = vst [vmem:[%s5 + $0x18] sm:$0xff] %v432
  // Predicated region
  $region22: #{tablenet_forward.16} parent=0 // pred_check
    _
  $region23: #{tablenet_forward.16} parent=0 // pred_check_branch
    %438 = sbr.rel (0) target = $region25
  $region24: #{tablenet_forward.16} parent=0 // pred_region
    _
  $region25: #{tablenet_forward.16} parent=0 // pred_fallthru
    _
  // Predicated region
  $region26: #{tablenet_forward.16} parent=0 // pred_check
    _
  $region27: #{tablenet_forward.16} parent=0 // pred_check_branch
    %440 = sbr.rel (0) target = $region29
  $region28: #{tablenet_forward.16} parent=0 // pred_region
    _
  $region29: #{tablenet_forward.16} parent=0 // pred_fallthru
    _

</llo_original>
